<compile_context>
chip_gen: v5e
topology: v5e:2x2
jax: 0.10.0
libtpu: 0.0.40
codegen_flags: <defaults>
</compile_context>

<pallas_src>
import functools

import jax
import jax.numpy as jnp
from jax.experimental import pallas as pl
from jax.experimental.pallas import tpu as pltpu


# ----------------------------- config ---------------------------------------
class Cfg:
    decoder_embed_dim = 64
    decoder_attention_heads = 4
    decoder_ffn_embed_dim = 128
    decoder_layers = 2
    decoder_normalize_before = True   # pre-LN path of the reference module


PAD = 1          # fairseq dictionary: bos=0, pad=1, eos=2, unk=3
VOCAB = 40
MAX_POS = 512
NEG_INF = float("-inf")   # reference path only (matches PyTorch)
NEG_BIG = -1.0e30         # kernel-side finite mask value (no NaN on fully-masked rows)


# --------------------------- kernel helpers ----------------------------------
def _ln(x, g, b, eps=1e-5):
    mu = jnp.mean(x, axis=-1, keepdims=True)
    xc = x - mu
    var = jnp.mean(xc * xc, axis=-1, keepdims=True)
    return xc * jax.lax.rsqrt(var + eps) * g + b


def _gelu_tanh(x):
    # tanh-approx GELU: a few VPU ops + one EUP tanh (replaces the erf polynomial).
    c = 0.7978845608028654  # sqrt(2/pi)
    return 0.5 * x * (1.0 + jnp.tanh(c * (x + 0.044715 * x * x * x)))


# ----------------------- fused transformer-stack kernel ----------------------
def xlmr_stack_kernel(x_ref, bias_ref, wmat_ref, vecs_ref, out_ref,
                      *, num_layers, num_heads, ffn_dim, normalize_before):
    Bg, T, D = x_ref.shape
    F = ffn_dim
    hd = D // num_heads
    L = num_layers
    bf16 = jnp.bfloat16

    # ------- hoist all bias / LN vectors out of the batch loop (tiny f32 rows) -----
    fin_row = vecs_ref[L * 6]
    fin_w, fin_b = fin_row[0:D], fin_row[D:2 * D]
    layer_vecs = []
    for l in range(L):
        r = l * 6
        r0 = vecs_ref[r + 0]
        r1 = vecs_ref[r + 1]
        r2 = vecs_ref[r + 2]
        r3 = vecs_ref[r + 3]
        fc1b = vecs_ref[r + 4][0:F]
        r5 = vecs_ref[r + 5]
        layer_vecs.append(dict(
            bq=r0[0:D], bk=r0[D:2 * D],
            bv=r1[0:D], bo=r1[D:2 * D],
            ln1w=r2[0:D], ln1b=r2[D:2 * D],
            ln2w=r3[0:D], ln2b=r3[D:2 * D],
            fc1b=fc1b, fc2b=r5[0:D]))

    for b in range(Bg):                      # static unroll over in-block batch rows
        x = x_ref[b]                         # (T, D) f32, resident across all layers
        bias = bias_ref[b]                   # (T, T) additive mask (0 / -1e30)

        for l in range(L):                   # static unroll over layers
            p_ = layer_vecs[l]

            # ----------------- self attention -----------------
            residual = x
            h = _ln(x, p_["ln1w"], p_["ln1b"]) if normalize_before else x
            hb = h.astype(bf16)

            # ONE full-width QKV projection per layer (q columns pre-scaled outside).
            qkv = jnp.dot(hb, wmat_ref[l, 0:D, 0:3 * D],
                          preferred_element_type=jnp.float32)        # (T, 3D)
            q = qkv[:, 0:D] + p_["bq"]
            k = qkv[:, D:2 * D] + p_["bk"]
            v = (qkv[:, 2 * D:3 * D] + p_["bv"]).astype(bf16)

            attn = jnp.zeros((T, D), jnp.float32)
            for hh in range(num_heads):      # static unroll over heads
                qh = q[:, hh * hd:(hh + 1) * hd].astype(bf16)
                kh = k[:, hh * hd:(hh + 1) * hd].astype(bf16)
                vh = v[:, hh * hd:(hh + 1) * hd]
                s = jax.lax.dot_general(qh, kh, (((1,), (1,)), ((), ())),
                                        preferred_element_type=jnp.float32)
                s = s + bias
                m = jnp.max(s, axis=-1, keepdims=True)
                pprob = jnp.exp(s - m)
                pprob = pprob * pl.reciprocal(
                    jnp.sum(pprob, axis=-1, keepdims=True), approx=True)
                ctx = jnp.dot(pprob.astype(bf16), vh,
                              preferred_element_type=jnp.float32)     # (T, hd)
                # per-head out-projection slab (hd, D); accumulate in vregs (no scratch)
                wo_h = wmat_ref[l, D + hh * hd: D + (hh + 1) * hd, 0:D]
                attn = attn + jnp.dot(ctx.astype(bf16), wo_h,
                                      preferred_element_type=jnp.float32)

            x = residual + attn + p_["bo"]
            if not normalize_before:
                x = _ln(x, p_["ln1w"], p_["ln1b"])

            # ----------------- feed forward --------------------
            residual = x
            h = _ln(x, p_["ln2w"], p_["ln2b"]) if normalize_before else x
            h1 = jnp.dot(h.astype(bf16), wmat_ref[l, 2 * D:3 * D, 0:F],
                         preferred_element_type=jnp.float32) + p_["fc1b"]
            h1 = _gelu_tanh(h1)
            h2 = jnp.dot(h1.astype(bf16), wmat_ref[l, 3 * D:3 * D + F, 0:D],
                         preferred_element_type=jnp.float32) + p_["fc2b"]
            x = residual + h2
            if not normalize_before:
                x = _ln(x, p_["ln2w"], p_["ln2b"])

            out_ref[b, l] = x                # per-layer hidden state (pre final LN)

        if normalize_before:
            x = _ln(x, fin_w, fin_b)
        out_ref[b, L] = x                    # final output slot


def _num_grid_steps(batch):
    """One grid step per TensorCore: 2 on v7x (2 TC/chip), 1 on v5e/v6e."""
    try:
        kind = jax.devices()[0].device_kind.lower()
    except Exception:
        kind = ""
    n_tc = 2 if "v7" in kind else 1
    return n_tc if (n_tc > 0 and batch % n_tc == 0) else 1


def xlmr_stack(x, bias, kp, cfg):
    """One fused pallas_call over the whole layer stack.

    Returns merged (B, L+1, T, D): slots 0..L-1 = per-layer hiddens, slot L = final.
    """
    B, T, D = x.shape
    L = cfg.decoder_layers
    H = cfg.decoder_attention_heads
    F = cfg.decoder_ffn_embed_dim

    G = _num_grid_steps(B)        # v7x: B grid steps (1 per TC); v5e/v6e: 1 step
    Bg = B // G

    kernel = functools.partial(xlmr_stack_kernel,
                               num_layers=L, num_heads=H, ffn_dim=F,
                               normalize_before=cfg.decoder_normalize_before)

    wmat, vecs = kp["wmat"], kp["vecs"]

    merged = pl.pallas_call(
        kernel,
        out_shape=jax.ShapeDtypeStruct((B, L + 1, T, D), jnp.float32),
        grid=(G,),
        in_specs=[
            pl.BlockSpec((Bg, T, D), lambda i: (i, 0, 0)),       # x
            pl.BlockSpec((Bg, T, T), lambda i: (i, 0, 0)),       # combined attn bias
            pl.BlockSpec(wmat.shape, lambda i: (0, 0, 0)),       # packed bf16 weights
            pl.BlockSpec(vecs.shape, lambda i: (0, 0)),          # packed biases / LN
        ],
        out_specs=pl.BlockSpec((Bg, L + 1, T, D), lambda i: (i, 0, 0, 0)),
        compiler_params=pltpu.CompilerParams(
            dimension_semantics=("parallel",)),                  # v7x: 1 batch / TC
    )(x, bias, wmat, vecs)
    return merged


# --------------------------- parameters / embeds ------------------------------
def init_params(key, cfg):
    D, F = cfg.decoder_embed_dim, cfg.decoder_ffn_embed_dim
    keys = iter(jax.random.split(key, 64))

    def nrm(shape, std):
        return jax.random.normal(next(keys), shape, jnp.float32) * std

    tok = nrm((VOCAB, D), D ** -0.5).at[PAD].set(0.0)
    # fairseq learned PositionalEmbedding: num_embeddings + padding_idx + 1 rows
    pos = nrm((MAX_POS + PAD + 1, D), D ** -0.5).at[PAD].set(0.0)

    layers = []
    for _ in range(cfg.decoder_layers):
        layers.append(dict(
            attn_w=nrm((4, D, D), 0.02),      # [q, k, v, out] stored as (in, out)
            attn_b=nrm((4, D), 0.02),
            ln_w=jnp.ones((2, D), jnp.float32),   # [self_attn_layer_norm, final_layer_norm]
            ln_b=jnp.zeros((2, D), jnp.float32),
            fc1_w=nrm((D, F), 0.02),
            fc1_b=nrm((F,), 0.02),
            fc2_w=nrm((F, D), 0.02),
            fc2_b=nrm((D,), 0.02),
        ))
    return dict(tok=tok, pos=pos, layers=layers,
                ln_w=jnp.ones((D,), jnp.float32),
                ln_b=jnp.zeros((D,), jnp.float32))


def prepare_kernel_params(params, cfg):
    """One-time repack into 2 packed slabs: bf16 matmul weights + f32 vectors."""
    D = cfg.decoder_embed_dim
    F = cfg.decoder_ffn_embed_dim
    H = cfg.decoder_attention_heads
    L = cfg.decoder_layers
    hd = D // H
    scale = hd ** (-0.5)

    rows = 3 * D + F                   # Wqkv rows | Wo rows | fc1 rows | fc2 rows
    cols = max(3 * D, F)
    vwidth = max(2 * D, F)

    def padv(v):
        return jnp.pad(v, (0, vwidth - v.shape[0]))

    wmats, vrows = [], []
    for lp in params["layers"]:
        wq, wk, wv, wo = lp["attn_w"][0], lp["attn_w"][1], lp["attn_w"][2], lp["attn_w"][3]
        bq, bk, bv, bo = lp["attn_b"][0], lp["attn_b"][1], lp["attn_b"][2], lp["attn_b"][3]

        w = jnp.zeros((rows, cols), jnp.float32)
        w = w.at[0:D, 0:D].set(wq * scale)          # q (pre-scaled), head-major cols
        w = w.at[0:D, D:2 * D].set(wk)              # k
        w = w.at[0:D, 2 * D:3 * D].set(wv)          # v
        w = w.at[D:2 * D, 0:D].set(wo)              # out-proj (rows grouped by head)
        w = w.at[2 * D:3 * D, 0:F].set(lp["fc1_w"])
        w = w.at[3 * D:3 * D + F, 0:D].set(lp["fc2_w"])
        wmats.append(w)

        vrows += [
            padv(jnp.concatenate([bq * scale, bk])),
            padv(jnp.concatenate([bv, bo])),
            padv(jnp.concatenate([lp["ln_w"][0], lp["ln_b"][0]])),
            padv(jnp.concatenate([lp["ln_w"][1], lp["ln_b"][1]])),
            padv(lp["fc1_b"]),
            padv(lp["fc2_b"]),
        ]
    vrows.append(padv(jnp.concatenate([params["ln_w"], params["ln_b"]])))

    wmat = jnp.stack(wmats, axis=0).astype(jnp.bfloat16)     # (L, 3D+F, max(3D,F))
    vecs = jnp.stack(vrows, axis=0).astype(jnp.float32)      # (6L+1, max(2D,F))
    return {"wmat": wmat, "vecs": vecs}


def make_positions(tokens, pad):
    mask = (tokens != pad).astype(jnp.int32)
    return pad + jnp.cumsum(mask, axis=1) * mask


def embed(params, tokens):
    return params["tok"][tokens] + params["pos"][make_positions(tokens, PAD)]


def _jax_ln(x, g, b, eps=1e-5):
    mu = x.mean(-1, keepdims=True)
    var = ((x - mu) ** 2).mean(-1, keepdims=True)
    return (x - mu) / jnp.sqrt(var + eps) * g + b


# ------------------------ XLMRTransformer.forward ----------------------------
def xlmr_forward(params, kparams, source, target, cfg):
    src_x = embed(params, source)
    tgt_x = embed(params, target)
    if not cfg.decoder_normalize_before:
        src_x = _jax_ln(src_x, params["ln_w"], params["ln_b"])
        tgt_x = _jax_ln(tgt_x, params["ln_w"], params["ln_b"])
    # self.dropout_module(...) -> identity at inference

    src_kpm = source == PAD
    tgt_kpm = target == PAD
    src_len, tgt_len = source.shape[1], target.shape[1]
    T = src_len + tgt_len

    x = jnp.concatenate([src_x, tgt_x], axis=1)
    kpm = jnp.concatenate([src_kpm, tgt_kpm], axis=1)            # (B, T)

    # pre-combine additive attn_mask + key-padding mask into one (B, T, T) bias.
    # NOTE: finite -1e30 (not -inf) -> fully-masked rows give uniform attention
    # instead of NaN; safe because such query rows are never consumed downstream.
    row = jnp.arange(T)[:, None]
    col = jnp.arange(T)[None, :]
    cross = (row < src_len) & (col >= src_len)                   # (T, T)
    mask_bool = cross[None, :, :] | kpm[:, None, :]              # (B, T, T)
    bias = jnp.where(mask_bool, NEG_BIG, 0.0).astype(jnp.float32)

    merged = xlmr_stack(x, bias, kparams, cfg)                   # (B, L+1, T, D)

    L = cfg.decoder_layers
    hidden_state = [src_x] + [merged[:, l, :src_len, :] for l in range(L)]
    if cfg.decoder_normalize_before:
        final = merged[:, L]             # final LayerNorm applied inside the kernel
        src_out = final[:, :src_len, :]
        tgt_out = final[:, src_len:, :]
    else:
        src_out, tgt_out = src_x, tgt_x  # reference semantics: embeddings returned
    return src_out, tgt_out, src_kpm, tgt_kpm, hidden_state


# ----------------------- pure-JAX reference (for check) ----------------------
def _ref_layer(x, kpm, amask, lp, num_heads, normalize_before):
    B, T, D = x.shape
    hd = D // num_heads
    res = x
    h = _jax_ln(x, lp["ln_w"][0], lp["ln_b"][0]) if normalize_before else x
    q = h @ lp["attn_w"][0] + lp["attn_b"][0]
    k = h @ lp["attn_w"][1] + lp["attn_b"][1]
    v = h @ lp["attn_w"][2] + lp["attn_b"][2]
    q = q * hd ** -0.5
    spl = lambda z: z.reshape(B, T, num_heads, hd).transpose(0, 2, 1, 3)
    qh, kh, vh = spl(q), spl(k), spl(v)
    s = jnp.einsum("bhqd,bhkd->bhqk", qh, kh) + amask[None, None]
    s = jnp.where(kpm[:, None, None, :], NEG_INF, s)
    p = jax.nn.softmax(s, axis=-1)
    o = jnp.einsum("bhqk,bhkd->bhqd", p, vh).transpose(0, 2, 1, 3).reshape(B, T, D)
    o = o @ lp["attn_w"][3] + lp["attn_b"][3]
    x = res + o
    if not normalize_before:
        x = _jax_ln(x, lp["ln_w"][0], lp["ln_b"][0])
    res = x
    h = _jax_ln(x, lp["ln_w"][1], lp["ln_b"][1]) if normalize_before else x
    h = jax.nn.gelu(h @ lp["fc1_w"] + lp["fc1_b"], approximate=False)
    h = h @ lp["fc2_w"] + lp["fc2_b"]
    x = res + h
    if not normalize_before:
        x = _jax_ln(x, lp["ln_w"][1], lp["ln_b"][1])
    return x


def ref_forward(params, source, target, cfg):
    with jax.default_matmul_precision("float32"):
        src_x = embed(params, source)
        tgt_x = embed(params, target)
        if not cfg.decoder_normalize_before:
            src_x = _jax_ln(src_x, params["ln_w"], params["ln_b"])
            tgt_x = _jax_ln(tgt_x, params["ln_w"], params["ln_b"])
        src_kpm = source == PAD
        tgt_kpm = target == PAD
        src_len, tgt_len = source.shape[1], target.shape[1]
        T = src_len + tgt_len
        x = jnp.concatenate([src_x, tgt_x], axis=1)
        kpm = jnp.concatenate([src_kpm, tgt_kpm], axis=1)
        row = jnp.arange(T)[:, None]
        col = jnp.arange(T)[None, :]
        amask = jnp.where((row < src_len) & (col >= src_len), NEG_INF, 0.0)
        hidden = [src_x]
        for lp in params["layers"]:
            x = _ref_layer(x, kpm, amask, lp,
                           cfg.decoder_attention_heads, cfg.decoder_normalize_before)
            hidden.append(x[:, :src_len, :])
        if cfg.decoder_normalize_before:
            src_out = _jax_ln(x[:, :src_len], params["ln_w"], params["ln_b"])
            tgt_out = _jax_ln(x[:, src_len:], params["ln_w"], params["ln_b"])
        else:
            src_out, tgt_out = src_x, tgt_x
        return src_out, tgt_out, hidden


# ---------------------------------- main --------------------------------------
if __name__ == "__main__":
    cfg = Cfg()
    key = jax.random.PRNGKey(0)
    pkey, skey, tkey = jax.random.split(key, 3)

    params = init_params(pkey, cfg)
    kparams = prepare_kernel_params(params, cfg)   # one-time repack (outside hot path)

    B, S_SRC, S_TGT = 2, 6, 6
    source = jax.random.randint(skey, (B, S_SRC), 4, VOCAB, dtype=jnp.int32)
    target = jax.random.randint(tkey, (B, S_TGT), 4, VOCAB, dtype=jnp.int32)
    # add some padding to exercise key_padding_mask
    source = source.at[0, -2:].set(PAD)
    target = target.at[1, -1:].set(PAD)

    fwd = jax.jit(functools.partial(xlmr_forward, cfg=cfg))
    src_x, tgt_x, src_kpm, tgt_kpm, hidden = fwd(params, kparams, source, target)
    jax.block_until_ready((src_x, tgt_x, hidden))

    # sanity-check against a pure-JAX reference of the same forward pass
    ref_src, ref_tgt, ref_hidden = ref_forward(params, source, target, cfg)
    assert src_x.shape == (B, S_SRC, cfg.decoder_embed_dim)
    assert tgt_x.shape == (B, S_TGT, cfg.decoder_embed_dim)
    assert len(hidden) == cfg.decoder_layers + 1
    assert jnp.all(jnp.isfinite(src_x)) and jnp.all(jnp.isfinite(tgt_x))
    assert jnp.allclose(src_x, ref_src, atol=2e-2, rtol=2e-2)
    assert jnp.allclose(tgt_x, ref_tgt, atol=2e-2, rtol=2e-2)
    for h_k, h_r in zip(hidden, ref_hidden):
        assert h_k.shape == h_r.shape
        assert jnp.allclose(h_k, h_r, atol=2e-2, rtol=2e-2)

    print("KERNEL_OK")
</pallas_src>

<mosaic_0001>
module attributes {stable_mosaic.version = 11 : i64} {
  func.func @xlmr_stack_kernel(%arg0: i32, %arg1: memref<2x12x64xf32, #tpu.memory_space<vmem>>, %arg2: memref<2x12x12xf32, #tpu.memory_space<vmem>>, %arg3: memref<2x320x192xbf16, #tpu.memory_space<vmem>>, %arg4: memref<13x128xf32, #tpu.memory_space<vmem>>, %arg5: memref<2x3x12x64xf32, #tpu.memory_space<vmem>>) attributes {dimension_semantics = [#tpu.dimension_semantics<parallel>], iteration_bounds = array<i64: 1>, scalar_prefetch = 0 : i64, scratch_operands = 0 : i64, tpu.core_type = #tpu.core_type<tc>, window_params = [{transform_indices = @transform_0, window_bounds = array<i64: 2, 12, 64>}, {transform_indices = @transform_1, window_bounds = array<i64: 2, 12, 12>}, {pipeline_mode = #tpu.pipeline_mode<synchronous>, transform_indices = @transform_2, window_bounds = array<i64: 2, 320, 192>}, {pipeline_mode = #tpu.pipeline_mode<synchronous>, transform_indices = @transform_3, window_bounds = array<i64: 13, 128>}, {transform_indices = @transform_4, window_bounds = array<i64: 2, 3, 12, 64>}]} {
    %c12 = arith.constant 12 : index
    %c0 = arith.constant 0 : index
    %0 = vector.load %arg4[%c12, %c0] : memref<13x128xf32, #tpu.memory_space<vmem>>, vector<1x128xf32>
    %1 = vector.shape_cast %0 : vector<1x128xf32> to vector<128xf32>
    %2 = vector.extract_strided_slice %1 {offsets = [0], sizes = [64], strides = [1]} : vector<128xf32> to vector<64xf32>
    %3 = vector.extract_strided_slice %1 {offsets = [64], sizes = [64], strides = [1]} : vector<128xf32> to vector<64xf32>
    %c0_0 = arith.constant 0 : index
    %c0_1 = arith.constant 0 : index
    %4 = vector.load %arg4[%c0_0, %c0_1] : memref<13x128xf32, #tpu.memory_space<vmem>>, vector<1x128xf32>
    %5 = vector.shape_cast %4 : vector<1x128xf32> to vector<128xf32>
    %c1 = arith.constant 1 : index
    %c0_2 = arith.constant 0 : index
    %6 = vector.load %arg4[%c1, %c0_2] : memref<13x128xf32, #tpu.memory_space<vmem>>, vector<1x128xf32>
    %7 = vector.shape_cast %6 : vector<1x128xf32> to vector<128xf32>
    %c2 = arith.constant 2 : index
    %c0_3 = arith.constant 0 : index
    %8 = vector.load %arg4[%c2, %c0_3] : memref<13x128xf32, #tpu.memory_space<vmem>>, vector<1x128xf32>
    %9 = vector.shape_cast %8 : vector<1x128xf32> to vector<128xf32>
    %c3 = arith.constant 3 : index
    %c0_4 = arith.constant 0 : index
    %10 = vector.load %arg4[%c3, %c0_4] : memref<13x128xf32, #tpu.memory_space<vmem>>, vector<1x128xf32>
    %11 = vector.shape_cast %10 : vector<1x128xf32> to vector<128xf32>
    %c4 = arith.constant 4 : index
    %c0_5 = arith.constant 0 : index
    %12 = vector.load %arg4[%c4, %c0_5] : memref<13x128xf32, #tpu.memory_space<vmem>>, vector<1x128xf32>
    %13 = vector.shape_cast %12 : vector<1x128xf32> to vector<128xf32>
    %c5 = arith.constant 5 : index
    %c0_6 = arith.constant 0 : index
    %14 = vector.load %arg4[%c5, %c0_6] : memref<13x128xf32, #tpu.memory_space<vmem>>, vector<1x128xf32>
    %15 = vector.shape_cast %14 : vector<1x128xf32> to vector<128xf32>
    %16 = vector.extract_strided_slice %5 {offsets = [0], sizes = [64], strides = [1]} : vector<128xf32> to vector<64xf32>
    %17 = vector.extract_strided_slice %5 {offsets = [64], sizes = [64], strides = [1]} : vector<128xf32> to vector<64xf32>
    %18 = vector.extract_strided_slice %7 {offsets = [0], sizes = [64], strides = [1]} : vector<128xf32> to vector<64xf32>
    %19 = vector.extract_strided_slice %7 {offsets = [64], sizes = [64], strides = [1]} : vector<128xf32> to vector<64xf32>
    %20 = vector.extract_strided_slice %9 {offsets = [0], sizes = [64], strides = [1]} : vector<128xf32> to vector<64xf32>
    %21 = vector.extract_strided_slice %9 {offsets = [64], sizes = [64], strides = [1]} : vector<128xf32> to vector<64xf32>
    %22 = vector.extract_strided_slice %11 {offsets = [0], sizes = [64], strides = [1]} : vector<128xf32> to vector<64xf32>
    %23 = vector.extract_strided_slice %11 {offsets = [64], sizes = [64], strides = [1]} : vector<128xf32> to vector<64xf32>
    %24 = vector.extract_strided_slice %15 {offsets = [0], sizes = [64], strides = [1]} : vector<128xf32> to vector<64xf32>
    %c6 = arith.constant 6 : index
    %c0_7 = arith.constant 0 : index
    %25 = vector.load %arg4[%c6, %c0_7] : memref<13x128xf32, #tpu.memory_space<vmem>>, vector<1x128xf32>
    %26 = vector.shape_cast %25 : vector<1x128xf32> to vector<128xf32>
    %c7 = arith.constant 7 : index
    %c0_8 = arith.constant 0 : index
    %27 = vector.load %arg4[%c7, %c0_8] : memref<13x128xf32, #tpu.memory_space<vmem>>, vector<1x128xf32>
    %28 = vector.shape_cast %27 : vector<1x128xf32> to vector<128xf32>
    %c8 = arith.constant 8 : index
    %c0_9 = arith.constant 0 : index
    %29 = vector.load %arg4[%c8, %c0_9] : memref<13x128xf32, #tpu.memory_space<vmem>>, vector<1x128xf32>
    %30 = vector.shape_cast %29 : vector<1x128xf32> to vector<128xf32>
    %c9 = arith.constant 9 : index
    %c0_10 = arith.constant 0 : index
    %31 = vector.load %arg4[%c9, %c0_10] : memref<13x128xf32, #tpu.memory_space<vmem>>, vector<1x128xf32>
    %32 = vector.shape_cast %31 : vector<1x128xf32> to vector<128xf32>
    %c10 = arith.constant 10 : index
    %c0_11 = arith.constant 0 : index
    %33 = vector.load %arg4[%c10, %c0_11] : memref<13x128xf32, #tpu.memory_space<vmem>>, vector<1x128xf32>
    %34 = vector.shape_cast %33 : vector<1x128xf32> to vector<128xf32>
    %c11 = arith.constant 11 : index
    %c0_12 = arith.constant 0 : index
    %35 = vector.load %arg4[%c11, %c0_12] : memref<13x128xf32, #tpu.memory_space<vmem>>, vector<1x128xf32>
    %36 = vector.shape_cast %35 : vector<1x128xf32> to vector<128xf32>
    %37 = vector.extract_strided_slice %26 {offsets = [0], sizes = [64], strides = [1]} : vector<128xf32> to vector<64xf32>
    %38 = vector.extract_strided_slice %26 {offsets = [64], sizes = [64], strides = [1]} : vector<128xf32> to vector<64xf32>
    %39 = vector.extract_strided_slice %28 {offsets = [0], sizes = [64], strides = [1]} : vector<128xf32> to vector<64xf32>
    %40 = vector.extract_strided_slice %28 {offsets = [64], sizes = [64], strides = [1]} : vector<128xf32> to vector<64xf32>
    %41 = vector.extract_strided_slice %30 {offsets = [0], sizes = [64], strides = [1]} : vector<128xf32> to vector<64xf32>
    %42 = vector.extract_strided_slice %30 {offsets = [64], sizes = [64], strides = [1]} : vector<128xf32> to vector<64xf32>
    %43 = vector.extract_strided_slice %32 {offsets = [0], sizes = [64], strides = [1]} : vector<128xf32> to vector<64xf32>
    %44 = vector.extract_strided_slice %32 {offsets = [64], sizes = [64], strides = [1]} : vector<128xf32> to vector<64xf32>
    %45 = vector.extract_strided_slice %36 {offsets = [0], sizes = [64], strides = [1]} : vector<128xf32> to vector<64xf32>
    %c0_13 = arith.constant 0 : index
    %c0_14 = arith.constant 0 : index
    %c0_15 = arith.constant 0 : index
    %46 = vector.load %arg1[%c0_13, %c0_14, %c0_15] : memref<2x12x64xf32, #tpu.memory_space<vmem>>, vector<1x12x64xf32>
    %47 = vector.shape_cast %46 : vector<1x12x64xf32> to vector<12x64xf32>
    %c0_16 = arith.constant 0 : index
    %c0_17 = arith.constant 0 : index
    %c0_18 = arith.constant 0 : index
    %48 = vector.load %arg2[%c0_16, %c0_17, %c0_18] : memref<2x12x12xf32, #tpu.memory_space<vmem>>, vector<1x12x12xf32>
    %49 = vector.shape_cast %48 : vector<1x12x12xf32> to vector<12x12xf32>
    %cst = arith.constant dense<0.000000e+00> : vector<12xf32>
    %50 = vector.multi_reduction <add>, %47, %cst [1] : vector<12x64xf32> to vector<12xf32>
    %51 = vector.shape_cast %50 : vector<12xf32> to vector<12x1xf32>
    %cst_19 = arith.constant 6.400000e+01 : f32
    %52 = vector.broadcast %cst_19 : f32 to vector<12x1xf32>
    %53 = arith.divf %51, %52 : vector<12x1xf32>
    %54 = vector.broadcast %53 : vector<12x1xf32> to vector<12x64xf32>
    %55 = arith.subf %47, %54 : vector<12x64xf32>
    %56 = arith.mulf %55, %55 : vector<12x64xf32>
    %cst_20 = arith.constant dense<0.000000e+00> : vector<12xf32>
    %57 = vector.multi_reduction <add>, %56, %cst_20 [1] : vector<12x64xf32> to vector<12xf32>
    %58 = vector.shape_cast %57 : vector<12xf32> to vector<12x1xf32>
    %cst_21 = arith.constant 6.400000e+01 : f32
    %59 = vector.broadcast %cst_21 : f32 to vector<12x1xf32>
    %60 = arith.divf %58, %59 : vector<12x1xf32>
    %cst_22 = arith.constant 9.99999974E-6 : f32
    %61 = vector.broadcast %cst_22 : f32 to vector<12x1xf32>
    %62 = arith.addf %60, %61 : vector<12x1xf32>
    %63 = math.rsqrt %62 : vector<12x1xf32>
    %64 = vector.broadcast %63 : vector<12x1xf32> to vector<12x64xf32>
    %65 = arith.mulf %55, %64 : vector<12x64xf32>
    %66 = vector.shape_cast %20 : vector<64xf32> to vector<1x64xf32>
    %67 = vector.broadcast %66 : vector<1x64xf32> to vector<12x64xf32>
    %68 = arith.mulf %65, %67 : vector<12x64xf32>
    %69 = vector.shape_cast %21 : vector<64xf32> to vector<1x64xf32>
    %70 = vector.broadcast %69 : vector<1x64xf32> to vector<12x64xf32>
    %71 = arith.addf %68, %70 : vector<12x64xf32>
    %72 = arith.truncf %71 : vector<12x64xf32> to vector<12x64xbf16>
    %c0_23 = arith.constant 0 : index
    %c0_24 = arith.constant 0 : index
    %c0_25 = arith.constant 0 : index
    %73 = vector.load %arg3[%c0_23, %c0_24, %c0_25] : memref<2x320x192xbf16, #tpu.memory_space<vmem>>, vector<1x64x192xbf16>
    %74 = vector.shape_cast %73 : vector<1x64x192xbf16> to vector<64x192xbf16>
    %cst_26 = arith.constant dense<0.000000e+00> : vector<12x192xf32>
    %75 = tpu.matmul %72, %74, %cst_26 {dimension_numbers = #tpu.dot_dimension_numbers<[1], [0], [0], [1], [0, 0, 1, 1], [], []>} : vector<12x64xbf16>, vector<64x192xbf16>, vector<12x192xf32> -> vector<12x192xf32>
    %76 = vector.extract_strided_slice %75 {offsets = [0, 0], sizes = [12, 64], strides = [1, 1]} : vector<12x192xf32> to vector<12x64xf32>
    %77 = vector.shape_cast %16 : vector<64xf32> to vector<1x64xf32>
    %78 = vector.broadcast %77 : vector<1x64xf32> to vector<12x64xf32>
    %79 = arith.addf %76, %78 : vector<12x64xf32>
    %80 = vector.extract_strided_slice %75 {offsets = [0, 64], sizes = [12, 64], strides = [1, 1]} : vector<12x192xf32> to vector<12x64xf32>
    %81 = vector.shape_cast %17 : vector<64xf32> to vector<1x64xf32>
    %82 = vector.broadcast %81 : vector<1x64xf32> to vector<12x64xf32>
    %83 = arith.addf %80, %82 : vector<12x64xf32>
    %84 = vector.extract_strided_slice %75 {offsets = [0, 128], sizes = [12, 64], strides = [1, 1]} : vector<12x192xf32> to vector<12x64xf32>
    %85 = vector.shape_cast %18 : vector<64xf32> to vector<1x64xf32>
    %86 = vector.broadcast %85 : vector<1x64xf32> to vector<12x64xf32>
    %87 = arith.addf %84, %86 : vector<12x64xf32>
    %88 = arith.truncf %87 : vector<12x64xf32> to vector<12x64xbf16>
    %cst_27 = arith.constant 0.000000e+00 : f32
    %89 = vector.broadcast %cst_27 : f32 to vector<12x64xf32>
    %90 = vector.extract_strided_slice %79 {offsets = [0, 0], sizes = [12, 16], strides = [1, 1]} : vector<12x64xf32> to vector<12x16xf32>
    %91 = arith.truncf %90 : vector<12x16xf32> to vector<12x16xbf16>
    %92 = vector.extract_strided_slice %83 {offsets = [0, 0], sizes = [12, 16], strides = [1, 1]} : vector<12x64xf32> to vector<12x16xf32>
    %93 = arith.truncf %92 : vector<12x16xf32> to vector<12x16xbf16>
    %94 = vector.extract_strided_slice %88 {offsets = [0, 0], sizes = [12, 16], strides = [1, 1]} : vector<12x64xbf16> to vector<12x16xbf16>
    %cst_28 = arith.constant dense<0.000000e+00> : vector<12x12xf32>
    %95 = tpu.matmul %91, %93, %cst_28 {dimension_numbers = #tpu.dot_dimension_numbers<[1], [1], [0], [0], [0, 0, 1, 0], [], []>} : vector<12x16xbf16>, vector<12x16xbf16>, vector<12x12xf32> -> vector<12x12xf32>
    %96 = arith.addf %95, %49 : vector<12x12xf32>
    %cst_29 = arith.constant dense<0xFF800000> : vector<12xf32>
    %97 = vector.multi_reduction <maximumf>, %96, %cst_29 [1] : vector<12x12xf32> to vector<12xf32>
    %98 = vector.shape_cast %97 : vector<12xf32> to vector<12x1xf32>
    %99 = vector.broadcast %98 : vector<12x1xf32> to vector<12x12xf32>
    %100 = arith.subf %96, %99 : vector<12x12xf32>
    %101 = math.exp %100 : vector<12x12xf32>
    %cst_30 = arith.constant dense<0.000000e+00> : vector<12xf32>
    %102 = vector.multi_reduction <add>, %101, %cst_30 [1] : vector<12x12xf32> to vector<12xf32>
    %103 = vector.shape_cast %102 : vector<12xf32> to vector<12x1xf32>
    %104 = tpu.reciprocal %103 {approx = true} : vector<12x1xf32> -> vector<12x1xf32>
    %105 = vector.broadcast %104 : vector<12x1xf32> to vector<12x12xf32>
    %106 = arith.mulf %101, %105 : vector<12x12xf32>
    %107 = arith.truncf %106 : vector<12x12xf32> to vector<12x12xbf16>
    %cst_31 = arith.constant dense<0.000000e+00> : vector<12x16xf32>
    %108 = tpu.matmul %107, %94, %cst_31 {dimension_numbers = #tpu.dot_dimension_numbers<[1], [0], [0], [1], [0, 0, 1, 1], [], []>} : vector<12x12xbf16>, vector<12x16xbf16>, vector<12x16xf32> -> vector<12x16xf32>
    %c0_32 = arith.constant 0 : index
    %c64 = arith.constant 64 : index
    %c0_33 = arith.constant 0 : index
    %109 = vector.load %arg3[%c0_32, %c64, %c0_33] : memref<2x320x192xbf16, #tpu.memory_space<vmem>>, vector<1x16x64xbf16>
    %110 = vector.shape_cast %109 : vector<1x16x64xbf16> to vector<16x64xbf16>
    %111 = arith.truncf %108 : vector<12x16xf32> to vector<12x16xbf16>
    %cst_34 = arith.constant dense<0.000000e+00> : vector<12x64xf32>
    %112 = tpu.matmul %111, %110, %cst_34 {dimension_numbers = #tpu.dot_dimension_numbers<[1], [0], [0], [1], [0, 0, 1, 1], [], []>} : vector<12x16xbf16>, vector<16x64xbf16>, vector<12x64xf32> -> vector<12x64xf32>
    %113 = arith.addf %89, %112 : vector<12x64xf32>
    %114 = vector.extract_strided_slice %79 {offsets = [0, 16], sizes = [12, 16], strides = [1, 1]} : vector<12x64xf32> to vector<12x16xf32>
    %115 = arith.truncf %114 : vector<12x16xf32> to vector<12x16xbf16>
    %116 = vector.extract_strided_slice %83 {offsets = [0, 16], sizes = [12, 16], strides = [1, 1]} : vector<12x64xf32> to vector<12x16xf32>
    %117 = arith.truncf %116 : vector<12x16xf32> to vector<12x16xbf16>
    %118 = vector.extract_strided_slice %88 {offsets = [0, 16], sizes = [12, 16], strides = [1, 1]} : vector<12x64xbf16> to vector<12x16xbf16>
    %cst_35 = arith.constant dense<0.000000e+00> : vector<12x12xf32>
    %119 = tpu.matmul %115, %117, %cst_35 {dimension_numbers = #tpu.dot_dimension_numbers<[1], [1], [0], [0], [0, 0, 1, 0], [], []>} : vector<12x16xbf16>, vector<12x16xbf16>, vector<12x12xf32> -> vector<12x12xf32>
    %120 = arith.addf %119, %49 : vector<12x12xf32>
    %cst_36 = arith.constant dense<0xFF800000> : vector<12xf32>
    %121 = vector.multi_reduction <maximumf>, %120, %cst_36 [1] : vector<12x12xf32> to vector<12xf32>
    %122 = vector.shape_cast %121 : vector<12xf32> to vector<12x1xf32>
    %123 = vector.broadcast %122 : vector<12x1xf32> to vector<12x12xf32>
    %124 = arith.subf %120, %123 : vector<12x12xf32>
    %125 = math.exp %124 : vector<12x12xf32>
    %cst_37 = arith.constant dense<0.000000e+00> : vector<12xf32>
    %126 = vector.multi_reduction <add>, %125, %cst_37 [1] : vector<12x12xf32> to vector<12xf32>
    %127 = vector.shape_cast %126 : vector<12xf32> to vector<12x1xf32>
    %128 = tpu.reciprocal %127 {approx = true} : vector<12x1xf32> -> vector<12x1xf32>
    %129 = vector.broadcast %128 : vector<12x1xf32> to vector<12x12xf32>
    %130 = arith.mulf %125, %129 : vector<12x12xf32>
    %131 = arith.truncf %130 : vector<12x12xf32> to vector<12x12xbf16>
    %cst_38 = arith.constant dense<0.000000e+00> : vector<12x16xf32>
    %132 = tpu.matmul %131, %118, %cst_38 {dimension_numbers = #tpu.dot_dimension_numbers<[1], [0], [0], [1], [0, 0, 1, 1], [], []>} : vector<12x12xbf16>, vector<12x16xbf16>, vector<12x16xf32> -> vector<12x16xf32>
    %c0_39 = arith.constant 0 : index
    %c80 = arith.constant 80 : index
    %c0_40 = arith.constant 0 : index
    %133 = vector.load %arg3[%c0_39, %c80, %c0_40] : memref<2x320x192xbf16, #tpu.memory_space<vmem>>, vector<1x16x64xbf16>
    %134 = vector.shape_cast %133 : vector<1x16x64xbf16> to vector<16x64xbf16>
    %135 = arith.truncf %132 : vector<12x16xf32> to vector<12x16xbf16>
    %cst_41 = arith.constant dense<0.000000e+00> : vector<12x64xf32>
    %136 = tpu.matmul %135, %134, %cst_41 {dimension_numbers = #tpu.dot_dimension_numbers<[1], [0], [0], [1], [0, 0, 1, 1], [], []>} : vector<12x16xbf16>, vector<16x64xbf16>, vector<12x64xf32> -> vector<12x64xf32>
    %137 = arith.addf %113, %136 : vector<12x64xf32>
    %138 = vector.extract_strided_slice %79 {offsets = [0, 32], sizes = [12, 16], strides = [1, 1]} : vector<12x64xf32> to vector<12x16xf32>
    %139 = arith.truncf %138 : vector<12x16xf32> to vector<12x16xbf16>
    %140 = vector.extract_strided_slice %83 {offsets = [0, 32], sizes = [12, 16], strides = [1, 1]} : vector<12x64xf32> to vector<12x16xf32>
    %141 = arith.truncf %140 : vector<12x16xf32> to vector<12x16xbf16>
    %142 = vector.extract_strided_slice %88 {offsets = [0, 32], sizes = [12, 16], strides = [1, 1]} : vector<12x64xbf16> to vector<12x16xbf16>
    %cst_42 = arith.constant dense<0.000000e+00> : vector<12x12xf32>
    %143 = tpu.matmul %139, %141, %cst_42 {dimension_numbers = #tpu.dot_dimension_numbers<[1], [1], [0], [0], [0, 0, 1, 0], [], []>} : vector<12x16xbf16>, vector<12x16xbf16>, vector<12x12xf32> -> vector<12x12xf32>
    %144 = arith.addf %143, %49 : vector<12x12xf32>
    %cst_43 = arith.constant dense<0xFF800000> : vector<12xf32>
    %145 = vector.multi_reduction <maximumf>, %144, %cst_43 [1] : vector<12x12xf32> to vector<12xf32>
    %146 = vector.shape_cast %145 : vector<12xf32> to vector<12x1xf32>
    %147 = vector.broadcast %146 : vector<12x1xf32> to vector<12x12xf32>
    %148 = arith.subf %144, %147 : vector<12x12xf32>
    %149 = math.exp %148 : vector<12x12xf32>
    %cst_44 = arith.constant dense<0.000000e+00> : vector<12xf32>
    %150 = vector.multi_reduction <add>, %149, %cst_44 [1] : vector<12x12xf32> to vector<12xf32>
    %151 = vector.shape_cast %150 : vector<12xf32> to vector<12x1xf32>
    %152 = tpu.reciprocal %151 {approx = true} : vector<12x1xf32> -> vector<12x1xf32>
    %153 = vector.broadcast %152 : vector<12x1xf32> to vector<12x12xf32>
    %154 = arith.mulf %149, %153 : vector<12x12xf32>
    %155 = arith.truncf %154 : vector<12x12xf32> to vector<12x12xbf16>
    %cst_45 = arith.constant dense<0.000000e+00> : vector<12x16xf32>
    %156 = tpu.matmul %155, %142, %cst_45 {dimension_numbers = #tpu.dot_dimension_numbers<[1], [0], [0], [1], [0, 0, 1, 1], [], []>} : vector<12x12xbf16>, vector<12x16xbf16>, vector<12x16xf32> -> vector<12x16xf32>
    %c0_46 = arith.constant 0 : index
    %c96 = arith.constant 96 : index
    %c0_47 = arith.constant 0 : index
    %157 = vector.load %arg3[%c0_46, %c96, %c0_47] : memref<2x320x192xbf16, #tpu.memory_space<vmem>>, vector<1x16x64xbf16>
    %158 = vector.shape_cast %157 : vector<1x16x64xbf16> to vector<16x64xbf16>
    %159 = arith.truncf %156 : vector<12x16xf32> to vector<12x16xbf16>
    %cst_48 = arith.constant dense<0.000000e+00> : vector<12x64xf32>
    %160 = tpu.matmul %159, %158, %cst_48 {dimension_numbers = #tpu.dot_dimension_numbers<[1], [0], [0], [1], [0, 0, 1, 1], [], []>} : vector<12x16xbf16>, vector<16x64xbf16>, vector<12x64xf32> -> vector<12x64xf32>
    %161 = arith.addf %137, %160 : vector<12x64xf32>
    %162 = vector.extract_strided_slice %79 {offsets = [0, 48], sizes = [12, 16], strides = [1, 1]} : vector<12x64xf32> to vector<12x16xf32>
    %163 = arith.truncf %162 : vector<12x16xf32> to vector<12x16xbf16>
    %164 = vector.extract_strided_slice %83 {offsets = [0, 48], sizes = [12, 16], strides = [1, 1]} : vector<12x64xf32> to vector<12x16xf32>
    %165 = arith.truncf %164 : vector<12x16xf32> to vector<12x16xbf16>
    %166 = vector.extract_strided_slice %88 {offsets = [0, 48], sizes = [12, 16], strides = [1, 1]} : vector<12x64xbf16> to vector<12x16xbf16>
    %cst_49 = arith.constant dense<0.000000e+00> : vector<12x12xf32>
    %167 = tpu.matmul %163, %165, %cst_49 {dimension_numbers = #tpu.dot_dimension_numbers<[1], [1], [0], [0], [0, 0, 1, 0], [], []>} : vector<12x16xbf16>, vector<12x16xbf16>, vector<12x12xf32> -> vector<12x12xf32>
    %168 = arith.addf %167, %49 : vector<12x12xf32>
    %cst_50 = arith.constant dense<0xFF800000> : vector<12xf32>
    %169 = vector.multi_reduction <maximumf>, %168, %cst_50 [1] : vector<12x12xf32> to vector<12xf32>
    %170 = vector.shape_cast %169 : vector<12xf32> to vector<12x1xf32>
    %171 = vector.broadcast %170 : vector<12x1xf32> to vector<12x12xf32>
    %172 = arith.subf %168, %171 : vector<12x12xf32>
    %173 = math.exp %172 : vector<12x12xf32>
    %cst_51 = arith.constant dense<0.000000e+00> : vector<12xf32>
    %174 = vector.multi_reduction <add>, %173, %cst_51 [1] : vector<12x12xf32> to vector<12xf32>
    %175 = vector.shape_cast %174 : vector<12xf32> to vector<12x1xf32>
    %176 = tpu.reciprocal %175 {approx = true} : vector<12x1xf32> -> vector<12x1xf32>
    %177 = vector.broadcast %176 : vector<12x1xf32> to vector<12x12xf32>
    %178 = arith.mulf %173, %177 : vector<12x12xf32>
    %179 = arith.truncf %178 : vector<12x12xf32> to vector<12x12xbf16>
    %cst_52 = arith.constant dense<0.000000e+00> : vector<12x16xf32>
    %180 = tpu.matmul %179, %166, %cst_52 {dimension_numbers = #tpu.dot_dimension_numbers<[1], [0], [0], [1], [0, 0, 1, 1], [], []>} : vector<12x12xbf16>, vector<12x16xbf16>, vector<12x16xf32> -> vector<12x16xf32>
    %c0_53 = arith.constant 0 : index
    %c112 = arith.constant 112 : index
    %c0_54 = arith.constant 0 : index
    %181 = vector.load %arg3[%c0_53, %c112, %c0_54] : memref<2x320x192xbf16, #tpu.memory_space<vmem>>, vector<1x16x64xbf16>
    %182 = vector.shape_cast %181 : vector<1x16x64xbf16> to vector<16x64xbf16>
    %183 = arith.truncf %180 : vector<12x16xf32> to vector<12x16xbf16>
    %cst_55 = arith.constant dense<0.000000e+00> : vector<12x64xf32>
    %184 = tpu.matmul %183, %182, %cst_55 {dimension_numbers = #tpu.dot_dimension_numbers<[1], [0], [0], [1], [0, 0, 1, 1], [], []>} : vector<12x16xbf16>, vector<16x64xbf16>, vector<12x64xf32> -> vector<12x64xf32>
    %185 = arith.addf %161, %184 : vector<12x64xf32>
    %186 = arith.addf %47, %185 : vector<12x64xf32>
    %187 = vector.shape_cast %19 : vector<64xf32> to vector<1x64xf32>
    %188 = vector.broadcast %187 : vector<1x64xf32> to vector<12x64xf32>
    %189 = arith.addf %186, %188 : vector<12x64xf32>
    %cst_56 = arith.constant dense<0.000000e+00> : vector<12xf32>
    %190 = vector.multi_reduction <add>, %189, %cst_56 [1] : vector<12x64xf32> to vector<12xf32>
    %191 = vector.shape_cast %190 : vector<12xf32> to vector<12x1xf32>
    %cst_57 = arith.constant 6.400000e+01 : f32
    %192 = vector.broadcast %cst_57 : f32 to vector<12x1xf32>
    %193 = arith.divf %191, %192 : vector<12x1xf32>
    %194 = vector.broadcast %193 : vector<12x1xf32> to vector<12x64xf32>
    %195 = arith.subf %189, %194 : vector<12x64xf32>
    %196 = arith.mulf %195, %195 : vector<12x64xf32>
    %cst_58 = arith.constant dense<0.000000e+00> : vector<12xf32>
    %197 = vector.multi_reduction <add>, %196, %cst_58 [1] : vector<12x64xf32> to vector<12xf32>
    %198 = vector.shape_cast %197 : vector<12xf32> to vector<12x1xf32>
    %cst_59 = arith.constant 6.400000e+01 : f32
    %199 = vector.broadcast %cst_59 : f32 to vector<12x1xf32>
    %200 = arith.divf %198, %199 : vector<12x1xf32>
    %cst_60 = arith.constant 9.99999974E-6 : f32
    %201 = vector.broadcast %cst_60 : f32 to vector<12x1xf32>
    %202 = arith.addf %200, %201 : vector<12x1xf32>
    %203 = math.rsqrt %202 : vector<12x1xf32>
    %204 = vector.broadcast %203 : vector<12x1xf32> to vector<12x64xf32>
    %205 = arith.mulf %195, %204 : vector<12x64xf32>
    %206 = vector.shape_cast %22 : vector<64xf32> to vector<1x64xf32>
    %207 = vector.broadcast %206 : vector<1x64xf32> to vector<12x64xf32>
    %208 = arith.mulf %205, %207 : vector<12x64xf32>
    %209 = vector.shape_cast %23 : vector<64xf32> to vector<1x64xf32>
    %210 = vector.broadcast %209 : vector<1x64xf32> to vector<12x64xf32>
    %211 = arith.addf %208, %210 : vector<12x64xf32>
    %212 = arith.truncf %211 : vector<12x64xf32> to vector<12x64xbf16>
    %c0_61 = arith.constant 0 : index
    %c128 = arith.constant 128 : index
    %c0_62 = arith.constant 0 : index
    %213 = vector.load %arg3[%c0_61, %c128, %c0_62] : memref<2x320x192xbf16, #tpu.memory_space<vmem>>, vector<1x64x128xbf16>
    %214 = vector.shape_cast %213 : vector<1x64x128xbf16> to vector<64x128xbf16>
    %cst_63 = arith.constant dense<0.000000e+00> : vector<12x128xf32>
    %215 = tpu.matmul %212, %214, %cst_63 {dimension_numbers = #tpu.dot_dimension_numbers<[1], [0], [0], [1], [0, 0, 1, 1], [], []>} : vector<12x64xbf16>, vector<64x128xbf16>, vector<12x128xf32> -> vector<12x128xf32>
    %216 = vector.shape_cast %13 : vector<128xf32> to vector<1x128xf32>
    %217 = vector.broadcast %216 : vector<1x128xf32> to vector<12x128xf32>
    %218 = arith.addf %215, %217 : vector<12x128xf32>
    %cst_64 = arith.constant 5.000000e-01 : f32
    %219 = vector.broadcast %cst_64 : f32 to vector<12x128xf32>
    %220 = arith.mulf %219, %218 : vector<12x128xf32>
    %cst_65 = arith.constant 4.471500e-02 : f32
    %221 = vector.broadcast %cst_65 : f32 to vector<12x128xf32>
    %222 = arith.mulf %221, %218 : vector<12x128xf32>
    %223 = arith.mulf %222, %218 : vector<12x128xf32>
    %224 = arith.mulf %223, %218 : vector<12x128xf32>
    %225 = arith.addf %218, %224 : vector<12x128xf32>
    %cst_66 = arith.constant 0.797884583 : f32
    %226 = vector.broadcast %cst_66 : f32 to vector<12x128xf32>
    %227 = arith.mulf %226, %225 : vector<12x128xf32>
    %228 = math.tanh %227 : vector<12x128xf32>
    %cst_67 = arith.constant 1.000000e+00 : f32
    %229 = vector.broadcast %cst_67 : f32 to vector<12x128xf32>
    %230 = arith.addf %229, %228 : vector<12x128xf32>
    %231 = arith.mulf %220, %230 : vector<12x128xf32>
    %232 = arith.truncf %231 : vector<12x128xf32> to vector<12x128xbf16>
    %c0_68 = arith.constant 0 : index
    %c192 = arith.constant 192 : index
    %c0_69 = arith.constant 0 : index
    %233 = vector.load %arg3[%c0_68, %c192, %c0_69] : memref<2x320x192xbf16, #tpu.memory_space<vmem>>, vector<1x128x64xbf16>
    %234 = vector.shape_cast %233 : vector<1x128x64xbf16> to vector<128x64xbf16>
    %cst_70 = arith.constant dense<0.000000e+00> : vector<12x64xf32>
    %235 = tpu.matmul %232, %234, %cst_70 {dimension_numbers = #tpu.dot_dimension_numbers<[1], [0], [0], [1], [0, 0, 1, 1], [], []>} : vector<12x128xbf16>, vector<128x64xbf16>, vector<12x64xf32> -> vector<12x64xf32>
    %236 = vector.shape_cast %24 : vector<64xf32> to vector<1x64xf32>
    %237 = vector.broadcast %236 : vector<1x64xf32> to vector<12x64xf32>
    %238 = arith.addf %235, %237 : vector<12x64xf32>
    %239 = arith.addf %189, %238 : vector<12x64xf32>
    %c0_71 = arith.constant 0 : index
    %c0_72 = arith.constant 0 : index
    %c0_73 = arith.constant 0 : index
    %c0_74 = arith.constant 0 : index
    %240 = vector.load %arg5[%c0_71, %c0_72, %c0_73, %c0_74] : memref<2x3x12x64xf32, #tpu.memory_space<vmem>>, vector<1x1x12x64xf32>
    %241 = vector.shape_cast %240 : vector<1x1x12x64xf32> to vector<12x64xf32>
    %242 = vector.shape_cast %239 : vector<12x64xf32> to vector<1x1x12x64xf32>
    tpu.vector_store %arg5[%c0_71, %c0_72, %c0_73, %c0_74], %242 {strides = array<i32>} : memref<2x3x12x64xf32, #tpu.memory_space<vmem>>, vector<1x1x12x64xf32>,
    %cst_75 = arith.constant dense<0.000000e+00> : vector<12xf32>
    %243 = vector.multi_reduction <add>, %239, %cst_75 [1] : vector<12x64xf32> to vector<12xf32>
    %244 = vector.shape_cast %243 : vector<12xf32> to vector<12x1xf32>
    %cst_76 = arith.constant 6.400000e+01 : f32
    %245 = vector.broadcast %cst_76 : f32 to vector<12x1xf32>
    %246 = arith.divf %244, %245 : vector<12x1xf32>
    %247 = vector.broadcast %246 : vector<12x1xf32> to vector<12x64xf32>
    %248 = arith.subf %239, %247 : vector<12x64xf32>
    %249 = arith.mulf %248, %248 : vector<12x64xf32>
    %cst_77 = arith.constant dense<0.000000e+00> : vector<12xf32>
    %250 = vector.multi_reduction <add>, %249, %cst_77 [1] : vector<12x64xf32> to vector<12xf32>
    %251 = vector.shape_cast %250 : vector<12xf32> to vector<12x1xf32>
    %cst_78 = arith.constant 6.400000e+01 : f32
    %252 = vector.broadcast %cst_78 : f32 to vector<12x1xf32>
    %253 = arith.divf %251, %252 : vector<12x1xf32>
    %cst_79 = arith.constant 9.99999974E-6 : f32
    %254 = vector.broadcast %cst_79 : f32 to vector<12x1xf32>
    %255 = arith.addf %253, %254 : vector<12x1xf32>
    %256 = math.rsqrt %255 : vector<12x1xf32>
    %257 = vector.broadcast %256 : vector<12x1xf32> to vector<12x64xf32>
    %258 = arith.mulf %248, %257 : vector<12x64xf32>
    %259 = vector.shape_cast %41 : vector<64xf32> to vector<1x64xf32>
    %260 = vector.broadcast %259 : vector<1x64xf32> to vector<12x64xf32>
    %261 = arith.mulf %258, %260 : vector<12x64xf32>
    %262 = vector.shape_cast %42 : vector<64xf32> to vector<1x64xf32>
    %263 = vector.broadcast %262 : vector<1x64xf32> to vector<12x64xf32>
    %264 = arith.addf %261, %263 : vector<12x64xf32>
    %265 = arith.truncf %264 : vector<12x64xf32> to vector<12x64xbf16>
    %c1_80 = arith.constant 1 : index
    %c0_81 = arith.constant 0 : index
    %c0_82 = arith.constant 0 : index
    %266 = vector.load %arg3[%c1_80, %c0_81, %c0_82] : memref<2x320x192xbf16, #tpu.memory_space<vmem>>, vector<1x64x192xbf16>
    %267 = vector.shape_cast %266 : vector<1x64x192xbf16> to vector<64x192xbf16>
    %cst_83 = arith.constant dense<0.000000e+00> : vector<12x192xf32>
    %268 = tpu.matmul %265, %267, %cst_83 {dimension_numbers = #tpu.dot_dimension_numbers<[1], [0], [0], [1], [0, 0, 1, 1], [], []>} : vector<12x64xbf16>, vector<64x192xbf16>, vector<12x192xf32> -> vector<12x192xf32>
    %269 = vector.extract_strided_slice %268 {offsets = [0, 0], sizes = [12, 64], strides = [1, 1]} : vector<12x192xf32> to vector<12x64xf32>
    %270 = vector.shape_cast %37 : vector<64xf32> to vector<1x64xf32>
    %271 = vector.broadcast %270 : vector<1x64xf32> to vector<12x64xf32>
    %272 = arith.addf %269, %271 : vector<12x64xf32>
    %273 = vector.extract_strided_slice %268 {offsets = [0, 64], sizes = [12, 64], strides = [1, 1]} : vector<12x192xf32> to vector<12x64xf32>
    %274 = vector.shape_cast %38 : vector<64xf32> to vector<1x64xf32>
    %275 = vector.broadcast %274 : vector<1x64xf32> to vector<12x64xf32>
    %276 = arith.addf %273, %275 : vector<12x64xf32>
    %277 = vector.extract_strided_slice %268 {offsets = [0, 128], sizes = [12, 64], strides = [1, 1]} : vector<12x192xf32> to vector<12x64xf32>
    %278 = vector.shape_cast %39 : vector<64xf32> to vector<1x64xf32>
    %279 = vector.broadcast %278 : vector<1x64xf32> to vector<12x64xf32>
    %280 = arith.addf %277, %279 : vector<12x64xf32>
    %281 = arith.truncf %280 : vector<12x64xf32> to vector<12x64xbf16>
    %cst_84 = arith.constant 0.000000e+00 : f32
    %282 = vector.broadcast %cst_84 : f32 to vector<12x64xf32>
    %283 = vector.extract_strided_slice %272 {offsets = [0, 0], sizes = [12, 16], strides = [1, 1]} : vector<12x64xf32> to vector<12x16xf32>
    %284 = arith.truncf %283 : vector<12x16xf32> to vector<12x16xbf16>
    %285 = vector.extract_strided_slice %276 {offsets = [0, 0], sizes = [12, 16], strides = [1, 1]} : vector<12x64xf32> to vector<12x16xf32>
    %286 = arith.truncf %285 : vector<12x16xf32> to vector<12x16xbf16>
    %287 = vector.extract_strided_slice %281 {offsets = [0, 0], sizes = [12, 16], strides = [1, 1]} : vector<12x64xbf16> to vector<12x16xbf16>
    %cst_85 = arith.constant dense<0.000000e+00> : vector<12x12xf32>
    %288 = tpu.matmul %284, %286, %cst_85 {dimension_numbers = #tpu.dot_dimension_numbers<[1], [1], [0], [0], [0, 0, 1, 0], [], []>} : vector<12x16xbf16>, vector<12x16xbf16>, vector<12x12xf32> -> vector<12x12xf32>
    %289 = arith.addf %288, %49 : vector<12x12xf32>
    %cst_86 = arith.constant dense<0xFF800000> : vector<12xf32>
    %290 = vector.multi_reduction <maximumf>, %289, %cst_86 [1] : vector<12x12xf32> to vector<12xf32>
    %291 = vector.shape_cast %290 : vector<12xf32> to vector<12x1xf32>
    %292 = vector.broadcast %291 : vector<12x1xf32> to vector<12x12xf32>
    %293 = arith.subf %289, %292 : vector<12x12xf32>
    %294 = math.exp %293 : vector<12x12xf32>
    %cst_87 = arith.constant dense<0.000000e+00> : vector<12xf32>
    %295 = vector.multi_reduction <add>, %294, %cst_87 [1] : vector<12x12xf32> to vector<12xf32>
    %296 = vector.shape_cast %295 : vector<12xf32> to vector<12x1xf32>
    %297 = tpu.reciprocal %296 {approx = true} : vector<12x1xf32> -> vector<12x1xf32>
    %298 = vector.broadcast %297 : vector<12x1xf32> to vector<12x12xf32>
    %299 = arith.mulf %294, %298 : vector<12x12xf32>
    %300 = arith.truncf %299 : vector<12x12xf32> to vector<12x12xbf16>
    %cst_88 = arith.constant dense<0.000000e+00> : vector<12x16xf32>
    %301 = tpu.matmul %300, %287, %cst_88 {dimension_numbers = #tpu.dot_dimension_numbers<[1], [0], [0], [1], [0, 0, 1, 1], [], []>} : vector<12x12xbf16>, vector<12x16xbf16>, vector<12x16xf32> -> vector<12x16xf32>
    %c1_89 = arith.constant 1 : index
    %c64_90 = arith.constant 64 : index
    %c0_91 = arith.constant 0 : index
    %302 = vector.load %arg3[%c1_89, %c64_90, %c0_91] : memref<2x320x192xbf16, #tpu.memory_space<vmem>>, vector<1x16x64xbf16>
    %303 = vector.shape_cast %302 : vector<1x16x64xbf16> to vector<16x64xbf16>
    %304 = arith.truncf %301 : vector<12x16xf32> to vector<12x16xbf16>
    %cst_92 = arith.constant dense<0.000000e+00> : vector<12x64xf32>
    %305 = tpu.matmul %304, %303, %cst_92 {dimension_numbers = #tpu.dot_dimension_numbers<[1], [0], [0], [1], [0, 0, 1, 1], [], []>} : vector<12x16xbf16>, vector<16x64xbf16>, vector<12x64xf32> -> vector<12x64xf32>
    %306 = arith.addf %282, %305 : vector<12x64xf32>
    %307 = vector.extract_strided_slice %272 {offsets = [0, 16], sizes = [12, 16], strides = [1, 1]} : vector<12x64xf32> to vector<12x16xf32>
    %308 = arith.truncf %307 : vector<12x16xf32> to vector<12x16xbf16>
    %309 = vector.extract_strided_slice %276 {offsets = [0, 16], sizes = [12, 16], strides = [1, 1]} : vector<12x64xf32> to vector<12x16xf32>
    %310 = arith.truncf %309 : vector<12x16xf32> to vector<12x16xbf16>
    %311 = vector.extract_strided_slice %281 {offsets = [0, 16], sizes = [12, 16], strides = [1, 1]} : vector<12x64xbf16> to vector<12x16xbf16>
    %cst_93 = arith.constant dense<0.000000e+00> : vector<12x12xf32>
    %312 = tpu.matmul %308, %310, %cst_93 {dimension_numbers = #tpu.dot_dimension_numbers<[1], [1], [0], [0], [0, 0, 1, 0], [], []>} : vector<12x16xbf16>, vector<12x16xbf16>, vector<12x12xf32> -> vector<12x12xf32>
    %313 = arith.addf %312, %49 : vector<12x12xf32>
    %cst_94 = arith.constant dense<0xFF800000> : vector<12xf32>
    %314 = vector.multi_reduction <maximumf>, %313, %cst_94 [1] : vector<12x12xf32> to vector<12xf32>
    %315 = vector.shape_cast %314 : vector<12xf32> to vector<12x1xf32>
    %316 = vector.broadcast %315 : vector<12x1xf32> to vector<12x12xf32>
    %317 = arith.subf %313, %316 : vector<12x12xf32>
    %318 = math.exp %317 : vector<12x12xf32>
    %cst_95 = arith.constant dense<0.000000e+00> : vector<12xf32>
    %319 = vector.multi_reduction <add>, %318, %cst_95 [1] : vector<12x12xf32> to vector<12xf32>
    %320 = vector.shape_cast %319 : vector<12xf32> to vector<12x1xf32>
    %321 = tpu.reciprocal %320 {approx = true} : vector<12x1xf32> -> vector<12x1xf32>
    %322 = vector.broadcast %321 : vector<12x1xf32> to vector<12x12xf32>
    %323 = arith.mulf %318, %322 : vector<12x12xf32>
    %324 = arith.truncf %323 : vector<12x12xf32> to vector<12x12xbf16>
    %cst_96 = arith.constant dense<0.000000e+00> : vector<12x16xf32>
    %325 = tpu.matmul %324, %311, %cst_96 {dimension_numbers = #tpu.dot_dimension_numbers<[1], [0], [0], [1], [0, 0, 1, 1], [], []>} : vector<12x12xbf16>, vector<12x16xbf16>, vector<12x16xf32> -> vector<12x16xf32>
    %c1_97 = arith.constant 1 : index
    %c80_98 = arith.constant 80 : index
    %c0_99 = arith.constant 0 : index
    %326 = vector.load %arg3[%c1_97, %c80_98, %c0_99] : memref<2x320x192xbf16, #tpu.memory_space<vmem>>, vector<1x16x64xbf16>
    %327 = vector.shape_cast %326 : vector<1x16x64xbf16> to vector<16x64xbf16>
    %328 = arith.truncf %325 : vector<12x16xf32> to vector<12x16xbf16>
    %cst_100 = arith.constant dense<0.000000e+00> : vector<12x64xf32>
    %329 = tpu.matmul %328, %327, %cst_100 {dimension_numbers = #tpu.dot_dimension_numbers<[1], [0], [0], [1], [0, 0, 1, 1], [], []>} : vector<12x16xbf16>, vector<16x64xbf16>, vector<12x64xf32> -> vector<12x64xf32>
    %330 = arith.addf %306, %329 : vector<12x64xf32>
    %331 = vector.extract_strided_slice %272 {offsets = [0, 32], sizes = [12, 16], strides = [1, 1]} : vector<12x64xf32> to vector<12x16xf32>
    %332 = arith.truncf %331 : vector<12x16xf32> to vector<12x16xbf16>
    %333 = vector.extract_strided_slice %276 {offsets = [0, 32], sizes = [12, 16], strides = [1, 1]} : vector<12x64xf32> to vector<12x16xf32>
    %334 = arith.truncf %333 : vector<12x16xf32> to vector<12x16xbf16>
    %335 = vector.extract_strided_slice %281 {offsets = [0, 32], sizes = [12, 16], strides = [1, 1]} : vector<12x64xbf16> to vector<12x16xbf16>
    %cst_101 = arith.constant dense<0.000000e+00> : vector<12x12xf32>
    %336 = tpu.matmul %332, %334, %cst_101 {dimension_numbers = #tpu.dot_dimension_numbers<[1], [1], [0], [0], [0, 0, 1, 0], [], []>} : vector<12x16xbf16>, vector<12x16xbf16>, vector<12x12xf32> -> vector<12x12xf32>
    %337 = arith.addf %336, %49 : vector<12x12xf32>
    %cst_102 = arith.constant dense<0xFF800000> : vector<12xf32>
    %338 = vector.multi_reduction <maximumf>, %337, %cst_102 [1] : vector<12x12xf32> to vector<12xf32>
    %339 = vector.shape_cast %338 : vector<12xf32> to vector<12x1xf32>
    %340 = vector.broadcast %339 : vector<12x1xf32> to vector<12x12xf32>
    %341 = arith.subf %337, %340 : vector<12x12xf32>
    %342 = math.exp %341 : vector<12x12xf32>
    %cst_103 = arith.constant dense<0.000000e+00> : vector<12xf32>
    %343 = vector.multi_reduction <add>, %342, %cst_103 [1] : vector<12x12xf32> to vector<12xf32>
    %344 = vector.shape_cast %343 : vector<12xf32> to vector<12x1xf32>
    %345 = tpu.reciprocal %344 {approx = true} : vector<12x1xf32> -> vector<12x1xf32>
    %346 = vector.broadcast %345 : vector<12x1xf32> to vector<12x12xf32>
    %347 = arith.mulf %342, %346 : vector<12x12xf32>
    %348 = arith.truncf %347 : vector<12x12xf32> to vector<12x12xbf16>
    %cst_104 = arith.constant dense<0.000000e+00> : vector<12x16xf32>
    %349 = tpu.matmul %348, %335, %cst_104 {dimension_numbers = #tpu.dot_dimension_numbers<[1], [0], [0], [1], [0, 0, 1, 1], [], []>} : vector<12x12xbf16>, vector<12x16xbf16>, vector<12x16xf32> -> vector<12x16xf32>
    %c1_105 = arith.constant 1 : index
    %c96_106 = arith.constant 96 : index
    %c0_107 = arith.constant 0 : index
    %350 = vector.load %arg3[%c1_105, %c96_106, %c0_107] : memref<2x320x192xbf16, #tpu.memory_space<vmem>>, vector<1x16x64xbf16>
    %351 = vector.shape_cast %350 : vector<1x16x64xbf16> to vector<16x64xbf16>
    %352 = arith.truncf %349 : vector<12x16xf32> to vector<12x16xbf16>
    %cst_108 = arith.constant dense<0.000000e+00> : vector<12x64xf32>
    %353 = tpu.matmul %352, %351, %cst_108 {dimension_numbers = #tpu.dot_dimension_numbers<[1], [0], [0], [1], [0, 0, 1, 1], [], []>} : vector<12x16xbf16>, vector<16x64xbf16>, vector<12x64xf32> -> vector<12x64xf32>
    %354 = arith.addf %330, %353 : vector<12x64xf32>
    %355 = vector.extract_strided_slice %272 {offsets = [0, 48], sizes = [12, 16], strides = [1, 1]} : vector<12x64xf32> to vector<12x16xf32>
    %356 = arith.truncf %355 : vector<12x16xf32> to vector<12x16xbf16>
    %357 = vector.extract_strided_slice %276 {offsets = [0, 48], sizes = [12, 16], strides = [1, 1]} : vector<12x64xf32> to vector<12x16xf32>
    %358 = arith.truncf %357 : vector<12x16xf32> to vector<12x16xbf16>
    %359 = vector.extract_strided_slice %281 {offsets = [0, 48], sizes = [12, 16], strides = [1, 1]} : vector<12x64xbf16> to vector<12x16xbf16>
    %cst_109 = arith.constant dense<0.000000e+00> : vector<12x12xf32>
    %360 = tpu.matmul %356, %358, %cst_109 {dimension_numbers = #tpu.dot_dimension_numbers<[1], [1], [0], [0], [0, 0, 1, 0], [], []>} : vector<12x16xbf16>, vector<12x16xbf16>, vector<12x12xf32> -> vector<12x12xf32>
    %361 = arith.addf %360, %49 : vector<12x12xf32>
    %cst_110 = arith.constant dense<0xFF800000> : vector<12xf32>
    %362 = vector.multi_reduction <maximumf>, %361, %cst_110 [1] : vector<12x12xf32> to vector<12xf32>
    %363 = vector.shape_cast %362 : vector<12xf32> to vector<12x1xf32>
    %364 = vector.broadcast %363 : vector<12x1xf32> to vector<12x12xf32>
    %365 = arith.subf %361, %364 : vector<12x12xf32>
    %366 = math.exp %365 : vector<12x12xf32>
    %cst_111 = arith.constant dense<0.000000e+00> : vector<12xf32>
    %367 = vector.multi_reduction <add>, %366, %cst_111 [1] : vector<12x12xf32> to vector<12xf32>
    %368 = vector.shape_cast %367 : vector<12xf32> to vector<12x1xf32>
    %369 = tpu.reciprocal %368 {approx = true} : vector<12x1xf32> -> vector<12x1xf32>
    %370 = vector.broadcast %369 : vector<12x1xf32> to vector<12x12xf32>
    %371 = arith.mulf %366, %370 : vector<12x12xf32>
    %372 = arith.truncf %371 : vector<12x12xf32> to vector<12x12xbf16>
    %cst_112 = arith.constant dense<0.000000e+00> : vector<12x16xf32>
    %373 = tpu.matmul %372, %359, %cst_112 {dimension_numbers = #tpu.dot_dimension_numbers<[1], [0], [0], [1], [0, 0, 1, 1], [], []>} : vector<12x12xbf16>, vector<12x16xbf16>, vector<12x16xf32> -> vector<12x16xf32>
    %c1_113 = arith.constant 1 : index
    %c112_114 = arith.constant 112 : index
    %c0_115 = arith.constant 0 : index
    %374 = vector.load %arg3[%c1_113, %c112_114, %c0_115] : memref<2x320x192xbf16, #tpu.memory_space<vmem>>, vector<1x16x64xbf16>
    %375 = vector.shape_cast %374 : vector<1x16x64xbf16> to vector<16x64xbf16>
    %376 = arith.truncf %373 : vector<12x16xf32> to vector<12x16xbf16>
    %cst_116 = arith.constant dense<0.000000e+00> : vector<12x64xf32>
    %377 = tpu.matmul %376, %375, %cst_116 {dimension_numbers = #tpu.dot_dimension_numbers<[1], [0], [0], [1], [0, 0, 1, 1], [], []>} : vector<12x16xbf16>, vector<16x64xbf16>, vector<12x64xf32> -> vector<12x64xf32>
    %378 = arith.addf %354, %377 : vector<12x64xf32>
    %379 = arith.addf %239, %378 : vector<12x64xf32>
    %380 = vector.shape_cast %40 : vector<64xf32> to vector<1x64xf32>
    %381 = vector.broadcast %380 : vector<1x64xf32> to vector<12x64xf32>
    %382 = arith.addf %379, %381 : vector<12x64xf32>
    %cst_117 = arith.constant dense<0.000000e+00> : vector<12xf32>
    %383 = vector.multi_reduction <add>, %382, %cst_117 [1] : vector<12x64xf32> to vector<12xf32>
    %384 = vector.shape_cast %383 : vector<12xf32> to vector<12x1xf32>
    %cst_118 = arith.constant 6.400000e+01 : f32
    %385 = vector.broadcast %cst_118 : f32 to vector<12x1xf32>
    %386 = arith.divf %384, %385 : vector<12x1xf32>
    %387 = vector.broadcast %386 : vector<12x1xf32> to vector<12x64xf32>
    %388 = arith.subf %382, %387 : vector<12x64xf32>
    %389 = arith.mulf %388, %388 : vector<12x64xf32>
    %cst_119 = arith.constant dense<0.000000e+00> : vector<12xf32>
    %390 = vector.multi_reduction <add>, %389, %cst_119 [1] : vector<12x64xf32> to vector<12xf32>
    %391 = vector.shape_cast %390 : vector<12xf32> to vector<12x1xf32>
    %cst_120 = arith.constant 6.400000e+01 : f32
    %392 = vector.broadcast %cst_120 : f32 to vector<12x1xf32>
    %393 = arith.divf %391, %392 : vector<12x1xf32>
    %cst_121 = arith.constant 9.99999974E-6 : f32
    %394 = vector.broadcast %cst_121 : f32 to vector<12x1xf32>
    %395 = arith.addf %393, %394 : vector<12x1xf32>
    %396 = math.rsqrt %395 : vector<12x1xf32>
    %397 = vector.broadcast %396 : vector<12x1xf32> to vector<12x64xf32>
    %398 = arith.mulf %388, %397 : vector<12x64xf32>
    %399 = vector.shape_cast %43 : vector<64xf32> to vector<1x64xf32>
    %400 = vector.broadcast %399 : vector<1x64xf32> to vector<12x64xf32>
    %401 = arith.mulf %398, %400 : vector<12x64xf32>
    %402 = vector.shape_cast %44 : vector<64xf32> to vector<1x64xf32>
    %403 = vector.broadcast %402 : vector<1x64xf32> to vector<12x64xf32>
    %404 = arith.addf %401, %403 : vector<12x64xf32>
    %405 = arith.truncf %404 : vector<12x64xf32> to vector<12x64xbf16>
    %c1_122 = arith.constant 1 : index
    %c128_123 = arith.constant 128 : index
    %c0_124 = arith.constant 0 : index
    %406 = vector.load %arg3[%c1_122, %c128_123, %c0_124] : memref<2x320x192xbf16, #tpu.memory_space<vmem>>, vector<1x64x128xbf16>
    %407 = vector.shape_cast %406 : vector<1x64x128xbf16> to vector<64x128xbf16>
    %cst_125 = arith.constant dense<0.000000e+00> : vector<12x128xf32>
    %408 = tpu.matmul %405, %407, %cst_125 {dimension_numbers = #tpu.dot_dimension_numbers<[1], [0], [0], [1], [0, 0, 1, 1], [], []>} : vector<12x64xbf16>, vector<64x128xbf16>, vector<12x128xf32> -> vector<12x128xf32>
    %409 = vector.shape_cast %34 : vector<128xf32> to vector<1x128xf32>
    %410 = vector.broadcast %409 : vector<1x128xf32> to vector<12x128xf32>
    %411 = arith.addf %408, %410 : vector<12x128xf32>
    %cst_126 = arith.constant 5.000000e-01 : f32
    %412 = vector.broadcast %cst_126 : f32 to vector<12x128xf32>
    %413 = arith.mulf %412, %411 : vector<12x128xf32>
    %cst_127 = arith.constant 4.471500e-02 : f32
    %414 = vector.broadcast %cst_127 : f32 to vector<12x128xf32>
    %415 = arith.mulf %414, %411 : vector<12x128xf32>
    %416 = arith.mulf %415, %411 : vector<12x128xf32>
    %417 = arith.mulf %416, %411 : vector<12x128xf32>
    %418 = arith.addf %411, %417 : vector<12x128xf32>
    %cst_128 = arith.constant 0.797884583 : f32
    %419 = vector.broadcast %cst_128 : f32 to vector<12x128xf32>
    %420 = arith.mulf %419, %418 : vector<12x128xf32>
    %421 = math.tanh %420 : vector<12x128xf32>
    %cst_129 = arith.constant 1.000000e+00 : f32
    %422 = vector.broadcast %cst_129 : f32 to vector<12x128xf32>
    %423 = arith.addf %422, %421 : vector<12x128xf32>
    %424 = arith.mulf %413, %423 : vector<12x128xf32>
    %425 = arith.truncf %424 : vector<12x128xf32> to vector<12x128xbf16>
    %c1_130 = arith.constant 1 : index
    %c192_131 = arith.constant 192 : index
    %c0_132 = arith.constant 0 : index
    %426 = vector.load %arg3[%c1_130, %c192_131, %c0_132] : memref<2x320x192xbf16, #tpu.memory_space<vmem>>, vector<1x128x64xbf16>
    %427 = vector.shape_cast %426 : vector<1x128x64xbf16> to vector<128x64xbf16>
    %cst_133 = arith.constant dense<0.000000e+00> : vector<12x64xf32>
    %428 = tpu.matmul %425, %427, %cst_133 {dimension_numbers = #tpu.dot_dimension_numbers<[1], [0], [0], [1], [0, 0, 1, 1], [], []>} : vector<12x128xbf16>, vector<128x64xbf16>, vector<12x64xf32> -> vector<12x64xf32>
    %429 = vector.shape_cast %45 : vector<64xf32> to vector<1x64xf32>
    %430 = vector.broadcast %429 : vector<1x64xf32> to vector<12x64xf32>
    %431 = arith.addf %428, %430 : vector<12x64xf32>
    %432 = arith.addf %382, %431 : vector<12x64xf32>
    %c0_134 = arith.constant 0 : index
    %c1_135 = arith.constant 1 : index
    %c0_136 = arith.constant 0 : index
    %c0_137 = arith.constant 0 : index
    %433 = vector.load %arg5[%c0_134, %c1_135, %c0_136, %c0_137] : memref<2x3x12x64xf32, #tpu.memory_space<vmem>>, vector<1x1x12x64xf32>
    %434 = vector.shape_cast %433 : vector<1x1x12x64xf32> to vector<12x64xf32>
    %435 = vector.shape_cast %432 : vector<12x64xf32> to vector<1x1x12x64xf32>
    tpu.vector_store %arg5[%c0_134, %c1_135, %c0_136, %c0_137], %435 {strides = array<i32>} : memref<2x3x12x64xf32, #tpu.memory_space<vmem>>, vector<1x1x12x64xf32>,
    %cst_138 = arith.constant dense<0.000000e+00> : vector<12xf32>
    %436 = vector.multi_reduction <add>, %432, %cst_138 [1] : vector<12x64xf32> to vector<12xf32>
    %437 = vector.shape_cast %436 : vector<12xf32> to vector<12x1xf32>
    %cst_139 = arith.constant 6.400000e+01 : f32
    %438 = vector.broadcast %cst_139 : f32 to vector<12x1xf32>
    %439 = arith.divf %437, %438 : vector<12x1xf32>
    %440 = vector.broadcast %439 : vector<12x1xf32> to vector<12x64xf32>
    %441 = arith.subf %432, %440 : vector<12x64xf32>
    %442 = arith.mulf %441, %441 : vector<12x64xf32>
    %cst_140 = arith.constant dense<0.000000e+00> : vector<12xf32>
    %443 = vector.multi_reduction <add>, %442, %cst_140 [1] : vector<12x64xf32> to vector<12xf32>
    %444 = vector.shape_cast %443 : vector<12xf32> to vector<12x1xf32>
    %cst_141 = arith.constant 6.400000e+01 : f32
    %445 = vector.broadcast %cst_141 : f32 to vector<12x1xf32>
    %446 = arith.divf %444, %445 : vector<12x1xf32>
    %cst_142 = arith.constant 9.99999974E-6 : f32
    %447 = vector.broadcast %cst_142 : f32 to vector<12x1xf32>
    %448 = arith.addf %446, %447 : vector<12x1xf32>
    %449 = math.rsqrt %448 : vector<12x1xf32>
    %450 = vector.broadcast %449 : vector<12x1xf32> to vector<12x64xf32>
    %451 = arith.mulf %441, %450 : vector<12x64xf32>
    %452 = vector.shape_cast %2 : vector<64xf32> to vector<1x64xf32>
    %453 = vector.broadcast %452 : vector<1x64xf32> to vector<12x64xf32>
    %454 = arith.mulf %451, %453 : vector<12x64xf32>
    %455 = vector.shape_cast %3 : vector<64xf32> to vector<1x64xf32>
    %456 = vector.broadcast %455 : vector<1x64xf32> to vector<12x64xf32>
    %457 = arith.addf %454, %456 : vector<12x64xf32>
    %c0_143 = arith.constant 0 : index
    %c2_144 = arith.constant 2 : index
    %c0_145 = arith.constant 0 : index
    %c0_146 = arith.constant 0 : index
    %458 = vector.load %arg5[%c0_143, %c2_144, %c0_145, %c0_146] : memref<2x3x12x64xf32, #tpu.memory_space<vmem>>, vector<1x1x12x64xf32>
    %459 = vector.shape_cast %458 : vector<1x1x12x64xf32> to vector<12x64xf32>
    %460 = vector.shape_cast %457 : vector<12x64xf32> to vector<1x1x12x64xf32>
    tpu.vector_store %arg5[%c0_143, %c2_144, %c0_145, %c0_146], %460 {strides = array<i32>} : memref<2x3x12x64xf32, #tpu.memory_space<vmem>>, vector<1x1x12x64xf32>,
    %c1_147 = arith.constant 1 : index
    %c0_148 = arith.constant 0 : index
    %c0_149 = arith.constant 0 : index
    %461 = vector.load %arg1[%c1_147, %c0_148, %c0_149] : memref<2x12x64xf32, #tpu.memory_space<vmem>>, vector<1x12x64xf32>
    %462 = vector.shape_cast %461 : vector<1x12x64xf32> to vector<12x64xf32>
    %c1_150 = arith.constant 1 : index
    %c0_151 = arith.constant 0 : index
    %c0_152 = arith.constant 0 : index
    %463 = vector.load %arg2[%c1_150, %c0_151, %c0_152] : memref<2x12x12xf32, #tpu.memory_space<vmem>>, vector<1x12x12xf32>
    %464 = vector.shape_cast %463 : vector<1x12x12xf32> to vector<12x12xf32>
    %cst_153 = arith.constant dense<0.000000e+00> : vector<12xf32>
    %465 = vector.multi_reduction <add>, %462, %cst_153 [1] : vector<12x64xf32> to vector<12xf32>
    %466 = vector.shape_cast %465 : vector<12xf32> to vector<12x1xf32>
    %cst_154 = arith.constant 6.400000e+01 : f32
    %467 = vector.broadcast %cst_154 : f32 to vector<12x1xf32>
    %468 = arith.divf %466, %467 : vector<12x1xf32>
    %469 = vector.broadcast %468 : vector<12x1xf32> to vector<12x64xf32>
    %470 = arith.subf %462, %469 : vector<12x64xf32>
    %471 = arith.mulf %470, %470 : vector<12x64xf32>
    %cst_155 = arith.constant dense<0.000000e+00> : vector<12xf32>
    %472 = vector.multi_reduction <add>, %471, %cst_155 [1] : vector<12x64xf32> to vector<12xf32>
    %473 = vector.shape_cast %472 : vector<12xf32> to vector<12x1xf32>
    %cst_156 = arith.constant 6.400000e+01 : f32
    %474 = vector.broadcast %cst_156 : f32 to vector<12x1xf32>
    %475 = arith.divf %473, %474 : vector<12x1xf32>
    %cst_157 = arith.constant 9.99999974E-6 : f32
    %476 = vector.broadcast %cst_157 : f32 to vector<12x1xf32>
    %477 = arith.addf %475, %476 : vector<12x1xf32>
    %478 = math.rsqrt %477 : vector<12x1xf32>
    %479 = vector.broadcast %478 : vector<12x1xf32> to vector<12x64xf32>
    %480 = arith.mulf %470, %479 : vector<12x64xf32>
    %481 = vector.shape_cast %20 : vector<64xf32> to vector<1x64xf32>
    %482 = vector.broadcast %481 : vector<1x64xf32> to vector<12x64xf32>
    %483 = arith.mulf %480, %482 : vector<12x64xf32>
    %484 = vector.shape_cast %21 : vector<64xf32> to vector<1x64xf32>
    %485 = vector.broadcast %484 : vector<1x64xf32> to vector<12x64xf32>
    %486 = arith.addf %483, %485 : vector<12x64xf32>
    %487 = arith.truncf %486 : vector<12x64xf32> to vector<12x64xbf16>
    %c0_158 = arith.constant 0 : index
    %c0_159 = arith.constant 0 : index
    %c0_160 = arith.constant 0 : index
    %488 = vector.load %arg3[%c0_158, %c0_159, %c0_160] : memref<2x320x192xbf16, #tpu.memory_space<vmem>>, vector<1x64x192xbf16>
    %489 = vector.shape_cast %488 : vector<1x64x192xbf16> to vector<64x192xbf16>
    %cst_161 = arith.constant dense<0.000000e+00> : vector<12x192xf32>
    %490 = tpu.matmul %487, %489, %cst_161 {dimension_numbers = #tpu.dot_dimension_numbers<[1], [0], [0], [1], [0, 0, 1, 1], [], []>} : vector<12x64xbf16>, vector<64x192xbf16>, vector<12x192xf32> -> vector<12x192xf32>
    %491 = vector.extract_strided_slice %490 {offsets = [0, 0], sizes = [12, 64], strides = [1, 1]} : vector<12x192xf32> to vector<12x64xf32>
    %492 = vector.shape_cast %16 : vector<64xf32> to vector<1x64xf32>
    %493 = vector.broadcast %492 : vector<1x64xf32> to vector<12x64xf32>
    %494 = arith.addf %491, %493 : vector<12x64xf32>
    %495 = vector.extract_strided_slice %490 {offsets = [0, 64], sizes = [12, 64], strides = [1, 1]} : vector<12x192xf32> to vector<12x64xf32>
    %496 = vector.shape_cast %17 : vector<64xf32> to vector<1x64xf32>
    %497 = vector.broadcast %496 : vector<1x64xf32> to vector<12x64xf32>
    %498 = arith.addf %495, %497 : vector<12x64xf32>
    %499 = vector.extract_strided_slice %490 {offsets = [0, 128], sizes = [12, 64], strides = [1, 1]} : vector<12x192xf32> to vector<12x64xf32>
    %500 = vector.shape_cast %18 : vector<64xf32> to vector<1x64xf32>
    %501 = vector.broadcast %500 : vector<1x64xf32> to vector<12x64xf32>
    %502 = arith.addf %499, %501 : vector<12x64xf32>
    %503 = arith.truncf %502 : vector<12x64xf32> to vector<12x64xbf16>
    %cst_162 = arith.constant 0.000000e+00 : f32
    %504 = vector.broadcast %cst_162 : f32 to vector<12x64xf32>
    %505 = vector.extract_strided_slice %494 {offsets = [0, 0], sizes = [12, 16], strides = [1, 1]} : vector<12x64xf32> to vector<12x16xf32>
    %506 = arith.truncf %505 : vector<12x16xf32> to vector<12x16xbf16>
    %507 = vector.extract_strided_slice %498 {offsets = [0, 0], sizes = [12, 16], strides = [1, 1]} : vector<12x64xf32> to vector<12x16xf32>
    %508 = arith.truncf %507 : vector<12x16xf32> to vector<12x16xbf16>
    %509 = vector.extract_strided_slice %503 {offsets = [0, 0], sizes = [12, 16], strides = [1, 1]} : vector<12x64xbf16> to vector<12x16xbf16>
    %cst_163 = arith.constant dense<0.000000e+00> : vector<12x12xf32>
    %510 = tpu.matmul %506, %508, %cst_163 {dimension_numbers = #tpu.dot_dimension_numbers<[1], [1], [0], [0], [0, 0, 1, 0], [], []>} : vector<12x16xbf16>, vector<12x16xbf16>, vector<12x12xf32> -> vector<12x12xf32>
    %511 = arith.addf %510, %464 : vector<12x12xf32>
    %cst_164 = arith.constant dense<0xFF800000> : vector<12xf32>
    %512 = vector.multi_reduction <maximumf>, %511, %cst_164 [1] : vector<12x12xf32> to vector<12xf32>
    %513 = vector.shape_cast %512 : vector<12xf32> to vector<12x1xf32>
    %514 = vector.broadcast %513 : vector<12x1xf32> to vector<12x12xf32>
    %515 = arith.subf %511, %514 : vector<12x12xf32>
    %516 = math.exp %515 : vector<12x12xf32>
    %cst_165 = arith.constant dense<0.000000e+00> : vector<12xf32>
    %517 = vector.multi_reduction <add>, %516, %cst_165 [1] : vector<12x12xf32> to vector<12xf32>
    %518 = vector.shape_cast %517 : vector<12xf32> to vector<12x1xf32>
    %519 = tpu.reciprocal %518 {approx = true} : vector<12x1xf32> -> vector<12x1xf32>
    %520 = vector.broadcast %519 : vector<12x1xf32> to vector<12x12xf32>
    %521 = arith.mulf %516, %520 : vector<12x12xf32>
    %522 = arith.truncf %521 : vector<12x12xf32> to vector<12x12xbf16>
    %cst_166 = arith.constant dense<0.000000e+00> : vector<12x16xf32>
    %523 = tpu.matmul %522, %509, %cst_166 {dimension_numbers = #tpu.dot_dimension_numbers<[1], [0], [0], [1], [0, 0, 1, 1], [], []>} : vector<12x12xbf16>, vector<12x16xbf16>, vector<12x16xf32> -> vector<12x16xf32>
    %c0_167 = arith.constant 0 : index
    %c64_168 = arith.constant 64 : index
    %c0_169 = arith.constant 0 : index
    %524 = vector.load %arg3[%c0_167, %c64_168, %c0_169] : memref<2x320x192xbf16, #tpu.memory_space<vmem>>, vector<1x16x64xbf16>
    %525 = vector.shape_cast %524 : vector<1x16x64xbf16> to vector<16x64xbf16>
    %526 = arith.truncf %523 : vector<12x16xf32> to vector<12x16xbf16>
    %cst_170 = arith.constant dense<0.000000e+00> : vector<12x64xf32>
    %527 = tpu.matmul %526, %525, %cst_170 {dimension_numbers = #tpu.dot_dimension_numbers<[1], [0], [0], [1], [0, 0, 1, 1], [], []>} : vector<12x16xbf16>, vector<16x64xbf16>, vector<12x64xf32> -> vector<12x64xf32>
    %528 = arith.addf %504, %527 : vector<12x64xf32>
    %529 = vector.extract_strided_slice %494 {offsets = [0, 16], sizes = [12, 16], strides = [1, 1]} : vector<12x64xf32> to vector<12x16xf32>
    %530 = arith.truncf %529 : vector<12x16xf32> to vector<12x16xbf16>
    %531 = vector.extract_strided_slice %498 {offsets = [0, 16], sizes = [12, 16], strides = [1, 1]} : vector<12x64xf32> to vector<12x16xf32>
    %532 = arith.truncf %531 : vector<12x16xf32> to vector<12x16xbf16>
    %533 = vector.extract_strided_slice %503 {offsets = [0, 16], sizes = [12, 16], strides = [1, 1]} : vector<12x64xbf16> to vector<12x16xbf16>
    %cst_171 = arith.constant dense<0.000000e+00> : vector<12x12xf32>
    %534 = tpu.matmul %530, %532, %cst_171 {dimension_numbers = #tpu.dot_dimension_numbers<[1], [1], [0], [0], [0, 0, 1, 0], [], []>} : vector<12x16xbf16>, vector<12x16xbf16>, vector<12x12xf32> -> vector<12x12xf32>
    %535 = arith.addf %534, %464 : vector<12x12xf32>
    %cst_172 = arith.constant dense<0xFF800000> : vector<12xf32>
    %536 = vector.multi_reduction <maximumf>, %535, %cst_172 [1] : vector<12x12xf32> to vector<12xf32>
    %537 = vector.shape_cast %536 : vector<12xf32> to vector<12x1xf32>
    %538 = vector.broadcast %537 : vector<12x1xf32> to vector<12x12xf32>
    %539 = arith.subf %535, %538 : vector<12x12xf32>
    %540 = math.exp %539 : vector<12x12xf32>
    %cst_173 = arith.constant dense<0.000000e+00> : vector<12xf32>
    %541 = vector.multi_reduction <add>, %540, %cst_173 [1] : vector<12x12xf32> to vector<12xf32>
    %542 = vector.shape_cast %541 : vector<12xf32> to vector<12x1xf32>
    %543 = tpu.reciprocal %542 {approx = true} : vector<12x1xf32> -> vector<12x1xf32>
    %544 = vector.broadcast %543 : vector<12x1xf32> to vector<12x12xf32>
    %545 = arith.mulf %540, %544 : vector<12x12xf32>
    %546 = arith.truncf %545 : vector<12x12xf32> to vector<12x12xbf16>
    %cst_174 = arith.constant dense<0.000000e+00> : vector<12x16xf32>
    %547 = tpu.matmul %546, %533, %cst_174 {dimension_numbers = #tpu.dot_dimension_numbers<[1], [0], [0], [1], [0, 0, 1, 1], [], []>} : vector<12x12xbf16>, vector<12x16xbf16>, vector<12x16xf32> -> vector<12x16xf32>
    %c0_175 = arith.constant 0 : index
    %c80_176 = arith.constant 80 : index
    %c0_177 = arith.constant 0 : index
    %548 = vector.load %arg3[%c0_175, %c80_176, %c0_177] : memref<2x320x192xbf16, #tpu.memory_space<vmem>>, vector<1x16x64xbf16>
    %549 = vector.shape_cast %548 : vector<1x16x64xbf16> to vector<16x64xbf16>
    %550 = arith.truncf %547 : vector<12x16xf32> to vector<12x16xbf16>
    %cst_178 = arith.constant dense<0.000000e+00> : vector<12x64xf32>
    %551 = tpu.matmul %550, %549, %cst_178 {dimension_numbers = #tpu.dot_dimension_numbers<[1], [0], [0], [1], [0, 0, 1, 1], [], []>} : vector<12x16xbf16>, vector<16x64xbf16>, vector<12x64xf32> -> vector<12x64xf32>
    %552 = arith.addf %528, %551 : vector<12x64xf32>
    %553 = vector.extract_strided_slice %494 {offsets = [0, 32], sizes = [12, 16], strides = [1, 1]} : vector<12x64xf32> to vector<12x16xf32>
    %554 = arith.truncf %553 : vector<12x16xf32> to vector<12x16xbf16>
    %555 = vector.extract_strided_slice %498 {offsets = [0, 32], sizes = [12, 16], strides = [1, 1]} : vector<12x64xf32> to vector<12x16xf32>
    %556 = arith.truncf %555 : vector<12x16xf32> to vector<12x16xbf16>
    %557 = vector.extract_strided_slice %503 {offsets = [0, 32], sizes = [12, 16], strides = [1, 1]} : vector<12x64xbf16> to vector<12x16xbf16>
    %cst_179 = arith.constant dense<0.000000e+00> : vector<12x12xf32>
    %558 = tpu.matmul %554, %556, %cst_179 {dimension_numbers = #tpu.dot_dimension_numbers<[1], [1], [0], [0], [0, 0, 1, 0], [], []>} : vector<12x16xbf16>, vector<12x16xbf16>, vector<12x12xf32> -> vector<12x12xf32>
    %559 = arith.addf %558, %464 : vector<12x12xf32>
    %cst_180 = arith.constant dense<0xFF800000> : vector<12xf32>
    %560 = vector.multi_reduction <maximumf>, %559, %cst_180 [1] : vector<12x12xf32> to vector<12xf32>
    %561 = vector.shape_cast %560 : vector<12xf32> to vector<12x1xf32>
    %562 = vector.broadcast %561 : vector<12x1xf32> to vector<12x12xf32>
    %563 = arith.subf %559, %562 : vector<12x12xf32>
    %564 = math.exp %563 : vector<12x12xf32>
    %cst_181 = arith.constant dense<0.000000e+00> : vector<12xf32>
    %565 = vector.multi_reduction <add>, %564, %cst_181 [1] : vector<12x12xf32> to vector<12xf32>
    %566 = vector.shape_cast %565 : vector<12xf32> to vector<12x1xf32>
    %567 = tpu.reciprocal %566 {approx = true} : vector<12x1xf32> -> vector<12x1xf32>
    %568 = vector.broadcast %567 : vector<12x1xf32> to vector<12x12xf32>
    %569 = arith.mulf %564, %568 : vector<12x12xf32>
    %570 = arith.truncf %569 : vector<12x12xf32> to vector<12x12xbf16>
    %cst_182 = arith.constant dense<0.000000e+00> : vector<12x16xf32>
    %571 = tpu.matmul %570, %557, %cst_182 {dimension_numbers = #tpu.dot_dimension_numbers<[1], [0], [0], [1], [0, 0, 1, 1], [], []>} : vector<12x12xbf16>, vector<12x16xbf16>, vector<12x16xf32> -> vector<12x16xf32>
    %c0_183 = arith.constant 0 : index
    %c96_184 = arith.constant 96 : index
    %c0_185 = arith.constant 0 : index
    %572 = vector.load %arg3[%c0_183, %c96_184, %c0_185] : memref<2x320x192xbf16, #tpu.memory_space<vmem>>, vector<1x16x64xbf16>
    %573 = vector.shape_cast %572 : vector<1x16x64xbf16> to vector<16x64xbf16>
    %574 = arith.truncf %571 : vector<12x16xf32> to vector<12x16xbf16>
    %cst_186 = arith.constant dense<0.000000e+00> : vector<12x64xf32>
    %575 = tpu.matmul %574, %573, %cst_186 {dimension_numbers = #tpu.dot_dimension_numbers<[1], [0], [0], [1], [0, 0, 1, 1], [], []>} : vector<12x16xbf16>, vector<16x64xbf16>, vector<12x64xf32> -> vector<12x64xf32>
    %576 = arith.addf %552, %575 : vector<12x64xf32>
    %577 = vector.extract_strided_slice %494 {offsets = [0, 48], sizes = [12, 16], strides = [1, 1]} : vector<12x64xf32> to vector<12x16xf32>
    %578 = arith.truncf %577 : vector<12x16xf32> to vector<12x16xbf16>
    %579 = vector.extract_strided_slice %498 {offsets = [0, 48], sizes = [12, 16], strides = [1, 1]} : vector<12x64xf32> to vector<12x16xf32>
    %580 = arith.truncf %579 : vector<12x16xf32> to vector<12x16xbf16>
    %581 = vector.extract_strided_slice %503 {offsets = [0, 48], sizes = [12, 16], strides = [1, 1]} : vector<12x64xbf16> to vector<12x16xbf16>
    %cst_187 = arith.constant dense<0.000000e+00> : vector<12x12xf32>
    %582 = tpu.matmul %578, %580, %cst_187 {dimension_numbers = #tpu.dot_dimension_numbers<[1], [1], [0], [0], [0, 0, 1, 0], [], []>} : vector<12x16xbf16>, vector<12x16xbf16>, vector<12x12xf32> -> vector<12x12xf32>
    %583 = arith.addf %582, %464 : vector<12x12xf32>
    %cst_188 = arith.constant dense<0xFF800000> : vector<12xf32>
    %584 = vector.multi_reduction <maximumf>, %583, %cst_188 [1] : vector<12x12xf32> to vector<12xf32>
    %585 = vector.shape_cast %584 : vector<12xf32> to vector<12x1xf32>
    %586 = vector.broadcast %585 : vector<12x1xf32> to vector<12x12xf32>
    %587 = arith.subf %583, %586 : vector<12x12xf32>
    %588 = math.exp %587 : vector<12x12xf32>
    %cst_189 = arith.constant dense<0.000000e+00> : vector<12xf32>
    %589 = vector.multi_reduction <add>, %588, %cst_189 [1] : vector<12x12xf32> to vector<12xf32>
    %590 = vector.shape_cast %589 : vector<12xf32> to vector<12x1xf32>
    %591 = tpu.reciprocal %590 {approx = true} : vector<12x1xf32> -> vector<12x1xf32>
    %592 = vector.broadcast %591 : vector<12x1xf32> to vector<12x12xf32>
    %593 = arith.mulf %588, %592 : vector<12x12xf32>
    %594 = arith.truncf %593 : vector<12x12xf32> to vector<12x12xbf16>
    %cst_190 = arith.constant dense<0.000000e+00> : vector<12x16xf32>
    %595 = tpu.matmul %594, %581, %cst_190 {dimension_numbers = #tpu.dot_dimension_numbers<[1], [0], [0], [1], [0, 0, 1, 1], [], []>} : vector<12x12xbf16>, vector<12x16xbf16>, vector<12x16xf32> -> vector<12x16xf32>
    %c0_191 = arith.constant 0 : index
    %c112_192 = arith.constant 112 : index
    %c0_193 = arith.constant 0 : index
    %596 = vector.load %arg3[%c0_191, %c112_192, %c0_193] : memref<2x320x192xbf16, #tpu.memory_space<vmem>>, vector<1x16x64xbf16>
    %597 = vector.shape_cast %596 : vector<1x16x64xbf16> to vector<16x64xbf16>
    %598 = arith.truncf %595 : vector<12x16xf32> to vector<12x16xbf16>
    %cst_194 = arith.constant dense<0.000000e+00> : vector<12x64xf32>
    %599 = tpu.matmul %598, %597, %cst_194 {dimension_numbers = #tpu.dot_dimension_numbers<[1], [0], [0], [1], [0, 0, 1, 1], [], []>} : vector<12x16xbf16>, vector<16x64xbf16>, vector<12x64xf32> -> vector<12x64xf32>
    %600 = arith.addf %576, %599 : vector<12x64xf32>
    %601 = arith.addf %462, %600 : vector<12x64xf32>
    %602 = vector.shape_cast %19 : vector<64xf32> to vector<1x64xf32>
    %603 = vector.broadcast %602 : vector<1x64xf32> to vector<12x64xf32>
    %604 = arith.addf %601, %603 : vector<12x64xf32>
    %cst_195 = arith.constant dense<0.000000e+00> : vector<12xf32>
    %605 = vector.multi_reduction <add>, %604, %cst_195 [1] : vector<12x64xf32> to vector<12xf32>
    %606 = vector.shape_cast %605 : vector<12xf32> to vector<12x1xf32>
    %cst_196 = arith.constant 6.400000e+01 : f32
    %607 = vector.broadcast %cst_196 : f32 to vector<12x1xf32>
    %608 = arith.divf %606, %607 : vector<12x1xf32>
    %609 = vector.broadcast %608 : vector<12x1xf32> to vector<12x64xf32>
    %610 = arith.subf %604, %609 : vector<12x64xf32>
    %611 = arith.mulf %610, %610 : vector<12x64xf32>
    %cst_197 = arith.constant dense<0.000000e+00> : vector<12xf32>
    %612 = vector.multi_reduction <add>, %611, %cst_197 [1] : vector<12x64xf32> to vector<12xf32>
    %613 = vector.shape_cast %612 : vector<12xf32> to vector<12x1xf32>
    %cst_198 = arith.constant 6.400000e+01 : f32
    %614 = vector.broadcast %cst_198 : f32 to vector<12x1xf32>
    %615 = arith.divf %613, %614 : vector<12x1xf32>
    %cst_199 = arith.constant 9.99999974E-6 : f32
    %616 = vector.broadcast %cst_199 : f32 to vector<12x1xf32>
    %617 = arith.addf %615, %616 : vector<12x1xf32>
    %618 = math.rsqrt %617 : vector<12x1xf32>
    %619 = vector.broadcast %618 : vector<12x1xf32> to vector<12x64xf32>
    %620 = arith.mulf %610, %619 : vector<12x64xf32>
    %621 = vector.shape_cast %22 : vector<64xf32> to vector<1x64xf32>
    %622 = vector.broadcast %621 : vector<1x64xf32> to vector<12x64xf32>
    %623 = arith.mulf %620, %622 : vector<12x64xf32>
    %624 = vector.shape_cast %23 : vector<64xf32> to vector<1x64xf32>
    %625 = vector.broadcast %624 : vector<1x64xf32> to vector<12x64xf32>
    %626 = arith.addf %623, %625 : vector<12x64xf32>
    %627 = arith.truncf %626 : vector<12x64xf32> to vector<12x64xbf16>
    %c0_200 = arith.constant 0 : index
    %c128_201 = arith.constant 128 : index
    %c0_202 = arith.constant 0 : index
    %628 = vector.load %arg3[%c0_200, %c128_201, %c0_202] : memref<2x320x192xbf16, #tpu.memory_space<vmem>>, vector<1x64x128xbf16>
    %629 = vector.shape_cast %628 : vector<1x64x128xbf16> to vector<64x128xbf16>
    %cst_203 = arith.constant dense<0.000000e+00> : vector<12x128xf32>
    %630 = tpu.matmul %627, %629, %cst_203 {dimension_numbers = #tpu.dot_dimension_numbers<[1], [0], [0], [1], [0, 0, 1, 1], [], []>} : vector<12x64xbf16>, vector<64x128xbf16>, vector<12x128xf32> -> vector<12x128xf32>
    %631 = vector.shape_cast %13 : vector<128xf32> to vector<1x128xf32>
    %632 = vector.broadcast %631 : vector<1x128xf32> to vector<12x128xf32>
    %633 = arith.addf %630, %632 : vector<12x128xf32>
    %cst_204 = arith.constant 5.000000e-01 : f32
    %634 = vector.broadcast %cst_204 : f32 to vector<12x128xf32>
    %635 = arith.mulf %634, %633 : vector<12x128xf32>
    %cst_205 = arith.constant 4.471500e-02 : f32
    %636 = vector.broadcast %cst_205 : f32 to vector<12x128xf32>
    %637 = arith.mulf %636, %633 : vector<12x128xf32>
    %638 = arith.mulf %637, %633 : vector<12x128xf32>
    %639 = arith.mulf %638, %633 : vector<12x128xf32>
    %640 = arith.addf %633, %639 : vector<12x128xf32>
    %cst_206 = arith.constant 0.797884583 : f32
    %641 = vector.broadcast %cst_206 : f32 to vector<12x128xf32>
    %642 = arith.mulf %641, %640 : vector<12x128xf32>
    %643 = math.tanh %642 : vector<12x128xf32>
    %cst_207 = arith.constant 1.000000e+00 : f32
    %644 = vector.broadcast %cst_207 : f32 to vector<12x128xf32>
    %645 = arith.addf %644, %643 : vector<12x128xf32>
    %646 = arith.mulf %635, %645 : vector<12x128xf32>
    %647 = arith.truncf %646 : vector<12x128xf32> to vector<12x128xbf16>
    %c0_208 = arith.constant 0 : index
    %c192_209 = arith.constant 192 : index
    %c0_210 = arith.constant 0 : index
    %648 = vector.load %arg3[%c0_208, %c192_209, %c0_210] : memref<2x320x192xbf16, #tpu.memory_space<vmem>>, vector<1x128x64xbf16>
    %649 = vector.shape_cast %648 : vector<1x128x64xbf16> to vector<128x64xbf16>
    %cst_211 = arith.constant dense<0.000000e+00> : vector<12x64xf32>
    %650 = tpu.matmul %647, %649, %cst_211 {dimension_numbers = #tpu.dot_dimension_numbers<[1], [0], [0], [1], [0, 0, 1, 1], [], []>} : vector<12x128xbf16>, vector<128x64xbf16>, vector<12x64xf32> -> vector<12x64xf32>
    %651 = vector.shape_cast %24 : vector<64xf32> to vector<1x64xf32>
    %652 = vector.broadcast %651 : vector<1x64xf32> to vector<12x64xf32>
    %653 = arith.addf %650, %652 : vector<12x64xf32>
    %654 = arith.addf %604, %653 : vector<12x64xf32>
    %c1_212 = arith.constant 1 : index
    %c0_213 = arith.constant 0 : index
    %c0_214 = arith.constant 0 : index
    %c0_215 = arith.constant 0 : index
    %655 = vector.load %arg5[%c1_212, %c0_213, %c0_214, %c0_215] : memref<2x3x12x64xf32, #tpu.memory_space<vmem>>, vector<1x1x12x64xf32>
    %656 = vector.shape_cast %655 : vector<1x1x12x64xf32> to vector<12x64xf32>
    %657 = vector.shape_cast %654 : vector<12x64xf32> to vector<1x1x12x64xf32>
    tpu.vector_store %arg5[%c1_212, %c0_213, %c0_214, %c0_215], %657 {strides = array<i32>} : memref<2x3x12x64xf32, #tpu.memory_space<vmem>>, vector<1x1x12x64xf32>,
    %cst_216 = arith.constant dense<0.000000e+00> : vector<12xf32>
    %658 = vector.multi_reduction <add>, %654, %cst_216 [1] : vector<12x64xf32> to vector<12xf32>
    %659 = vector.shape_cast %658 : vector<12xf32> to vector<12x1xf32>
    %cst_217 = arith.constant 6.400000e+01 : f32
    %660 = vector.broadcast %cst_217 : f32 to vector<12x1xf32>
    %661 = arith.divf %659, %660 : vector<12x1xf32>
    %662 = vector.broadcast %661 : vector<12x1xf32> to vector<12x64xf32>
    %663 = arith.subf %654, %662 : vector<12x64xf32>
    %664 = arith.mulf %663, %663 : vector<12x64xf32>
    %cst_218 = arith.constant dense<0.000000e+00> : vector<12xf32>
    %665 = vector.multi_reduction <add>, %664, %cst_218 [1] : vector<12x64xf32> to vector<12xf32>
    %666 = vector.shape_cast %665 : vector<12xf32> to vector<12x1xf32>
    %cst_219 = arith.constant 6.400000e+01 : f32
    %667 = vector.broadcast %cst_219 : f32 to vector<12x1xf32>
    %668 = arith.divf %666, %667 : vector<12x1xf32>
    %cst_220 = arith.constant 9.99999974E-6 : f32
    %669 = vector.broadcast %cst_220 : f32 to vector<12x1xf32>
    %670 = arith.addf %668, %669 : vector<12x1xf32>
    %671 = math.rsqrt %670 : vector<12x1xf32>
    %672 = vector.broadcast %671 : vector<12x1xf32> to vector<12x64xf32>
    %673 = arith.mulf %663, %672 : vector<12x64xf32>
    %674 = vector.shape_cast %41 : vector<64xf32> to vector<1x64xf32>
    %675 = vector.broadcast %674 : vector<1x64xf32> to vector<12x64xf32>
    %676 = arith.mulf %673, %675 : vector<12x64xf32>
    %677 = vector.shape_cast %42 : vector<64xf32> to vector<1x64xf32>
    %678 = vector.broadcast %677 : vector<1x64xf32> to vector<12x64xf32>
    %679 = arith.addf %676, %678 : vector<12x64xf32>
    %680 = arith.truncf %679 : vector<12x64xf32> to vector<12x64xbf16>
    %c1_221 = arith.constant 1 : index
    %c0_222 = arith.constant 0 : index
    %c0_223 = arith.constant 0 : index
    %681 = vector.load %arg3[%c1_221, %c0_222, %c0_223] : memref<2x320x192xbf16, #tpu.memory_space<vmem>>, vector<1x64x192xbf16>
    %682 = vector.shape_cast %681 : vector<1x64x192xbf16> to vector<64x192xbf16>
    %cst_224 = arith.constant dense<0.000000e+00> : vector<12x192xf32>
    %683 = tpu.matmul %680, %682, %cst_224 {dimension_numbers = #tpu.dot_dimension_numbers<[1], [0], [0], [1], [0, 0, 1, 1], [], []>} : vector<12x64xbf16>, vector<64x192xbf16>, vector<12x192xf32> -> vector<12x192xf32>
    %684 = vector.extract_strided_slice %683 {offsets = [0, 0], sizes = [12, 64], strides = [1, 1]} : vector<12x192xf32> to vector<12x64xf32>
    %685 = vector.shape_cast %37 : vector<64xf32> to vector<1x64xf32>
    %686 = vector.broadcast %685 : vector<1x64xf32> to vector<12x64xf32>
    %687 = arith.addf %684, %686 : vector<12x64xf32>
    %688 = vector.extract_strided_slice %683 {offsets = [0, 64], sizes = [12, 64], strides = [1, 1]} : vector<12x192xf32> to vector<12x64xf32>
    %689 = vector.shape_cast %38 : vector<64xf32> to vector<1x64xf32>
    %690 = vector.broadcast %689 : vector<1x64xf32> to vector<12x64xf32>
    %691 = arith.addf %688, %690 : vector<12x64xf32>
    %692 = vector.extract_strided_slice %683 {offsets = [0, 128], sizes = [12, 64], strides = [1, 1]} : vector<12x192xf32> to vector<12x64xf32>
    %693 = vector.shape_cast %39 : vector<64xf32> to vector<1x64xf32>
    %694 = vector.broadcast %693 : vector<1x64xf32> to vector<12x64xf32>
    %695 = arith.addf %692, %694 : vector<12x64xf32>
    %696 = arith.truncf %695 : vector<12x64xf32> to vector<12x64xbf16>
    %cst_225 = arith.constant 0.000000e+00 : f32
    %697 = vector.broadcast %cst_225 : f32 to vector<12x64xf32>
    %698 = vector.extract_strided_slice %687 {offsets = [0, 0], sizes = [12, 16], strides = [1, 1]} : vector<12x64xf32> to vector<12x16xf32>
    %699 = arith.truncf %698 : vector<12x16xf32> to vector<12x16xbf16>
    %700 = vector.extract_strided_slice %691 {offsets = [0, 0], sizes = [12, 16], strides = [1, 1]} : vector<12x64xf32> to vector<12x16xf32>
    %701 = arith.truncf %700 : vector<12x16xf32> to vector<12x16xbf16>
    %702 = vector.extract_strided_slice %696 {offsets = [0, 0], sizes = [12, 16], strides = [1, 1]} : vector<12x64xbf16> to vector<12x16xbf16>
    %cst_226 = arith.constant dense<0.000000e+00> : vector<12x12xf32>
    %703 = tpu.matmul %699, %701, %cst_226 {dimension_numbers = #tpu.dot_dimension_numbers<[1], [1], [0], [0], [0, 0, 1, 0], [], []>} : vector<12x16xbf16>, vector<12x16xbf16>, vector<12x12xf32> -> vector<12x12xf32>
    %704 = arith.addf %703, %464 : vector<12x12xf32>
    %cst_227 = arith.constant dense<0xFF800000> : vector<12xf32>
    %705 = vector.multi_reduction <maximumf>, %704, %cst_227 [1] : vector<12x12xf32> to vector<12xf32>
    %706 = vector.shape_cast %705 : vector<12xf32> to vector<12x1xf32>
    %707 = vector.broadcast %706 : vector<12x1xf32> to vector<12x12xf32>
    %708 = arith.subf %704, %707 : vector<12x12xf32>
    %709 = math.exp %708 : vector<12x12xf32>
    %cst_228 = arith.constant dense<0.000000e+00> : vector<12xf32>
    %710 = vector.multi_reduction <add>, %709, %cst_228 [1] : vector<12x12xf32> to vector<12xf32>
    %711 = vector.shape_cast %710 : vector<12xf32> to vector<12x1xf32>
    %712 = tpu.reciprocal %711 {approx = true} : vector<12x1xf32> -> vector<12x1xf32>
    %713 = vector.broadcast %712 : vector<12x1xf32> to vector<12x12xf32>
    %714 = arith.mulf %709, %713 : vector<12x12xf32>
    %715 = arith.truncf %714 : vector<12x12xf32> to vector<12x12xbf16>
    %cst_229 = arith.constant dense<0.000000e+00> : vector<12x16xf32>
    %716 = tpu.matmul %715, %702, %cst_229 {dimension_numbers = #tpu.dot_dimension_numbers<[1], [0], [0], [1], [0, 0, 1, 1], [], []>} : vector<12x12xbf16>, vector<12x16xbf16>, vector<12x16xf32> -> vector<12x16xf32>
    %c1_230 = arith.constant 1 : index
    %c64_231 = arith.constant 64 : index
    %c0_232 = arith.constant 0 : index
    %717 = vector.load %arg3[%c1_230, %c64_231, %c0_232] : memref<2x320x192xbf16, #tpu.memory_space<vmem>>, vector<1x16x64xbf16>
    %718 = vector.shape_cast %717 : vector<1x16x64xbf16> to vector<16x64xbf16>
    %719 = arith.truncf %716 : vector<12x16xf32> to vector<12x16xbf16>
    %cst_233 = arith.constant dense<0.000000e+00> : vector<12x64xf32>
    %720 = tpu.matmul %719, %718, %cst_233 {dimension_numbers = #tpu.dot_dimension_numbers<[1], [0], [0], [1], [0, 0, 1, 1], [], []>} : vector<12x16xbf16>, vector<16x64xbf16>, vector<12x64xf32> -> vector<12x64xf32>
    %721 = arith.addf %697, %720 : vector<12x64xf32>
    %722 = vector.extract_strided_slice %687 {offsets = [0, 16], sizes = [12, 16], strides = [1, 1]} : vector<12x64xf32> to vector<12x16xf32>
    %723 = arith.truncf %722 : vector<12x16xf32> to vector<12x16xbf16>
    %724 = vector.extract_strided_slice %691 {offsets = [0, 16], sizes = [12, 16], strides = [1, 1]} : vector<12x64xf32> to vector<12x16xf32>
    %725 = arith.truncf %724 : vector<12x16xf32> to vector<12x16xbf16>
    %726 = vector.extract_strided_slice %696 {offsets = [0, 16], sizes = [12, 16], strides = [1, 1]} : vector<12x64xbf16> to vector<12x16xbf16>
    %cst_234 = arith.constant dense<0.000000e+00> : vector<12x12xf32>
    %727 = tpu.matmul %723, %725, %cst_234 {dimension_numbers = #tpu.dot_dimension_numbers<[1], [1], [0], [0], [0, 0, 1, 0], [], []>} : vector<12x16xbf16>, vector<12x16xbf16>, vector<12x12xf32> -> vector<12x12xf32>
    %728 = arith.addf %727, %464 : vector<12x12xf32>
    %cst_235 = arith.constant dense<0xFF800000> : vector<12xf32>
    %729 = vector.multi_reduction <maximumf>, %728, %cst_235 [1] : vector<12x12xf32> to vector<12xf32>
    %730 = vector.shape_cast %729 : vector<12xf32> to vector<12x1xf32>
    %731 = vector.broadcast %730 : vector<12x1xf32> to vector<12x12xf32>
    %732 = arith.subf %728, %731 : vector<12x12xf32>
    %733 = math.exp %732 : vector<12x12xf32>
    %cst_236 = arith.constant dense<0.000000e+00> : vector<12xf32>
    %734 = vector.multi_reduction <add>, %733, %cst_236 [1] : vector<12x12xf32> to vector<12xf32>
    %735 = vector.shape_cast %734 : vector<12xf32> to vector<12x1xf32>
    %736 = tpu.reciprocal %735 {approx = true} : vector<12x1xf32> -> vector<12x1xf32>
    %737 = vector.broadcast %736 : vector<12x1xf32> to vector<12x12xf32>
    %738 = arith.mulf %733, %737 : vector<12x12xf32>
    %739 = arith.truncf %738 : vector<12x12xf32> to vector<12x12xbf16>
    %cst_237 = arith.constant dense<0.000000e+00> : vector<12x16xf32>
    %740 = tpu.matmul %739, %726, %cst_237 {dimension_numbers = #tpu.dot_dimension_numbers<[1], [0], [0], [1], [0, 0, 1, 1], [], []>} : vector<12x12xbf16>, vector<12x16xbf16>, vector<12x16xf32> -> vector<12x16xf32>
    %c1_238 = arith.constant 1 : index
    %c80_239 = arith.constant 80 : index
    %c0_240 = arith.constant 0 : index
    %741 = vector.load %arg3[%c1_238, %c80_239, %c0_240] : memref<2x320x192xbf16, #tpu.memory_space<vmem>>, vector<1x16x64xbf16>
    %742 = vector.shape_cast %741 : vector<1x16x64xbf16> to vector<16x64xbf16>
    %743 = arith.truncf %740 : vector<12x16xf32> to vector<12x16xbf16>
    %cst_241 = arith.constant dense<0.000000e+00> : vector<12x64xf32>
    %744 = tpu.matmul %743, %742, %cst_241 {dimension_numbers = #tpu.dot_dimension_numbers<[1], [0], [0], [1], [0, 0, 1, 1], [], []>} : vector<12x16xbf16>, vector<16x64xbf16>, vector<12x64xf32> -> vector<12x64xf32>
    %745 = arith.addf %721, %744 : vector<12x64xf32>
    %746 = vector.extract_strided_slice %687 {offsets = [0, 32], sizes = [12, 16], strides = [1, 1]} : vector<12x64xf32> to vector<12x16xf32>
    %747 = arith.truncf %746 : vector<12x16xf32> to vector<12x16xbf16>
    %748 = vector.extract_strided_slice %691 {offsets = [0, 32], sizes = [12, 16], strides = [1, 1]} : vector<12x64xf32> to vector<12x16xf32>
    %749 = arith.truncf %748 : vector<12x16xf32> to vector<12x16xbf16>
    %750 = vector.extract_strided_slice %696 {offsets = [0, 32], sizes = [12, 16], strides = [1, 1]} : vector<12x64xbf16> to vector<12x16xbf16>
    %cst_242 = arith.constant dense<0.000000e+00> : vector<12x12xf32>
    %751 = tpu.matmul %747, %749, %cst_242 {dimension_numbers = #tpu.dot_dimension_numbers<[1], [1], [0], [0], [0, 0, 1, 0], [], []>} : vector<12x16xbf16>, vector<12x16xbf16>, vector<12x12xf32> -> vector<12x12xf32>
    %752 = arith.addf %751, %464 : vector<12x12xf32>
    %cst_243 = arith.constant dense<0xFF800000> : vector<12xf32>
    %753 = vector.multi_reduction <maximumf>, %752, %cst_243 [1] : vector<12x12xf32> to vector<12xf32>
    %754 = vector.shape_cast %753 : vector<12xf32> to vector<12x1xf32>
    %755 = vector.broadcast %754 : vector<12x1xf32> to vector<12x12xf32>
    %756 = arith.subf %752, %755 : vector<12x12xf32>
    %757 = math.exp %756 : vector<12x12xf32>
    %cst_244 = arith.constant dense<0.000000e+00> : vector<12xf32>
    %758 = vector.multi_reduction <add>, %757, %cst_244 [1] : vector<12x12xf32> to vector<12xf32>
    %759 = vector.shape_cast %758 : vector<12xf32> to vector<12x1xf32>
    %760 = tpu.reciprocal %759 {approx = true} : vector<12x1xf32> -> vector<12x1xf32>
    %761 = vector.broadcast %760 : vector<12x1xf32> to vector<12x12xf32>
    %762 = arith.mulf %757, %761 : vector<12x12xf32>
    %763 = arith.truncf %762 : vector<12x12xf32> to vector<12x12xbf16>
    %cst_245 = arith.constant dense<0.000000e+00> : vector<12x16xf32>
    %764 = tpu.matmul %763, %750, %cst_245 {dimension_numbers = #tpu.dot_dimension_numbers<[1], [0], [0], [1], [0, 0, 1, 1], [], []>} : vector<12x12xbf16>, vector<12x16xbf16>, vector<12x16xf32> -> vector<12x16xf32>
    %c1_246 = arith.constant 1 : index
    %c96_247 = arith.constant 96 : index
    %c0_248 = arith.constant 0 : index
    %765 = vector.load %arg3[%c1_246, %c96_247, %c0_248] : memref<2x320x192xbf16, #tpu.memory_space<vmem>>, vector<1x16x64xbf16>
    %766 = vector.shape_cast %765 : vector<1x16x64xbf16> to vector<16x64xbf16>
    %767 = arith.truncf %764 : vector<12x16xf32> to vector<12x16xbf16>
    %cst_249 = arith.constant dense<0.000000e+00> : vector<12x64xf32>
    %768 = tpu.matmul %767, %766, %cst_249 {dimension_numbers = #tpu.dot_dimension_numbers<[1], [0], [0], [1], [0, 0, 1, 1], [], []>} : vector<12x16xbf16>, vector<16x64xbf16>, vector<12x64xf32> -> vector<12x64xf32>
    %769 = arith.addf %745, %768 : vector<12x64xf32>
    %770 = vector.extract_strided_slice %687 {offsets = [0, 48], sizes = [12, 16], strides = [1, 1]} : vector<12x64xf32> to vector<12x16xf32>
    %771 = arith.truncf %770 : vector<12x16xf32> to vector<12x16xbf16>
    %772 = vector.extract_strided_slice %691 {offsets = [0, 48], sizes = [12, 16], strides = [1, 1]} : vector<12x64xf32> to vector<12x16xf32>
    %773 = arith.truncf %772 : vector<12x16xf32> to vector<12x16xbf16>
    %774 = vector.extract_strided_slice %696 {offsets = [0, 48], sizes = [12, 16], strides = [1, 1]} : vector<12x64xbf16> to vector<12x16xbf16>
    %cst_250 = arith.constant dense<0.000000e+00> : vector<12x12xf32>
    %775 = tpu.matmul %771, %773, %cst_250 {dimension_numbers = #tpu.dot_dimension_numbers<[1], [1], [0], [0], [0, 0, 1, 0], [], []>} : vector<12x16xbf16>, vector<12x16xbf16>, vector<12x12xf32> -> vector<12x12xf32>
    %776 = arith.addf %775, %464 : vector<12x12xf32>
    %cst_251 = arith.constant dense<0xFF800000> : vector<12xf32>
    %777 = vector.multi_reduction <maximumf>, %776, %cst_251 [1] : vector<12x12xf32> to vector<12xf32>
    %778 = vector.shape_cast %777 : vector<12xf32> to vector<12x1xf32>
    %779 = vector.broadcast %778 : vector<12x1xf32> to vector<12x12xf32>
    %780 = arith.subf %776, %779 : vector<12x12xf32>
    %781 = math.exp %780 : vector<12x12xf32>
    %cst_252 = arith.constant dense<0.000000e+00> : vector<12xf32>
    %782 = vector.multi_reduction <add>, %781, %cst_252 [1] : vector<12x12xf32> to vector<12xf32>
    %783 = vector.shape_cast %782 : vector<12xf32> to vector<12x1xf32>
    %784 = tpu.reciprocal %783 {approx = true} : vector<12x1xf32> -> vector<12x1xf32>
    %785 = vector.broadcast %784 : vector<12x1xf32> to vector<12x12xf32>
    %786 = arith.mulf %781, %785 : vector<12x12xf32>
    %787 = arith.truncf %786 : vector<12x12xf32> to vector<12x12xbf16>
    %cst_253 = arith.constant dense<0.000000e+00> : vector<12x16xf32>
    %788 = tpu.matmul %787, %774, %cst_253 {dimension_numbers = #tpu.dot_dimension_numbers<[1], [0], [0], [1], [0, 0, 1, 1], [], []>} : vector<12x12xbf16>, vector<12x16xbf16>, vector<12x16xf32> -> vector<12x16xf32>
    %c1_254 = arith.constant 1 : index
    %c112_255 = arith.constant 112 : index
    %c0_256 = arith.constant 0 : index
    %789 = vector.load %arg3[%c1_254, %c112_255, %c0_256] : memref<2x320x192xbf16, #tpu.memory_space<vmem>>, vector<1x16x64xbf16>
    %790 = vector.shape_cast %789 : vector<1x16x64xbf16> to vector<16x64xbf16>
    %791 = arith.truncf %788 : vector<12x16xf32> to vector<12x16xbf16>
    %cst_257 = arith.constant dense<0.000000e+00> : vector<12x64xf32>
    %792 = tpu.matmul %791, %790, %cst_257 {dimension_numbers = #tpu.dot_dimension_numbers<[1], [0], [0], [1], [0, 0, 1, 1], [], []>} : vector<12x16xbf16>, vector<16x64xbf16>, vector<12x64xf32> -> vector<12x64xf32>
    %793 = arith.addf %769, %792 : vector<12x64xf32>
    %794 = arith.addf %654, %793 : vector<12x64xf32>
    %795 = vector.shape_cast %40 : vector<64xf32> to vector<1x64xf32>
    %796 = vector.broadcast %795 : vector<1x64xf32> to vector<12x64xf32>
    %797 = arith.addf %794, %796 : vector<12x64xf32>
    %cst_258 = arith.constant dense<0.000000e+00> : vector<12xf32>
    %798 = vector.multi_reduction <add>, %797, %cst_258 [1] : vector<12x64xf32> to vector<12xf32>
    %799 = vector.shape_cast %798 : vector<12xf32> to vector<12x1xf32>
    %cst_259 = arith.constant 6.400000e+01 : f32
    %800 = vector.broadcast %cst_259 : f32 to vector<12x1xf32>
    %801 = arith.divf %799, %800 : vector<12x1xf32>
    %802 = vector.broadcast %801 : vector<12x1xf32> to vector<12x64xf32>
    %803 = arith.subf %797, %802 : vector<12x64xf32>
    %804 = arith.mulf %803, %803 : vector<12x64xf32>
    %cst_260 = arith.constant dense<0.000000e+00> : vector<12xf32>
    %805 = vector.multi_reduction <add>, %804, %cst_260 [1] : vector<12x64xf32> to vector<12xf32>
    %806 = vector.shape_cast %805 : vector<12xf32> to vector<12x1xf32>
    %cst_261 = arith.constant 6.400000e+01 : f32
    %807 = vector.broadcast %cst_261 : f32 to vector<12x1xf32>
    %808 = arith.divf %806, %807 : vector<12x1xf32>
    %cst_262 = arith.constant 9.99999974E-6 : f32
    %809 = vector.broadcast %cst_262 : f32 to vector<12x1xf32>
    %810 = arith.addf %808, %809 : vector<12x1xf32>
    %811 = math.rsqrt %810 : vector<12x1xf32>
    %812 = vector.broadcast %811 : vector<12x1xf32> to vector<12x64xf32>
    %813 = arith.mulf %803, %812 : vector<12x64xf32>
    %814 = vector.shape_cast %43 : vector<64xf32> to vector<1x64xf32>
    %815 = vector.broadcast %814 : vector<1x64xf32> to vector<12x64xf32>
    %816 = arith.mulf %813, %815 : vector<12x64xf32>
    %817 = vector.shape_cast %44 : vector<64xf32> to vector<1x64xf32>
    %818 = vector.broadcast %817 : vector<1x64xf32> to vector<12x64xf32>
    %819 = arith.addf %816, %818 : vector<12x64xf32>
    %820 = arith.truncf %819 : vector<12x64xf32> to vector<12x64xbf16>
    %c1_263 = arith.constant 1 : index
    %c128_264 = arith.constant 128 : index
    %c0_265 = arith.constant 0 : index
    %821 = vector.load %arg3[%c1_263, %c128_264, %c0_265] : memref<2x320x192xbf16, #tpu.memory_space<vmem>>, vector<1x64x128xbf16>
    %822 = vector.shape_cast %821 : vector<1x64x128xbf16> to vector<64x128xbf16>
    %cst_266 = arith.constant dense<0.000000e+00> : vector<12x128xf32>
    %823 = tpu.matmul %820, %822, %cst_266 {dimension_numbers = #tpu.dot_dimension_numbers<[1], [0], [0], [1], [0, 0, 1, 1], [], []>} : vector<12x64xbf16>, vector<64x128xbf16>, vector<12x128xf32> -> vector<12x128xf32>
    %824 = vector.shape_cast %34 : vector<128xf32> to vector<1x128xf32>
    %825 = vector.broadcast %824 : vector<1x128xf32> to vector<12x128xf32>
    %826 = arith.addf %823, %825 : vector<12x128xf32>
    %cst_267 = arith.constant 5.000000e-01 : f32
    %827 = vector.broadcast %cst_267 : f32 to vector<12x128xf32>
    %828 = arith.mulf %827, %826 : vector<12x128xf32>
    %cst_268 = arith.constant 4.471500e-02 : f32
    %829 = vector.broadcast %cst_268 : f32 to vector<12x128xf32>
    %830 = arith.mulf %829, %826 : vector<12x128xf32>
    %831 = arith.mulf %830, %826 : vector<12x128xf32>
    %832 = arith.mulf %831, %826 : vector<12x128xf32>
    %833 = arith.addf %826, %832 : vector<12x128xf32>
    %cst_269 = arith.constant 0.797884583 : f32
    %834 = vector.broadcast %cst_269 : f32 to vector<12x128xf32>
    %835 = arith.mulf %834, %833 : vector<12x128xf32>
    %836 = math.tanh %835 : vector<12x128xf32>
    %cst_270 = arith.constant 1.000000e+00 : f32
    %837 = vector.broadcast %cst_270 : f32 to vector<12x128xf32>
    %838 = arith.addf %837, %836 : vector<12x128xf32>
    %839 = arith.mulf %828, %838 : vector<12x128xf32>
    %840 = arith.truncf %839 : vector<12x128xf32> to vector<12x128xbf16>
    %c1_271 = arith.constant 1 : index
    %c192_272 = arith.constant 192 : index
    %c0_273 = arith.constant 0 : index
    %841 = vector.load %arg3[%c1_271, %c192_272, %c0_273] : memref<2x320x192xbf16, #tpu.memory_space<vmem>>, vector<1x128x64xbf16>
    %842 = vector.shape_cast %841 : vector<1x128x64xbf16> to vector<128x64xbf16>
    %cst_274 = arith.constant dense<0.000000e+00> : vector<12x64xf32>
    %843 = tpu.matmul %840, %842, %cst_274 {dimension_numbers = #tpu.dot_dimension_numbers<[1], [0], [0], [1], [0, 0, 1, 1], [], []>} : vector<12x128xbf16>, vector<128x64xbf16>, vector<12x64xf32> -> vector<12x64xf32>
    %844 = vector.shape_cast %45 : vector<64xf32> to vector<1x64xf32>
    %845 = vector.broadcast %844 : vector<1x64xf32> to vector<12x64xf32>
    %846 = arith.addf %843, %845 : vector<12x64xf32>
    %847 = arith.addf %797, %846 : vector<12x64xf32>
    %c1_275 = arith.constant 1 : index
    %c1_276 = arith.constant 1 : index
    %c0_277 = arith.constant 0 : index
    %c0_278 = arith.constant 0 : index
    %848 = vector.load %arg5[%c1_275, %c1_276, %c0_277, %c0_278] : memref<2x3x12x64xf32, #tpu.memory_space<vmem>>, vector<1x1x12x64xf32>
    %849 = vector.shape_cast %848 : vector<1x1x12x64xf32> to vector<12x64xf32>
    %850 = vector.shape_cast %847 : vector<12x64xf32> to vector<1x1x12x64xf32>
    tpu.vector_store %arg5[%c1_275, %c1_276, %c0_277, %c0_278], %850 {strides = array<i32>} : memref<2x3x12x64xf32, #tpu.memory_space<vmem>>, vector<1x1x12x64xf32>,
    %cst_279 = arith.constant dense<0.000000e+00> : vector<12xf32>
    %851 = vector.multi_reduction <add>, %847, %cst_279 [1] : vector<12x64xf32> to vector<12xf32>
    %852 = vector.shape_cast %851 : vector<12xf32> to vector<12x1xf32>
    %cst_280 = arith.constant 6.400000e+01 : f32
    %853 = vector.broadcast %cst_280 : f32 to vector<12x1xf32>
    %854 = arith.divf %852, %853 : vector<12x1xf32>
    %855 = vector.broadcast %854 : vector<12x1xf32> to vector<12x64xf32>
    %856 = arith.subf %847, %855 : vector<12x64xf32>
    %857 = arith.mulf %856, %856 : vector<12x64xf32>
    %cst_281 = arith.constant dense<0.000000e+00> : vector<12xf32>
    %858 = vector.multi_reduction <add>, %857, %cst_281 [1] : vector<12x64xf32> to vector<12xf32>
    %859 = vector.shape_cast %858 : vector<12xf32> to vector<12x1xf32>
    %cst_282 = arith.constant 6.400000e+01 : f32
    %860 = vector.broadcast %cst_282 : f32 to vector<12x1xf32>
    %861 = arith.divf %859, %860 : vector<12x1xf32>
    %cst_283 = arith.constant 9.99999974E-6 : f32
    %862 = vector.broadcast %cst_283 : f32 to vector<12x1xf32>
    %863 = arith.addf %861, %862 : vector<12x1xf32>
    %864 = math.rsqrt %863 : vector<12x1xf32>
    %865 = vector.broadcast %864 : vector<12x1xf32> to vector<12x64xf32>
    %866 = arith.mulf %856, %865 : vector<12x64xf32>
    %867 = vector.shape_cast %2 : vector<64xf32> to vector<1x64xf32>
    %868 = vector.broadcast %867 : vector<1x64xf32> to vector<12x64xf32>
    %869 = arith.mulf %866, %868 : vector<12x64xf32>
    %870 = vector.shape_cast %3 : vector<64xf32> to vector<1x64xf32>
    %871 = vector.broadcast %870 : vector<1x64xf32> to vector<12x64xf32>
    %872 = arith.addf %869, %871 : vector<12x64xf32>
    %c1_284 = arith.constant 1 : index
    %c2_285 = arith.constant 2 : index
    %c0_286 = arith.constant 0 : index
    %c0_287 = arith.constant 0 : index
    %873 = vector.load %arg5[%c1_284, %c2_285, %c0_286, %c0_287] : memref<2x3x12x64xf32, #tpu.memory_space<vmem>>, vector<1x1x12x64xf32>
    %874 = vector.shape_cast %873 : vector<1x1x12x64xf32> to vector<12x64xf32>
    %875 = vector.shape_cast %872 : vector<12x64xf32> to vector<1x1x12x64xf32>
    tpu.vector_store %arg5[%c1_284, %c2_285, %c0_286, %c0_287], %875 {strides = array<i32>} : memref<2x3x12x64xf32, #tpu.memory_space<vmem>>, vector<1x1x12x64xf32>,
    return
  }
  func.func @transform_0(%arg0: i32) -> (i32, i32, i32) {
    %c0_i32 = arith.constant 0 : i32
    %c0_i32_0 = arith.constant 0 : i32
    %c0_i32_1 = arith.constant 0 : i32
    return %arg0, %c0_i32, %c0_i32_0 : i32, i32, i32
  }
  func.func @transform_1(%arg0: i32) -> (i32, i32, i32) {
    %c0_i32 = arith.constant 0 : i32
    %c0_i32_0 = arith.constant 0 : i32
    %c0_i32_1 = arith.constant 0 : i32
    return %arg0, %c0_i32, %c0_i32_0 : i32, i32, i32
  }
  func.func @transform_2(%arg0: i32) -> (i32, i32, i32) {
    %c0_i32 = arith.constant 0 : i32
    %c0_i32_0 = arith.constant 0 : i32
    %c0_i32_1 = arith.constant 0 : i32
    %c0_i32_2 = arith.constant 0 : i32
    return %c0_i32, %c0_i32_0, %c0_i32_1 : i32, i32, i32
  }
  func.func @transform_3(%arg0: i32) -> (i32, i32) {
    %c0_i32 = arith.constant 0 : i32
    %c0_i32_0 = arith.constant 0 : i32
    %c0_i32_1 = arith.constant 0 : i32
    return %c0_i32, %c0_i32_0 : i32, i32
  }
  func.func @transform_4(%arg0: i32) -> (i32, i32, i32, i32) {
    %c0_i32 = arith.constant 0 : i32
    %c0_i32_0 = arith.constant 0 : i32
    %c0_i32_1 = arith.constant 0 : i32
    %c0_i32_2 = arith.constant 0 : i32
    return %arg0, %c0_i32, %c0_i32_0, %c0_i32_1 : i32, i32, i32, i32
  }
}

</mosaic_0001>

<llo_original>
// kernel: xlmr_forward.1
$region0: #{xlmr_forward.1}
  #allocation0 [shape = 'u32[]', space=smem, size = 0x4, offset = 0x4, fixed_abs, tag = 'smem constant byte address 0x4 - core index']
  #allocation1 [shape = 'u32[72,128]{1,0:T(1,128)}', space=vmem, size = 0x9000, scoped, tag = 'internal scratch']
  %s0 = inlined_call_operand.vmem [shape: f32[2,12,64], index: 0, kind: input, shape index: {}]
  %s1 = inlined_call_operand.vmem [shape: f32[2,12,12], index: 1, kind: input, shape index: {}]
  %s2 = inlined_call_operand.vmem [shape: bf16[2,320,192], index: 2, kind: input, shape index: {}]
  %s3 = inlined_call_operand.vmem [shape: f32[13,128], index: 3, kind: input, shape index: {}]
  %s4 = inlined_call_operand.vmem [shape: f32[2,3,12,64], index: 4, kind: output, shape index: {}]
  %s5 = sld [smem:[#allocation0]]
  $region26: #{xlmr_forward.1} parent=0
    _
  %s7 = ssub.s32 1, %s5
  %s8 = scalar_select 0, %s7, %s5
  // Predicated region
  $region2: #{xlmr_forward.1} parent=0 // pred_check
    _
  $region3: #{xlmr_forward.1} parent=0 // pred_check_branch
    %10 = sbr.rel (0) target = $region5
  $region4: #{xlmr_forward.1} parent=0 // pred_region
    _
  $region5: #{xlmr_forward.1} parent=0 // pred_fallthru
    _
  // Predicated region
  $region6: #{xlmr_forward.1} parent=0 // pred_check
    _
  $region7: #{xlmr_forward.1} parent=0 // pred_check_branch
    %12 = sbr.rel (0) target = $region9
  $region8: #{xlmr_forward.1} parent=0 // pred_region
    _
  $region9: #{xlmr_forward.1} parent=0 // pred_fallthru
    _
  // Predicated region
  $region10: #{xlmr_forward.1} parent=0 // pred_check
    _
  $region11: #{xlmr_forward.1} parent=0 // pred_check_branch
    %14 = sbr.rel (0) target = $region13
  $region12: #{xlmr_forward.1} parent=0 // pred_region
    _
  $region13: #{xlmr_forward.1} parent=0 // pred_fallthru
    _
  // Predicated region
  $region14: #{xlmr_forward.1} parent=0 // pred_check
    _
  $region15: #{xlmr_forward.1} parent=0 // pred_check_branch
    %16 = sbr.rel (0) target = $region17
  $region16: #{xlmr_forward.1} parent=0 // pred_region
    _
  $region17: #{xlmr_forward.1} parent=0 // pred_fallthru
    _
  %v18 = vld [vmem:[%s3 + $0xc] sm:$0x1]
  %v19 = vld [vmem:[%s3] sm:$0x1]
  %v20 = vld [vmem:[%s3 + $0x1] sm:$0x1]
  %v21 = vld [vmem:[%s3 + $0x2] sm:$0x1]
  %v22 = vld [vmem:[%s3 + $0x3] sm:$0x1]
  %v23 = vld [vmem:[%s3 + $0x4] sm:$0x1]
  %v24 = vld [vmem:[%s3 + $0x5] sm:$0x1]
  %v25 = vld [vmem:[%s3 + $0x6] sm:$0x1]
  %v26 = vld [vmem:[%s3 + $0x7] sm:$0x1]
  %v27 = vld [vmem:[%s3 + $0x8] sm:$0x1]
  %v28 = vld [vmem:[%s3 + $0x9] sm:$0x1]
  %v29 = vld [vmem:[%s3 + $0xa] sm:$0x1]
  %v30 = vld [vmem:[%s3 + $0xb] sm:$0x1]
  %v31 = vld [vmem:[%s0] sm:$0xff]
  %v32 = vld [vmem:[%s0 + $0x8] sm:$0xf]
  %v33 = vld [vmem:[%s1] sm:$0xff]
  %v34 = vld [vmem:[%s1 + $0x8] sm:$0xf]
  %vm35 = vcmask 523264
  %v36 = vsel %vm35, %v31, 0.0
  %37 = vadd.xlane.f32.xlu0 %v36
  %v38 = vpop.xlane.xlu0 %37
  %vm39 = vcmask 519168
  %v40 = vsel %vm39, %v32, 0.0
  %41 = vadd.xlane.f32.xlu0 %v40
  %v42 = vpop.xlane.xlu0 %41
  %v43 = vrcp.pop 64.0
  %v44 = vmul.f32 64.0, %v43
  %v45 = vsub.f32 1.0, %v44
  %v46 = vmul.f32 %v43, %v45
  %v47 = vadd.f32 %v43, %v46
  %vm48 = vweird.f32 %v43
  %v49 = vsel %vm48, %v43, %v47
  %v50 = vmul.f32 %v38, %v49
  %v51 = vmul.f32 %v42, %v49
  %v52 = vsub.f32 %v31, %v50
  %v53 = vsub.f32 %v32, %v51
  %v54 = vmul.f32 %v52, %v52
  %v55 = vmul.f32 %v53, %v53
  %v56 = vsel %vm35, %v54, 0.0
  %57 = vadd.xlane.f32.xlu0 %v56
  %v58 = vpop.xlane.xlu0 %57
  %v59 = vsel %vm39, %v55, 0.0
  %60 = vadd.xlane.f32.xlu0 %v59
  %v61 = vpop.xlane.xlu0 %60
  %v62 = vmul.f32 %v58, %v49
  %v63 = vmul.f32 %v61, %v49
  %v64 = vadd.f32 %v62, 1e-05
  %v65 = vadd.f32 %v63, 1e-05
  %v66 = vrsqrt.pop %v64
  %v67 = vmul.f32 %v66, %v64
  %v68 = vmul.f32 %v67, %v66
  %v69 = vmul.f32 0.5, %v68
  %v70 = vsub.f32 1.5, %v69
  %v71 = vmul.f32 %v66, %v70
  %vm72 = vweird.f32 %v64
  %vm73 = vweird.f32 %v66
  %vm74 = vmor %vm72, %vm73
  %v75 = vsel %vm74, %v66, %v71
  %v76 = vrsqrt.pop %v65
  %v77 = vmul.f32 %v76, %v65
  %v78 = vmul.f32 %v77, %v76
  %v79 = vmul.f32 0.5, %v78
  %v80 = vsub.f32 1.5, %v79
  %v81 = vmul.f32 %v76, %v80
  %vm82 = vweird.f32 %v65
  %vm83 = vweird.f32 %v76
  %vm84 = vmor %vm82, %vm83
  %v85 = vsel %vm84, %v76, %v81
  %v86 = vmul.f32 %v52, %v75
  %v87 = vmul.f32 %v53, %v85
  %v88 = vperm.slane %v21, 0
  %v89 = vmul.f32 %v86, %v88
  %v90 = vmul.f32 %v87, %v88
  %92 = vrot.lane.b32.xlu0 %v88, 64
  %v93 = vpop.permute.xlu0 %92
  %v95 = vadd.f32 %v89, %v93
  %v96 = vadd.f32 %v90, %v93
  %v97 = vpack.c.bf16 %v96, %v95
  %v98 = vld [vmem:[%s2] sm:$0xff]
  %v99 = vld [vmem:[%s2 + $0x8] sm:$0xff]
  %v100 = vld [vmem:[%s2 + $0x10] sm:$0xff]
  %v101 = vld [vmem:[%s2 + $0x18] sm:$0xff]
  %v102 = vld [vmem:[%s2 + $0x20] sm:$0xff]
  %v103 = vld [vmem:[%s2 + $0x28] sm:$0xff]
  %v104 = vld [vmem:[%s2 + $0x30] sm:$0xff]
  %v105 = vld [vmem:[%s2 + $0x38] sm:$0xff]
  %v114 = vunpack.c.l.b16 %v98
  %v115 = vunpack.c.h.b16 %v98
  %v116 = vunpack.c.l.b16 %v99
  %v117 = vunpack.c.h.b16 %v99
  %v118 = vunpack.c.l.b16 %v100
  %v119 = vunpack.c.h.b16 %v100
  %v120 = vunpack.c.l.b16 %v101
  %v121 = vunpack.c.h.b16 %v101
  %v122 = vunpack.c.l.b16 %v102
  %v123 = vunpack.c.h.b16 %v102
  %v124 = vunpack.c.l.b16 %v103
  %v125 = vunpack.c.h.b16 %v103
  %v126 = vunpack.c.l.b16 %v104
  %v127 = vunpack.c.h.b16 %v104
  %v128 = vunpack.c.l.b16 %v105
  %v129 = vunpack.c.h.b16 %v105
  %v130 = vpack.c.b16 %v116, %v114
  %v131 = vpack.c.b16 %v117, %v115
  %v132 = vpack.c.b16 %v120, %v118
  %v133 = vpack.c.b16 %v121, %v119
  %v134 = vpack.c.b16 %v124, %v122
  %v135 = vpack.c.b16 %v125, %v123
  %v136 = vpack.c.b16 %v128, %v126
  %v137 = vpack.c.b16 %v129, %v127
  %v147 = vsel %vm35, %v97, 0
  %149 = vmatpush.bf16.msra.mxu0 0
  %150 = vmatpush.bf16.msra.mxu0 0
  %151 = vmatpush.bf16.msra.mxu0 0
  %152 = vmatpush.bf16.msra.mxu0 0
  %153 = vmatpush.bf16.msra.mxu0 %v136
  %154 = vmatpush.bf16.msra.mxu0 %v134
  %155 = vmatpush.bf16.msra.mxu0 %v132
  %156 = vmatpush.bf16.msra.mxu0 %v130
  %157 = vmatmul.bf16.gmra.mxu0 %v147
  %v158 = vpop.f32.mrf.mxu0
  %v159 = vadd.f32 0.0, %v158
  %v160 = vpop.f32.mrf.mxu0
  %v161 = vadd.f32 0.0, %v160
  %162 = vdwg.mxu0
  %163 = vmatpush.bf16.msra.mxu0 0
  %164 = vmatpush.bf16.msra.mxu0 0
  %165 = vmatpush.bf16.msra.mxu0 0
  %166 = vmatpush.bf16.msra.mxu0 0
  %167 = vmatpush.bf16.msra.mxu0 %v137
  %168 = vmatpush.bf16.msra.mxu0 %v135
  %169 = vmatpush.bf16.msra.mxu0 %v133
  %170 = vmatpush.bf16.msra.mxu0 %v131
  %171 = vmatmul.bf16.gmra.mxu0 %v147
  %v172 = vpop.f32.mrf.mxu0
  %v173 = vadd.f32 0.0, %v172
  %v174 = vpop.f32.mrf.mxu0
  %v175 = vadd.f32 0.0, %v174
  %176 = vdwg.mxu0
  %v177 = vperm.slane %v19, 0
  %v178 = vadd.f32 %v159, %v177
  %v179 = vadd.f32 %v161, %v177
  %v180 = vperm.slane %v20, 0
  %v181 = vadd.f32 %v173, %v180
  %v182 = vadd.f32 %v175, %v180
  %v183 = vpack.c.bf16 %v181, %v181
  %v184 = vpack.c.bf16 %v182, %v182
  %v185 = vpack.c.bf16 %v179, %v178
  %187 = vrot.lane.b32.xlu0 %v185, 64
  %v188 = vpop.permute.xlu0 %187
  %vm189 = vcmask 130048
  %v191 = vsel %vm189, %v185, 0
  %v194 = vsel %vm189, %v188, 0
  %196 = vmatpush.bf16.xpose.msra.mxu0 0
  %197 = vmatpush.bf16.xpose.msra.mxu0 0
  %198 = vmatpush.bf16.xpose.msra.mxu0 0
  %199 = vmatpush.bf16.xpose.msra.mxu0 0
  %200 = vmatpush.bf16.xpose.msra.mxu0 0
  %201 = vmatpush.bf16.xpose.msra.mxu0 0
  %202 = vmatpush.bf16.xpose.msra.mxu0 0
  %203 = vmatpush.bf16.xpose.msra.mxu0 %v194
  %204 = vmatmul.bf16.gmra.mxu0 %v191
  %v205 = vpop.f32.mrf.mxu0
  %v206 = vadd.f32 %v33, %v205
  %v207 = vpop.f32.mrf.mxu0
  %v208 = vadd.f32 %v34, %v207
  %209 = vdwg.mxu0
  %vm210 = vcmask 97280
  %v211 = vsel %vm210, %v206, -inf
  %212 = vmax.xlane.f32.xlu0 %v211
  %v213 = vpop.xlane.xlu0 %212
  %vm214 = vcmask 93184
  %v215 = vsel %vm214, %v208, -inf
  %216 = vmax.xlane.f32.xlu0 %v215
  %v217 = vpop.xlane.xlu0 %216
  %v218 = vsub.f32 %v206, %v213
  %v219 = vsub.f32 %v208, %v217
  %v220 = vmul.f32 %v218, 1.442695
  %v221 = vpow.pop %v220
  %v222 = vmul.f32 %v219, 1.442695
  %v223 = vpow.pop %v222
  %v224 = vsel %vm210, %v221, 0.0
  %225 = vadd.xlane.f32.xlu0 %v224
  %v226 = vpop.xlane.xlu0 %225
  %v227 = vsel %vm214, %v223, 0.0
  %228 = vadd.xlane.f32.xlu0 %v227
  %v229 = vpop.xlane.xlu0 %228
  %v230 = vrcp.pop %v226
  %v231 = vrcp.pop %v229
  %v232 = vmul.f32 %v221, %v230
  %v233 = vmul.f32 %v223, %v231
  %v234 = vpack.c.bf16 %v233, %v232
  %v237 = vunpack.c.l.b16 %v183
  %v238 = vunpack.c.l.b16 %v184
  %v239 = vpack.c.b16 %v238, %v237
  %v241 = vsel %vm210, %v234, 0
  %vm243 = vcmask 1045504
  %v245 = vsel %vm243, %v239, 0
  %247 = vmatpush.bf16.msra.mxu0 0
  %248 = vmatpush.bf16.msra.mxu0 0
  %249 = vmatpush.bf16.msra.mxu0 0
  %250 = vmatpush.bf16.msra.mxu0 0
  %251 = vmatpush.bf16.msra.mxu0 0
  %252 = vmatpush.bf16.msra.mxu0 0
  %253 = vmatpush.bf16.msra.mxu0 0
  %254 = vmatpush.bf16.msra.mxu0 %v245
  %255 = vmatmul.bf16.gmra.mxu0 %v241
  %v256 = vpop.f32.mrf.mxu0
  %v257 = vadd.f32 0.0, %v256
  %v258 = vpop.f32.mrf.mxu0
  %v259 = vadd.f32 0.0, %v258
  %260 = vdwg.mxu0
  %v261 = vld [vmem:[%s2 + $0x40] sm:$0xf]
  %v262 = vld [vmem:[%s2 + $0x48] sm:$0xf]
  %v263 = vpack.c.bf16 %v259, %v257
  %264 = vrot.lane.b32.xlu0 %v185, 112
  %v265 = vpop.permute.xlu0 %264
  %266 = vrot.lane.b32.xlu0 %v185, 48
  %v267 = vpop.permute.xlu0 %266
  %v269 = vsel %vm189, %v265, 0
  %v272 = vsel %vm189, %v267, 0
  %274 = vmatpush.bf16.xpose.msra.mxu0 0
  %275 = vmatpush.bf16.xpose.msra.mxu0 0
  %276 = vmatpush.bf16.xpose.msra.mxu0 0
  %277 = vmatpush.bf16.xpose.msra.mxu0 0
  %278 = vmatpush.bf16.xpose.msra.mxu0 0
  %279 = vmatpush.bf16.xpose.msra.mxu0 0
  %280 = vmatpush.bf16.xpose.msra.mxu0 0
  %281 = vmatpush.bf16.xpose.msra.mxu0 %v272
  %282 = vmatmul.bf16.gmra.mxu0 %v269
  %v283 = vpop.f32.mrf.mxu0
  %v284 = vadd.f32 %v33, %v283
  %v285 = vpop.f32.mrf.mxu0
  %v286 = vadd.f32 %v34, %v285
  %287 = vdwg.mxu0
  %v288 = vsel %vm210, %v284, -inf
  %289 = vmax.xlane.f32.xlu0 %v288
  %v290 = vpop.xlane.xlu0 %289
  %v291 = vsel %vm214, %v286, -inf
  %292 = vmax.xlane.f32.xlu0 %v291
  %v293 = vpop.xlane.xlu0 %292
  %v294 = vsub.f32 %v284, %v290
  %v295 = vsub.f32 %v286, %v293
  %v296 = vmul.f32 %v294, 1.442695
  %v297 = vpow.pop %v296
  %v298 = vmul.f32 %v295, 1.442695
  %v299 = vpow.pop %v298
  %v300 = vsel %vm210, %v297, 0.0
  %301 = vadd.xlane.f32.xlu0 %v300
  %v302 = vpop.xlane.xlu0 %301
  %v303 = vsel %vm214, %v299, 0.0
  %304 = vadd.xlane.f32.xlu0 %v303
  %v305 = vpop.xlane.xlu0 %304
  %v306 = vrcp.pop %v302
  %v307 = vrcp.pop %v305
  %v308 = vmul.f32 %v297, %v306
  %v309 = vmul.f32 %v299, %v307
  %v310 = vpack.c.bf16 %v309, %v308
  %311 = vrot.lane.b32.xlu0 %v239, 112
  %v312 = vpop.permute.xlu0 %311
  %v314 = vsel %vm210, %v310, 0
  %v317 = vsel %vm243, %v312, 0
  %319 = vmatpush.bf16.msra.mxu0 0
  %320 = vmatpush.bf16.msra.mxu0 0
  %321 = vmatpush.bf16.msra.mxu0 0
  %322 = vmatpush.bf16.msra.mxu0 0
  %323 = vmatpush.bf16.msra.mxu0 0
  %324 = vmatpush.bf16.msra.mxu0 0
  %325 = vmatpush.bf16.msra.mxu0 0
  %326 = vmatpush.bf16.msra.mxu0 %v317
  %327 = vmatmul.bf16.gmra.mxu0 %v314
  %v328 = vpop.f32.mrf.mxu0
  %v329 = vadd.f32 0.0, %v328
  %v330 = vpop.f32.mrf.mxu0
  %v331 = vadd.f32 0.0, %v330
  %332 = vdwg.mxu0
  %v333 = vld [vmem:[%s2 + $0x50] sm:$0xf]
  %v334 = vld [vmem:[%s2 + $0x58] sm:$0xf]
  %v335 = vpack.c.bf16 %v331, %v329
  %v338 = vunpack.c.l.b16 %v333
  %v339 = vunpack.c.l.b16 %v334
  %v340 = vpack.c.b16 %v339, %v338
  %v343 = vsel %vm189, %v335, 0
  %345 = vmatpush.bf16.msra.mxu0 0
  %346 = vmatpush.bf16.msra.mxu0 0
  %347 = vmatpush.bf16.msra.mxu0 0
  %348 = vmatpush.bf16.msra.mxu0 0
  %349 = vmatpush.bf16.msra.mxu0 0
  %350 = vmatpush.bf16.msra.mxu0 0
  %351 = vmatpush.bf16.msra.mxu0 0
  %352 = vmatpush.bf16.msra.mxu0 %v340
  %353 = vmatmul.bf16.gmra.mxu0 %v343
  %v354 = vpop.f32.mrf.mxu0
  %v355 = vadd.f32 0.0, %v354
  %v356 = vpop.f32.mrf.mxu0
  %v357 = vadd.f32 0.0, %v356
  %358 = vdwg.mxu0
  %v361 = vunpack.c.l.b16 %v261
  %v362 = vunpack.c.l.b16 %v262
  %v363 = vpack.c.b16 %v362, %v361
  %v366 = vsel %vm189, %v263, 0
  %368 = vmatpush.bf16.msra.mxu0 0
  %369 = vmatpush.bf16.msra.mxu0 0
  %370 = vmatpush.bf16.msra.mxu0 0
  %371 = vmatpush.bf16.msra.mxu0 0
  %372 = vmatpush.bf16.msra.mxu0 0
  %373 = vmatpush.bf16.msra.mxu0 0
  %374 = vmatpush.bf16.msra.mxu0 0
  %375 = vmatpush.bf16.msra.mxu0 %v363
  %376 = vmatmul.bf16.gmra.mxu0 %v366
  %v377 = vpop.f32.mrf.mxu0
  %v378 = vadd.f32 %v355, %v377
  %v379 = vpop.f32.mrf.mxu0
  %v380 = vadd.f32 %v357, %v379
  %381 = vdwg.mxu0
  %382 = vrot.lane.b32.xlu0 %v185, 96
  %v383 = vpop.permute.xlu0 %382
  %384 = vrot.lane.b32.xlu0 %v185, 32
  %v385 = vpop.permute.xlu0 %384
  %v387 = vsel %vm189, %v383, 0
  %v390 = vsel %vm189, %v385, 0
  %392 = vmatpush.bf16.xpose.msra.mxu0 0
  %393 = vmatpush.bf16.xpose.msra.mxu0 0
  %394 = vmatpush.bf16.xpose.msra.mxu0 0
  %395 = vmatpush.bf16.xpose.msra.mxu0 0
  %396 = vmatpush.bf16.xpose.msra.mxu0 0
  %397 = vmatpush.bf16.xpose.msra.mxu0 0
  %398 = vmatpush.bf16.xpose.msra.mxu0 0
  %399 = vmatpush.bf16.xpose.msra.mxu0 %v390
  %400 = vmatmul.bf16.gmra.mxu0 %v387
  %v401 = vpop.f32.mrf.mxu0
  %v402 = vadd.f32 %v33, %v401
  %v403 = vpop.f32.mrf.mxu0
  %v404 = vadd.f32 %v34, %v403
  %405 = vdwg.mxu0
  %v406 = vsel %vm210, %v402, -inf
  %407 = vmax.xlane.f32.xlu0 %v406
  %v408 = vpop.xlane.xlu0 %407
  %v409 = vsel %vm214, %v404, -inf
  %410 = vmax.xlane.f32.xlu0 %v409
  %v411 = vpop.xlane.xlu0 %410
  %v412 = vsub.f32 %v402, %v408
  %v413 = vsub.f32 %v404, %v411
  %v414 = vmul.f32 %v412, 1.442695
  %v415 = vpow.pop %v414
  %v416 = vmul.f32 %v413, 1.442695
  %v417 = vpow.pop %v416
  %v418 = vsel %vm210, %v415, 0.0
  %419 = vadd.xlane.f32.xlu0 %v418
  %v420 = vpop.xlane.xlu0 %419
  %v421 = vsel %vm214, %v417, 0.0
  %422 = vadd.xlane.f32.xlu0 %v421
  %v423 = vpop.xlane.xlu0 %422
  %v424 = vrcp.pop %v420
  %v425 = vrcp.pop %v423
  %v426 = vmul.f32 %v415, %v424
  %v427 = vmul.f32 %v417, %v425
  %v428 = vpack.c.bf16 %v427, %v426
  %429 = vrot.lane.b32.xlu0 %v239, 96
  %v430 = vpop.permute.xlu0 %429
  %v432 = vsel %vm210, %v428, 0
  %v435 = vsel %vm243, %v430, 0
  %437 = vmatpush.bf16.msra.mxu0 0
  %438 = vmatpush.bf16.msra.mxu0 0
  %439 = vmatpush.bf16.msra.mxu0 0
  %440 = vmatpush.bf16.msra.mxu0 0
  %441 = vmatpush.bf16.msra.mxu0 0
  %442 = vmatpush.bf16.msra.mxu0 0
  %443 = vmatpush.bf16.msra.mxu0 0
  %444 = vmatpush.bf16.msra.mxu0 %v435
  %445 = vmatmul.bf16.gmra.mxu0 %v432
  %v446 = vpop.f32.mrf.mxu0
  %v447 = vadd.f32 0.0, %v446
  %v448 = vpop.f32.mrf.mxu0
  %v449 = vadd.f32 0.0, %v448
  %450 = vdwg.mxu0
  %v451 = vld [vmem:[%s2 + $0x60] sm:$0xf]
  %v452 = vld [vmem:[%s2 + $0x68] sm:$0xf]
  %v453 = vpack.c.bf16 %v449, %v447
  %v456 = vunpack.c.l.b16 %v451
  %v457 = vunpack.c.l.b16 %v452
  %v458 = vpack.c.b16 %v457, %v456
  %v461 = vsel %vm189, %v453, 0
  %463 = vmatpush.bf16.msra.mxu0 0
  %464 = vmatpush.bf16.msra.mxu0 0
  %465 = vmatpush.bf16.msra.mxu0 0
  %466 = vmatpush.bf16.msra.mxu0 0
  %467 = vmatpush.bf16.msra.mxu0 0
  %468 = vmatpush.bf16.msra.mxu0 0
  %469 = vmatpush.bf16.msra.mxu0 0
  %470 = vmatpush.bf16.msra.mxu0 %v458
  %471 = vmatmul.bf16.gmra.mxu0 %v461
  %v472 = vpop.f32.mrf.mxu0
  %v473 = vadd.f32 0.0, %v472
  %v474 = vpop.f32.mrf.mxu0
  %v475 = vadd.f32 0.0, %v474
  %476 = vdwg.mxu0
  %v477 = vadd.f32 %v378, %v473
  %v478 = vadd.f32 %v380, %v475
  %479 = vrot.lane.b32.xlu0 %v185, 80
  %v480 = vpop.permute.xlu0 %479
  %481 = vrot.lane.b32.xlu0 %v185, 16
  %v482 = vpop.permute.xlu0 %481
  %v484 = vsel %vm189, %v480, 0
  %v487 = vsel %vm189, %v482, 0
  %489 = vmatpush.bf16.xpose.msra.mxu0 0
  %490 = vmatpush.bf16.xpose.msra.mxu0 0
  %491 = vmatpush.bf16.xpose.msra.mxu0 0
  %492 = vmatpush.bf16.xpose.msra.mxu0 0
  %493 = vmatpush.bf16.xpose.msra.mxu0 0
  %494 = vmatpush.bf16.xpose.msra.mxu0 0
  %495 = vmatpush.bf16.xpose.msra.mxu0 0
  %496 = vmatpush.bf16.xpose.msra.mxu0 %v487
  %497 = vmatmul.bf16.gmra.mxu0 %v484
  %v498 = vpop.f32.mrf.mxu0
  %v499 = vadd.f32 %v33, %v498
  %v500 = vpop.f32.mrf.mxu0
  %v501 = vadd.f32 %v34, %v500
  %502 = vdwg.mxu0
  %v503 = vsel %vm210, %v499, -inf
  %504 = vmax.xlane.f32.xlu0 %v503
  %v505 = vpop.xlane.xlu0 %504
  %v506 = vsel %vm214, %v501, -inf
  %507 = vmax.xlane.f32.xlu0 %v506
  %v508 = vpop.xlane.xlu0 %507
  %v509 = vsub.f32 %v499, %v505
  %v510 = vsub.f32 %v501, %v508
  %v511 = vmul.f32 %v509, 1.442695
  %v512 = vpow.pop %v511
  %v513 = vmul.f32 %v510, 1.442695
  %v514 = vpow.pop %v513
  %v515 = vsel %vm210, %v512, 0.0
  %516 = vadd.xlane.f32.xlu0 %v515
  %v517 = vpop.xlane.xlu0 %516
  %v518 = vsel %vm214, %v514, 0.0
  %519 = vadd.xlane.f32.xlu0 %v518
  %v520 = vpop.xlane.xlu0 %519
  %v521 = vrcp.pop %v517
  %v522 = vrcp.pop %v520
  %v523 = vmul.f32 %v512, %v521
  %v524 = vmul.f32 %v514, %v522
  %v525 = vpack.c.bf16 %v524, %v523
  %526 = vrot.lane.b32.xlu0 %v239, 80
  %v527 = vpop.permute.xlu0 %526
  %v529 = vsel %vm210, %v525, 0
  %v532 = vsel %vm243, %v527, 0
  %534 = vmatpush.bf16.msra.mxu0 0
  %535 = vmatpush.bf16.msra.mxu0 0
  %536 = vmatpush.bf16.msra.mxu0 0
  %537 = vmatpush.bf16.msra.mxu0 0
  %538 = vmatpush.bf16.msra.mxu0 0
  %539 = vmatpush.bf16.msra.mxu0 0
  %540 = vmatpush.bf16.msra.mxu0 0
  %541 = vmatpush.bf16.msra.mxu0 %v532
  %542 = vmatmul.bf16.gmra.mxu0 %v529
  %v543 = vpop.f32.mrf.mxu0
  %v544 = vadd.f32 0.0, %v543
  %v545 = vpop.f32.mrf.mxu0
  %v546 = vadd.f32 0.0, %v545
  %547 = vdwg.mxu0
  %v548 = vld [vmem:[%s2 + $0x70] sm:$0xf]
  %v549 = vld [vmem:[%s2 + $0x78] sm:$0xf]
  %v550 = vpack.c.bf16 %v546, %v544
  %v553 = vunpack.c.l.b16 %v548
  %v554 = vunpack.c.l.b16 %v549
  %v555 = vpack.c.b16 %v554, %v553
  %v558 = vsel %vm189, %v550, 0
  %560 = vmatpush.bf16.msra.mxu0 0
  %561 = vmatpush.bf16.msra.mxu0 0
  %562 = vmatpush.bf16.msra.mxu0 0
  %563 = vmatpush.bf16.msra.mxu0 0
  %564 = vmatpush.bf16.msra.mxu0 0
  %565 = vmatpush.bf16.msra.mxu0 0
  %566 = vmatpush.bf16.msra.mxu0 0
  %567 = vmatpush.bf16.msra.mxu0 %v555
  %568 = vmatmul.bf16.gmra.mxu0 %v558
  %v569 = vpop.f32.mrf.mxu0
  %v570 = vadd.f32 0.0, %v569
  %v571 = vpop.f32.mrf.mxu0
  %v572 = vadd.f32 0.0, %v571
  %573 = vdwg.mxu0
  %v574 = vadd.f32 %v477, %v570
  %v575 = vadd.f32 %v478, %v572
  %v576 = vadd.f32 %v31, %v574
  %v577 = vadd.f32 %v32, %v575
  %579 = vrot.lane.b32.xlu0 %v180, 64
  %v580 = vpop.permute.xlu0 %579
  %v582 = vadd.f32 %v576, %v580
  %v583 = vadd.f32 %v577, %v580
  %v584 = vsel %vm35, %v582, 0.0
  %585 = vadd.xlane.f32.xlu0 %v584
  %v586 = vpop.xlane.xlu0 %585
  %v587 = vsel %vm39, %v583, 0.0
  %588 = vadd.xlane.f32.xlu0 %v587
  %v589 = vpop.xlane.xlu0 %588
  %v590 = vmul.f32 %v586, %v49
  %v591 = vmul.f32 %v589, %v49
  %v592 = vsub.f32 %v582, %v590
  %v593 = vsub.f32 %v583, %v591
  %v594 = vmul.f32 %v592, %v592
  %v595 = vmul.f32 %v593, %v593
  %v596 = vsel %vm35, %v594, 0.0
  %597 = vadd.xlane.f32.xlu0 %v596
  %v598 = vpop.xlane.xlu0 %597
  %v599 = vsel %vm39, %v595, 0.0
  %600 = vadd.xlane.f32.xlu0 %v599
  %v601 = vpop.xlane.xlu0 %600
  %v602 = vmul.f32 %v598, %v49
  %v603 = vmul.f32 %v601, %v49
  %v604 = vadd.f32 %v602, 1e-05
  %v605 = vadd.f32 %v603, 1e-05
  %v606 = vrsqrt.pop %v604
  %v607 = vmul.f32 %v606, %v604
  %v608 = vmul.f32 %v607, %v606
  %v609 = vmul.f32 0.5, %v608
  %v610 = vsub.f32 1.5, %v609
  %v611 = vmul.f32 %v606, %v610
  %vm612 = vweird.f32 %v604
  %vm613 = vweird.f32 %v606
  %vm614 = vmor %vm612, %vm613
  %v615 = vsel %vm614, %v606, %v611
  %v616 = vrsqrt.pop %v605
  %v617 = vmul.f32 %v616, %v605
  %v618 = vmul.f32 %v617, %v616
  %v619 = vmul.f32 0.5, %v618
  %v620 = vsub.f32 1.5, %v619
  %v621 = vmul.f32 %v616, %v620
  %vm622 = vweird.f32 %v605
  %vm623 = vweird.f32 %v616
  %vm624 = vmor %vm622, %vm623
  %v625 = vsel %vm624, %v616, %v621
  %v626 = vmul.f32 %v592, %v615
  %v627 = vmul.f32 %v593, %v625
  %v628 = vperm.slane %v22, 0
  %v629 = vmul.f32 %v626, %v628
  %v630 = vmul.f32 %v627, %v628
  %632 = vrot.lane.b32.xlu0 %v628, 64
  %v633 = vpop.permute.xlu0 %632
  %v635 = vadd.f32 %v629, %v633
  %v636 = vadd.f32 %v630, %v633
  %v637 = vpack.c.bf16 %v636, %v635
  %v638 = vld [vmem:[%s2 + $0x80] sm:$0xf]
  %v639 = vld [vmem:[%s2 + $0x88] sm:$0xf]
  %v640 = vld [vmem:[%s2 + $0x90] sm:$0xf]
  %v641 = vld [vmem:[%s2 + $0x98] sm:$0xf]
  %v642 = vld [vmem:[%s2 + $0xa0] sm:$0xf]
  %v643 = vld [vmem:[%s2 + $0xa8] sm:$0xf]
  %v644 = vld [vmem:[%s2 + $0xb0] sm:$0xf]
  %v645 = vld [vmem:[%s2 + $0xb8] sm:$0xf]
  %v646 = vperm.slane %v23, 0
  %v655 = vunpack.c.l.b16 %v638
  %v656 = vunpack.c.l.b16 %v639
  %v657 = vunpack.c.l.b16 %v640
  %v658 = vunpack.c.l.b16 %v641
  %v659 = vunpack.c.l.b16 %v642
  %v660 = vunpack.c.l.b16 %v643
  %v661 = vunpack.c.l.b16 %v644
  %v662 = vunpack.c.l.b16 %v645
  %v663 = vpack.c.b16 %v656, %v655
  %v664 = vpack.c.b16 %v658, %v657
  %v665 = vpack.c.b16 %v660, %v659
  %v666 = vpack.c.b16 %v662, %v661
  %v672 = vsel %vm35, %v637, 0
  %674 = vmatpush.bf16.msra.mxu0 0
  %675 = vmatpush.bf16.msra.mxu0 0
  %676 = vmatpush.bf16.msra.mxu0 0
  %677 = vmatpush.bf16.msra.mxu0 0
  %678 = vmatpush.bf16.msra.mxu0 %v666
  %679 = vmatpush.bf16.msra.mxu0 %v665
  %680 = vmatpush.bf16.msra.mxu0 %v664
  %681 = vmatpush.bf16.msra.mxu0 %v663
  %682 = vmatmul.bf16.gmra.mxu0 %v672
  %v683 = vpop.f32.mrf.mxu0
  %v684 = vadd.f32 %v646, %v683
  %v685 = vpop.f32.mrf.mxu0
  %v686 = vadd.f32 %v646, %v685
  %687 = vdwg.mxu0
  %v688 = vmul.f32 %v684, 0.5
  %v689 = vmul.f32 %v686, 0.5
  %v690 = vmul.f32 %v684, 0.044715
  %v691 = vmul.f32 %v686, 0.044715
  %v692 = vmul.f32 %v690, %v684
  %v693 = vmul.f32 %v691, %v686
  %v694 = vmul.f32 %v692, %v684
  %v695 = vmul.f32 %v693, %v686
  %v696 = vadd.f32 %v684, %v694
  %v697 = vadd.f32 %v686, %v695
  %v698 = vmul.f32 %v696, 0.7978846
  %v699 = vmul.f32 %v697, 0.7978846
  %v700 = vtanh.pop %v698
  %v701 = vtanh.pop %v699
  %v702 = vadd.f32 %v700, 1.0
  %v703 = vadd.f32 %v701, 1.0
  %v704 = vmul.f32 %v688, %v702
  %v705 = vmul.f32 %v689, %v703
  %v706 = vpack.c.bf16 %v705, %v704
  %v707 = vld [vmem:[%s2 + $0xc0] sm:$0xf]
  %v708 = vld [vmem:[%s2 + $0xc8] sm:$0xf]
  %v709 = vld [vmem:[%s2 + $0xd0] sm:$0xf]
  %v710 = vld [vmem:[%s2 + $0xd8] sm:$0xf]
  %v711 = vld [vmem:[%s2 + $0xe0] sm:$0xf]
  %v712 = vld [vmem:[%s2 + $0xe8] sm:$0xf]
  %v713 = vld [vmem:[%s2 + $0xf0] sm:$0xf]
  %v714 = vld [vmem:[%s2 + $0xf8] sm:$0xf]
  %v715 = vld [vmem:[%s2 + $0x100] sm:$0xf]
  %v716 = vld [vmem:[%s2 + $0x108] sm:$0xf]
  %v717 = vld [vmem:[%s2 + $0x110] sm:$0xf]
  %v718 = vld [vmem:[%s2 + $0x118] sm:$0xf]
  %v719 = vld [vmem:[%s2 + $0x120] sm:$0xf]
  %v720 = vld [vmem:[%s2 + $0x128] sm:$0xf]
  %v721 = vld [vmem:[%s2 + $0x130] sm:$0xf]
  %v722 = vld [vmem:[%s2 + $0x138] sm:$0xf]
  %v723 = vperm.slane %v24, 0
  %v740 = vunpack.c.l.b16 %v707
  %v741 = vunpack.c.l.b16 %v708
  %v742 = vunpack.c.l.b16 %v709
  %v743 = vunpack.c.l.b16 %v710
  %v744 = vunpack.c.l.b16 %v711
  %v745 = vunpack.c.l.b16 %v712
  %v746 = vunpack.c.l.b16 %v713
  %v747 = vunpack.c.l.b16 %v714
  %v748 = vunpack.c.l.b16 %v715
  %v749 = vunpack.c.l.b16 %v716
  %v750 = vunpack.c.l.b16 %v717
  %v751 = vunpack.c.l.b16 %v718
  %v752 = vunpack.c.l.b16 %v719
  %v753 = vunpack.c.l.b16 %v720
  %v754 = vunpack.c.l.b16 %v721
  %v755 = vunpack.c.l.b16 %v722
  %v756 = vpack.c.b16 %v741, %v740
  %v757 = vpack.c.b16 %v743, %v742
  %v758 = vpack.c.b16 %v745, %v744
  %v759 = vpack.c.b16 %v747, %v746
  %v760 = vpack.c.b16 %v749, %v748
  %v761 = vpack.c.b16 %v751, %v750
  %v762 = vpack.c.b16 %v753, %v752
  %v763 = vpack.c.b16 %v755, %v754
  %772 = vmatpush.bf16.msra.mxu0 %v763
  %773 = vmatpush.bf16.msra.mxu0 %v762
  %774 = vmatpush.bf16.msra.mxu0 %v761
  %775 = vmatpush.bf16.msra.mxu0 %v760
  %776 = vmatpush.bf16.msra.mxu0 %v759
  %777 = vmatpush.bf16.msra.mxu0 %v758
  %778 = vmatpush.bf16.msra.mxu0 %v757
  %779 = vmatpush.bf16.msra.mxu0 %v756
  %780 = vmatmul.bf16.gmra.mxu0 %v706
  %v781 = vpop.f32.mrf.mxu0
  %v782 = vadd.f32 %v723, %v781
  %v783 = vpop.f32.mrf.mxu0
  %v784 = vadd.f32 %v723, %v783
  %785 = vdwg.mxu0
  %v786 = vadd.f32 %v582, %v782
  %v787 = vadd.f32 %v583, %v784
  %788 = vst.msk [vmem:[%s4] sm:$0xff] %vm35, %v786
  %789 = vst.msk [vmem:[%s4 + $0x8] sm:$0xf] %vm39, %v787
  %v790 = vsel %vm35, %v786, 0.0
  %791 = vadd.xlane.f32.xlu0 %v790
  %v792 = vpop.xlane.xlu0 %791
  %v793 = vsel %vm39, %v787, 0.0
  %794 = vadd.xlane.f32.xlu0 %v793
  %v795 = vpop.xlane.xlu0 %794
  %v796 = vmul.f32 %v792, %v49
  %v797 = vmul.f32 %v795, %v49
  %v798 = vsub.f32 %v786, %v796
  %v799 = vsub.f32 %v787, %v797
  %v800 = vmul.f32 %v798, %v798
  %v801 = vmul.f32 %v799, %v799
  %v802 = vsel %vm35, %v800, 0.0
  %803 = vadd.xlane.f32.xlu0 %v802
  %v804 = vpop.xlane.xlu0 %803
  %v805 = vsel %vm39, %v801, 0.0
  %806 = vadd.xlane.f32.xlu0 %v805
  %v807 = vpop.xlane.xlu0 %806
  %v808 = vmul.f32 %v804, %v49
  %v809 = vmul.f32 %v807, %v49
  %v810 = vadd.f32 %v808, 1e-05
  %v811 = vadd.f32 %v809, 1e-05
  %v812 = vrsqrt.pop %v810
  %v813 = vmul.f32 %v812, %v810
  %v814 = vmul.f32 %v813, %v812
  %v815 = vmul.f32 0.5, %v814
  %v816 = vsub.f32 1.5, %v815
  %v817 = vmul.f32 %v812, %v816
  %vm818 = vweird.f32 %v810
  %vm819 = vweird.f32 %v812
  %vm820 = vmor %vm818, %vm819
  %v821 = vsel %vm820, %v812, %v817
  %v822 = vrsqrt.pop %v811
  %v823 = vmul.f32 %v822, %v811
  %v824 = vmul.f32 %v823, %v822
  %v825 = vmul.f32 0.5, %v824
  %v826 = vsub.f32 1.5, %v825
  %v827 = vmul.f32 %v822, %v826
  %vm828 = vweird.f32 %v811
  %vm829 = vweird.f32 %v822
  %vm830 = vmor %vm828, %vm829
  %v831 = vsel %vm830, %v822, %v827
  %v832 = vmul.f32 %v798, %v821
  %v833 = vmul.f32 %v799, %v831
  %v834 = vperm.slane %v27, 0
  %v835 = vmul.f32 %v832, %v834
  %v836 = vmul.f32 %v833, %v834
  %838 = vrot.lane.b32.xlu0 %v834, 64
  %v839 = vpop.permute.xlu0 %838
  %v841 = vadd.f32 %v835, %v839
  %v842 = vadd.f32 %v836, %v839
  %v843 = vpack.c.bf16 %v842, %v841
  %s844 = scalar_lea.vmem %s2, 320
  %v845 = vld [vmem:[%s844] sm:$0xff]
  %v846 = vld [vmem:[%s844 + $0x8] sm:$0xff]
  %v847 = vld [vmem:[%s844 + $0x10] sm:$0xff]
  %v848 = vld [vmem:[%s844 + $0x18] sm:$0xff]
  %v849 = vld [vmem:[%s844 + $0x20] sm:$0xff]
  %v850 = vld [vmem:[%s844 + $0x28] sm:$0xff]
  %v851 = vld [vmem:[%s844 + $0x30] sm:$0xff]
  %v852 = vld [vmem:[%s844 + $0x38] sm:$0xff]
  %v861 = vunpack.c.l.b16 %v845
  %v862 = vunpack.c.h.b16 %v845
  %v863 = vunpack.c.l.b16 %v846
  %v864 = vunpack.c.h.b16 %v846
  %v865 = vunpack.c.l.b16 %v847
  %v866 = vunpack.c.h.b16 %v847
  %v867 = vunpack.c.l.b16 %v848
  %v868 = vunpack.c.h.b16 %v848
  %v869 = vunpack.c.l.b16 %v849
  %v870 = vunpack.c.h.b16 %v849
  %v871 = vunpack.c.l.b16 %v850
  %v872 = vunpack.c.h.b16 %v850
  %v873 = vunpack.c.l.b16 %v851
  %v874 = vunpack.c.h.b16 %v851
  %v875 = vunpack.c.l.b16 %v852
  %v876 = vunpack.c.h.b16 %v852
  %v877 = vpack.c.b16 %v863, %v861
  %v878 = vpack.c.b16 %v864, %v862
  %v879 = vpack.c.b16 %v867, %v865
  %v880 = vpack.c.b16 %v868, %v866
  %v881 = vpack.c.b16 %v871, %v869
  %v882 = vpack.c.b16 %v872, %v870
  %v883 = vpack.c.b16 %v875, %v873
  %v884 = vpack.c.b16 %v876, %v874
  %v894 = vsel %vm35, %v843, 0
  %896 = vmatpush.bf16.msra.mxu0 0
  %897 = vmatpush.bf16.msra.mxu0 0
  %898 = vmatpush.bf16.msra.mxu0 0
  %899 = vmatpush.bf16.msra.mxu0 0
  %900 = vmatpush.bf16.msra.mxu0 %v883
  %901 = vmatpush.bf16.msra.mxu0 %v881
  %902 = vmatpush.bf16.msra.mxu0 %v879
  %903 = vmatpush.bf16.msra.mxu0 %v877
  %904 = vmatmul.bf16.gmra.mxu0 %v894
  %v905 = vpop.f32.mrf.mxu0
  %v906 = vadd.f32 0.0, %v905
  %v907 = vpop.f32.mrf.mxu0
  %v908 = vadd.f32 0.0, %v907
  %909 = vdwg.mxu0
  %910 = vmatpush.bf16.msra.mxu0 0
  %911 = vmatpush.bf16.msra.mxu0 0
  %912 = vmatpush.bf16.msra.mxu0 0
  %913 = vmatpush.bf16.msra.mxu0 0
  %914 = vmatpush.bf16.msra.mxu0 %v884
  %915 = vmatpush.bf16.msra.mxu0 %v882
  %916 = vmatpush.bf16.msra.mxu0 %v880
  %917 = vmatpush.bf16.msra.mxu0 %v878
  %918 = vmatmul.bf16.gmra.mxu0 %v894
  %v919 = vpop.f32.mrf.mxu0
  %v920 = vadd.f32 0.0, %v919
  %v921 = vpop.f32.mrf.mxu0
  %v922 = vadd.f32 0.0, %v921
  %923 = vdwg.mxu0
  %v924 = vperm.slane %v25, 0
  %v925 = vadd.f32 %v906, %v924
  %v926 = vadd.f32 %v908, %v924
  %v927 = vperm.slane %v26, 0
  %v928 = vadd.f32 %v920, %v927
  %v929 = vadd.f32 %v922, %v927
  %v930 = vpack.c.bf16 %v928, %v928
  %v931 = vpack.c.bf16 %v929, %v929
  %v932 = vpack.c.bf16 %v926, %v925
  %934 = vrot.lane.b32.xlu0 %v932, 64
  %v935 = vpop.permute.xlu0 %934
  %v937 = vsel %vm189, %v932, 0
  %v940 = vsel %vm189, %v935, 0
  %942 = vmatpush.bf16.xpose.msra.mxu0 0
  %943 = vmatpush.bf16.xpose.msra.mxu0 0
  %944 = vmatpush.bf16.xpose.msra.mxu0 0
  %945 = vmatpush.bf16.xpose.msra.mxu0 0
  %946 = vmatpush.bf16.xpose.msra.mxu0 0
  %947 = vmatpush.bf16.xpose.msra.mxu0 0
  %948 = vmatpush.bf16.xpose.msra.mxu0 0
  %949 = vmatpush.bf16.xpose.msra.mxu0 %v940
  %950 = vmatmul.bf16.gmra.mxu0 %v937
  %v951 = vpop.f32.mrf.mxu0
  %v952 = vadd.f32 %v33, %v951
  %v953 = vpop.f32.mrf.mxu0
  %v954 = vadd.f32 %v34, %v953
  %955 = vdwg.mxu0
  %v956 = vsel %vm210, %v952, -inf
  %957 = vmax.xlane.f32.xlu0 %v956
  %v958 = vpop.xlane.xlu0 %957
  %v959 = vsel %vm214, %v954, -inf
  %960 = vmax.xlane.f32.xlu0 %v959
  %v961 = vpop.xlane.xlu0 %960
  %v962 = vsub.f32 %v952, %v958
  %v963 = vsub.f32 %v954, %v961
  %v964 = vmul.f32 %v962, 1.442695
  %v965 = vpow.pop %v964
  %v966 = vmul.f32 %v963, 1.442695
  %v967 = vpow.pop %v966
  %v968 = vsel %vm210, %v965, 0.0
  %969 = vadd.xlane.f32.xlu0 %v968
  %v970 = vpop.xlane.xlu0 %969
  %v971 = vsel %vm214, %v967, 0.0
  %972 = vadd.xlane.f32.xlu0 %v971
  %v973 = vpop.xlane.xlu0 %972
  %v974 = vrcp.pop %v970
  %v975 = vrcp.pop %v973
  %v976 = vmul.f32 %v965, %v974
  %v977 = vmul.f32 %v967, %v975
  %v978 = vpack.c.bf16 %v977, %v976
  %v981 = vunpack.c.l.b16 %v930
  %v982 = vunpack.c.l.b16 %v931
  %v983 = vpack.c.b16 %v982, %v981
  %v985 = vsel %vm210, %v978, 0
  %v988 = vsel %vm243, %v983, 0
  %990 = vmatpush.bf16.msra.mxu0 0
  %991 = vmatpush.bf16.msra.mxu0 0
  %992 = vmatpush.bf16.msra.mxu0 0
  %993 = vmatpush.bf16.msra.mxu0 0
  %994 = vmatpush.bf16.msra.mxu0 0
  %995 = vmatpush.bf16.msra.mxu0 0
  %996 = vmatpush.bf16.msra.mxu0 0
  %997 = vmatpush.bf16.msra.mxu0 %v988
  %998 = vmatmul.bf16.gmra.mxu0 %v985
  %v999 = vpop.f32.mrf.mxu0
  %v1000 = vadd.f32 0.0, %v999
  %v1001 = vpop.f32.mrf.mxu0
  %v1002 = vadd.f32 0.0, %v1001
  %1003 = vdwg.mxu0
  %v1004 = vld [vmem:[%s844 + $0x40] sm:$0xf]
  %v1005 = vld [vmem:[%s844 + $0x48] sm:$0xf]
  %v1006 = vpack.c.bf16 %v1002, %v1000
  %1007 = vrot.lane.b32.xlu0 %v932, 112
  %v1008 = vpop.permute.xlu0 %1007
  %1009 = vrot.lane.b32.xlu0 %v932, 48
  %v1010 = vpop.permute.xlu0 %1009
  %v1012 = vsel %vm189, %v1008, 0
  %v1015 = vsel %vm189, %v1010, 0
  %1017 = vmatpush.bf16.xpose.msra.mxu0 0
  %1018 = vmatpush.bf16.xpose.msra.mxu0 0
  %1019 = vmatpush.bf16.xpose.msra.mxu0 0
  %1020 = vmatpush.bf16.xpose.msra.mxu0 0
  %1021 = vmatpush.bf16.xpose.msra.mxu0 0
  %1022 = vmatpush.bf16.xpose.msra.mxu0 0
  %1023 = vmatpush.bf16.xpose.msra.mxu0 0
  %1024 = vmatpush.bf16.xpose.msra.mxu0 %v1015
  %1025 = vmatmul.bf16.gmra.mxu0 %v1012
  %v1026 = vpop.f32.mrf.mxu0
  %v1027 = vadd.f32 %v33, %v1026
  %v1028 = vpop.f32.mrf.mxu0
  %v1029 = vadd.f32 %v34, %v1028
  %1030 = vdwg.mxu0
  %v1031 = vsel %vm210, %v1027, -inf
  %1032 = vmax.xlane.f32.xlu0 %v1031
  %v1033 = vpop.xlane.xlu0 %1032
  %v1034 = vsel %vm214, %v1029, -inf
  %1035 = vmax.xlane.f32.xlu0 %v1034
  %v1036 = vpop.xlane.xlu0 %1035
  %v1037 = vsub.f32 %v1027, %v1033
  %v1038 = vsub.f32 %v1029, %v1036
  %v1039 = vmul.f32 %v1037, 1.442695
  %v1040 = vpow.pop %v1039
  %v1041 = vmul.f32 %v1038, 1.442695
  %v1042 = vpow.pop %v1041
  %v1043 = vsel %vm210, %v1040, 0.0
  %1044 = vadd.xlane.f32.xlu0 %v1043
  %v1045 = vpop.xlane.xlu0 %1044
  %v1046 = vsel %vm214, %v1042, 0.0
  %1047 = vadd.xlane.f32.xlu0 %v1046
  %v1048 = vpop.xlane.xlu0 %1047
  %v1049 = vrcp.pop %v1045
  %v1050 = vrcp.pop %v1048
  %v1051 = vmul.f32 %v1040, %v1049
  %v1052 = vmul.f32 %v1042, %v1050
  %v1053 = vpack.c.bf16 %v1052, %v1051
  %1054 = vrot.lane.b32.xlu0 %v983, 112
  %v1055 = vpop.permute.xlu0 %1054
  %v1057 = vsel %vm210, %v1053, 0
  %v1060 = vsel %vm243, %v1055, 0
  %1062 = vmatpush.bf16.msra.mxu0 0
  %1063 = vmatpush.bf16.msra.mxu0 0
  %1064 = vmatpush.bf16.msra.mxu0 0
  %1065 = vmatpush.bf16.msra.mxu0 0
  %1066 = vmatpush.bf16.msra.mxu0 0
  %1067 = vmatpush.bf16.msra.mxu0 0
  %1068 = vmatpush.bf16.msra.mxu0 0
  %1069 = vmatpush.bf16.msra.mxu0 %v1060
  %1070 = vmatmul.bf16.gmra.mxu0 %v1057
  %v1071 = vpop.f32.mrf.mxu0
  %v1072 = vadd.f32 0.0, %v1071
  %v1073 = vpop.f32.mrf.mxu0
  %v1074 = vadd.f32 0.0, %v1073
  %1075 = vdwg.mxu0
  %v1076 = vld [vmem:[%s844 + $0x50] sm:$0xf]
  %v1077 = vld [vmem:[%s844 + $0x58] sm:$0xf]
  %v1078 = vpack.c.bf16 %v1074, %v1072
  %v1081 = vunpack.c.l.b16 %v1076
  %v1082 = vunpack.c.l.b16 %v1077
  %v1083 = vpack.c.b16 %v1082, %v1081
  %v1086 = vsel %vm189, %v1078, 0
  %1088 = vmatpush.bf16.msra.mxu0 0
  %1089 = vmatpush.bf16.msra.mxu0 0
  %1090 = vmatpush.bf16.msra.mxu0 0
  %1091 = vmatpush.bf16.msra.mxu0 0
  %1092 = vmatpush.bf16.msra.mxu0 0
  %1093 = vmatpush.bf16.msra.mxu0 0
  %1094 = vmatpush.bf16.msra.mxu0 0
  %1095 = vmatpush.bf16.msra.mxu0 %v1083
  %1096 = vmatmul.bf16.gmra.mxu0 %v1086
  %v1097 = vpop.f32.mrf.mxu0
  %v1098 = vadd.f32 0.0, %v1097
  %v1099 = vpop.f32.mrf.mxu0
  %v1100 = vadd.f32 0.0, %v1099
  %1101 = vdwg.mxu0
  %v1104 = vunpack.c.l.b16 %v1004
  %v1105 = vunpack.c.l.b16 %v1005
  %v1106 = vpack.c.b16 %v1105, %v1104
  %v1109 = vsel %vm189, %v1006, 0
  %1111 = vmatpush.bf16.msra.mxu0 0
  %1112 = vmatpush.bf16.msra.mxu0 0
  %1113 = vmatpush.bf16.msra.mxu0 0
  %1114 = vmatpush.bf16.msra.mxu0 0
  %1115 = vmatpush.bf16.msra.mxu0 0
  %1116 = vmatpush.bf16.msra.mxu0 0
  %1117 = vmatpush.bf16.msra.mxu0 0
  %1118 = vmatpush.bf16.msra.mxu0 %v1106
  %1119 = vmatmul.bf16.gmra.mxu0 %v1109
  %v1120 = vpop.f32.mrf.mxu0
  %v1121 = vadd.f32 %v1098, %v1120
  %v1122 = vpop.f32.mrf.mxu0
  %v1123 = vadd.f32 %v1100, %v1122
  %1124 = vdwg.mxu0
  %1125 = vrot.lane.b32.xlu0 %v932, 96
  %v1126 = vpop.permute.xlu0 %1125
  %1127 = vrot.lane.b32.xlu0 %v932, 32
  %v1128 = vpop.permute.xlu0 %1127
  %v1130 = vsel %vm189, %v1126, 0
  %v1133 = vsel %vm189, %v1128, 0
  %1135 = vmatpush.bf16.xpose.msra.mxu0 0
  %1136 = vmatpush.bf16.xpose.msra.mxu0 0
  %1137 = vmatpush.bf16.xpose.msra.mxu0 0
  %1138 = vmatpush.bf16.xpose.msra.mxu0 0
  %1139 = vmatpush.bf16.xpose.msra.mxu0 0
  %1140 = vmatpush.bf16.xpose.msra.mxu0 0
  %1141 = vmatpush.bf16.xpose.msra.mxu0 0
  %1142 = vmatpush.bf16.xpose.msra.mxu0 %v1133
  %1143 = vmatmul.bf16.gmra.mxu0 %v1130
  %v1144 = vpop.f32.mrf.mxu0
  %v1145 = vadd.f32 %v33, %v1144
  %v1146 = vpop.f32.mrf.mxu0
  %v1147 = vadd.f32 %v34, %v1146
  %1148 = vdwg.mxu0
  %v1149 = vsel %vm210, %v1145, -inf
  %1150 = vmax.xlane.f32.xlu0 %v1149
  %v1151 = vpop.xlane.xlu0 %1150
  %v1152 = vsel %vm214, %v1147, -inf
  %1153 = vmax.xlane.f32.xlu0 %v1152
  %v1154 = vpop.xlane.xlu0 %1153
  %v1155 = vsub.f32 %v1145, %v1151
  %v1156 = vsub.f32 %v1147, %v1154
  %v1157 = vmul.f32 %v1155, 1.442695
  %v1158 = vpow.pop %v1157
  %v1159 = vmul.f32 %v1156, 1.442695
  %v1160 = vpow.pop %v1159
  %v1161 = vsel %vm210, %v1158, 0.0
  %1162 = vadd.xlane.f32.xlu0 %v1161
  %v1163 = vpop.xlane.xlu0 %1162
  %v1164 = vsel %vm214, %v1160, 0.0
  %1165 = vadd.xlane.f32.xlu0 %v1164
  %v1166 = vpop.xlane.xlu0 %1165
  %v1167 = vrcp.pop %v1163
  %v1168 = vrcp.pop %v1166
  %v1169 = vmul.f32 %v1158, %v1167
  %v1170 = vmul.f32 %v1160, %v1168
  %v1171 = vpack.c.bf16 %v1170, %v1169
  %1172 = vrot.lane.b32.xlu0 %v983, 96
  %v1173 = vpop.permute.xlu0 %1172
  %v1175 = vsel %vm210, %v1171, 0
  %v1178 = vsel %vm243, %v1173, 0
  %1180 = vmatpush.bf16.msra.mxu0 0
  %1181 = vmatpush.bf16.msra.mxu0 0
  %1182 = vmatpush.bf16.msra.mxu0 0
  %1183 = vmatpush.bf16.msra.mxu0 0
  %1184 = vmatpush.bf16.msra.mxu0 0
  %1185 = vmatpush.bf16.msra.mxu0 0
  %1186 = vmatpush.bf16.msra.mxu0 0
  %1187 = vmatpush.bf16.msra.mxu0 %v1178
  %1188 = vmatmul.bf16.gmra.mxu0 %v1175
  %v1189 = vpop.f32.mrf.mxu0
  %v1190 = vadd.f32 0.0, %v1189
  %v1191 = vpop.f32.mrf.mxu0
  %v1192 = vadd.f32 0.0, %v1191
  %1193 = vdwg.mxu0
  %v1194 = vld [vmem:[%s844 + $0x60] sm:$0xf]
  %v1195 = vld [vmem:[%s844 + $0x68] sm:$0xf]
  %v1196 = vpack.c.bf16 %v1192, %v1190
  %v1199 = vunpack.c.l.b16 %v1194
  %v1200 = vunpack.c.l.b16 %v1195
  %v1201 = vpack.c.b16 %v1200, %v1199
  %v1204 = vsel %vm189, %v1196, 0
  %1206 = vmatpush.bf16.msra.mxu0 0
  %1207 = vmatpush.bf16.msra.mxu0 0
  %1208 = vmatpush.bf16.msra.mxu0 0
  %1209 = vmatpush.bf16.msra.mxu0 0
  %1210 = vmatpush.bf16.msra.mxu0 0
  %1211 = vmatpush.bf16.msra.mxu0 0
  %1212 = vmatpush.bf16.msra.mxu0 0
  %1213 = vmatpush.bf16.msra.mxu0 %v1201
  %1214 = vmatmul.bf16.gmra.mxu0 %v1204
  %v1215 = vpop.f32.mrf.mxu0
  %v1216 = vadd.f32 0.0, %v1215
  %v1217 = vpop.f32.mrf.mxu0
  %v1218 = vadd.f32 0.0, %v1217
  %1219 = vdwg.mxu0
  %v1220 = vadd.f32 %v1121, %v1216
  %v1221 = vadd.f32 %v1123, %v1218
  %1222 = vrot.lane.b32.xlu0 %v932, 80
  %v1223 = vpop.permute.xlu0 %1222
  %1224 = vrot.lane.b32.xlu0 %v932, 16
  %v1225 = vpop.permute.xlu0 %1224
  %v1227 = vsel %vm189, %v1223, 0
  %v1230 = vsel %vm189, %v1225, 0
  %1232 = vmatpush.bf16.xpose.msra.mxu0 0
  %1233 = vmatpush.bf16.xpose.msra.mxu0 0
  %1234 = vmatpush.bf16.xpose.msra.mxu0 0
  %1235 = vmatpush.bf16.xpose.msra.mxu0 0
  %1236 = vmatpush.bf16.xpose.msra.mxu0 0
  %1237 = vmatpush.bf16.xpose.msra.mxu0 0
  %1238 = vmatpush.bf16.xpose.msra.mxu0 0
  %1239 = vmatpush.bf16.xpose.msra.mxu0 %v1230
  %1240 = vmatmul.bf16.gmra.mxu0 %v1227
  %v1241 = vpop.f32.mrf.mxu0
  %v1242 = vadd.f32 %v33, %v1241
  %v1243 = vpop.f32.mrf.mxu0
  %v1244 = vadd.f32 %v34, %v1243
  %1245 = vdwg.mxu0
  %v1246 = vsel %vm210, %v1242, -inf
  %1247 = vmax.xlane.f32.xlu0 %v1246
  %v1248 = vpop.xlane.xlu0 %1247
  %v1249 = vsel %vm214, %v1244, -inf
  %1250 = vmax.xlane.f32.xlu0 %v1249
  %v1251 = vpop.xlane.xlu0 %1250
  %v1252 = vsub.f32 %v1242, %v1248
  %v1253 = vsub.f32 %v1244, %v1251
  %v1254 = vmul.f32 %v1252, 1.442695
  %v1255 = vpow.pop %v1254
  %v1256 = vmul.f32 %v1253, 1.442695
  %v1257 = vpow.pop %v1256
  %v1258 = vsel %vm210, %v1255, 0.0
  %1259 = vadd.xlane.f32.xlu0 %v1258
  %v1260 = vpop.xlane.xlu0 %1259
  %v1261 = vsel %vm214, %v1257, 0.0
  %1262 = vadd.xlane.f32.xlu0 %v1261
  %v1263 = vpop.xlane.xlu0 %1262
  %v1264 = vrcp.pop %v1260
  %v1265 = vrcp.pop %v1263
  %v1266 = vmul.f32 %v1255, %v1264
  %v1267 = vmul.f32 %v1257, %v1265
  %v1268 = vpack.c.bf16 %v1267, %v1266
  %1269 = vrot.lane.b32.xlu0 %v983, 80
  %v1270 = vpop.permute.xlu0 %1269
  %v1272 = vsel %vm210, %v1268, 0
  %v1275 = vsel %vm243, %v1270, 0
  %1277 = vmatpush.bf16.msra.mxu0 0
  %1278 = vmatpush.bf16.msra.mxu0 0
  %1279 = vmatpush.bf16.msra.mxu0 0
  %1280 = vmatpush.bf16.msra.mxu0 0
  %1281 = vmatpush.bf16.msra.mxu0 0
  %1282 = vmatpush.bf16.msra.mxu0 0
  %1283 = vmatpush.bf16.msra.mxu0 0
  %1284 = vmatpush.bf16.msra.mxu0 %v1275
  %1285 = vmatmul.bf16.gmra.mxu0 %v1272
  %v1286 = vpop.f32.mrf.mxu0
  %v1287 = vadd.f32 0.0, %v1286
  %v1288 = vpop.f32.mrf.mxu0
  %v1289 = vadd.f32 0.0, %v1288
  %1290 = vdwg.mxu0
  %v1291 = vld [vmem:[%s844 + $0x70] sm:$0xf]
  %v1292 = vld [vmem:[%s844 + $0x78] sm:$0xf]
  %v1293 = vpack.c.bf16 %v1289, %v1287
  %v1296 = vunpack.c.l.b16 %v1291
  %v1297 = vunpack.c.l.b16 %v1292
  %v1298 = vpack.c.b16 %v1297, %v1296
  %v1301 = vsel %vm189, %v1293, 0
  %1303 = vmatpush.bf16.msra.mxu0 0
  %1304 = vmatpush.bf16.msra.mxu0 0
  %1305 = vmatpush.bf16.msra.mxu0 0
  %1306 = vmatpush.bf16.msra.mxu0 0
  %1307 = vmatpush.bf16.msra.mxu0 0
  %1308 = vmatpush.bf16.msra.mxu0 0
  %1309 = vmatpush.bf16.msra.mxu0 0
  %1310 = vmatpush.bf16.msra.mxu0 %v1298
  %1311 = vmatmul.bf16.gmra.mxu0 %v1301
  %v1312 = vpop.f32.mrf.mxu0
  %v1313 = vadd.f32 0.0, %v1312
  %v1314 = vpop.f32.mrf.mxu0
  %v1315 = vadd.f32 0.0, %v1314
  %1316 = vdwg.mxu0
  %v1317 = vadd.f32 %v1220, %v1313
  %v1318 = vadd.f32 %v1221, %v1315
  %v1319 = vadd.f32 %v786, %v1317
  %v1320 = vadd.f32 %v787, %v1318
  %1322 = vrot.lane.b32.xlu0 %v927, 64
  %v1323 = vpop.permute.xlu0 %1322
  %v1325 = vadd.f32 %v1319, %v1323
  %v1326 = vadd.f32 %v1320, %v1323
  %v1327 = vsel %vm35, %v1325, 0.0
  %1328 = vadd.xlane.f32.xlu0 %v1327
  %v1329 = vpop.xlane.xlu0 %1328
  %v1330 = vsel %vm39, %v1326, 0.0
  %1331 = vadd.xlane.f32.xlu0 %v1330
  %v1332 = vpop.xlane.xlu0 %1331
  %v1333 = vmul.f32 %v1329, %v49
  %v1334 = vmul.f32 %v1332, %v49
  %v1335 = vsub.f32 %v1325, %v1333
  %v1336 = vsub.f32 %v1326, %v1334
  %v1337 = vmul.f32 %v1335, %v1335
  %v1338 = vmul.f32 %v1336, %v1336
  %v1339 = vsel %vm35, %v1337, 0.0
  %1340 = vadd.xlane.f32.xlu0 %v1339
  %v1341 = vpop.xlane.xlu0 %1340
  %v1342 = vsel %vm39, %v1338, 0.0
  %1343 = vadd.xlane.f32.xlu0 %v1342
  %v1344 = vpop.xlane.xlu0 %1343
  %v1345 = vmul.f32 %v1341, %v49
  %v1346 = vmul.f32 %v1344, %v49
  %v1347 = vadd.f32 %v1345, 1e-05
  %v1348 = vadd.f32 %v1346, 1e-05
  %v1349 = vrsqrt.pop %v1347
  %v1350 = vmul.f32 %v1349, %v1347
  %v1351 = vmul.f32 %v1350, %v1349
  %v1352 = vmul.f32 0.5, %v1351
  %v1353 = vsub.f32 1.5, %v1352
  %v1354 = vmul.f32 %v1349, %v1353
  %vm1355 = vweird.f32 %v1347
  %vm1356 = vweird.f32 %v1349
  %vm1357 = vmor %vm1355, %vm1356
  %v1358 = vsel %vm1357, %v1349, %v1354
  %v1359 = vrsqrt.pop %v1348
  %v1360 = vmul.f32 %v1359, %v1348
  %v1361 = vmul.f32 %v1360, %v1359
  %v1362 = vmul.f32 0.5, %v1361
  %v1363 = vsub.f32 1.5, %v1362
  %v1364 = vmul.f32 %v1359, %v1363
  %vm1365 = vweird.f32 %v1348
  %vm1366 = vweird.f32 %v1359
  %vm1367 = vmor %vm1365, %vm1366
  %v1368 = vsel %vm1367, %v1359, %v1364
  %v1369 = vmul.f32 %v1335, %v1358
  %v1370 = vmul.f32 %v1336, %v1368
  %v1371 = vperm.slane %v28, 0
  %v1372 = vmul.f32 %v1369, %v1371
  %v1373 = vmul.f32 %v1370, %v1371
  %1375 = vrot.lane.b32.xlu0 %v1371, 64
  %v1376 = vpop.permute.xlu0 %1375
  %v1378 = vadd.f32 %v1372, %v1376
  %v1379 = vadd.f32 %v1373, %v1376
  %v1380 = vpack.c.bf16 %v1379, %v1378
  %v1381 = vld [vmem:[%s844 + $0x80] sm:$0xf]
  %v1382 = vld [vmem:[%s844 + $0x88] sm:$0xf]
  %v1383 = vld [vmem:[%s844 + $0x90] sm:$0xf]
  %v1384 = vld [vmem:[%s844 + $0x98] sm:$0xf]
  %v1385 = vld [vmem:[%s844 + $0xa0] sm:$0xf]
  %v1386 = vld [vmem:[%s844 + $0xa8] sm:$0xf]
  %v1387 = vld [vmem:[%s844 + $0xb0] sm:$0xf]
  %v1388 = vld [vmem:[%s844 + $0xb8] sm:$0xf]
  %v1389 = vperm.slane %v29, 0
  %v1398 = vunpack.c.l.b16 %v1381
  %v1399 = vunpack.c.l.b16 %v1382
  %v1400 = vunpack.c.l.b16 %v1383
  %v1401 = vunpack.c.l.b16 %v1384
  %v1402 = vunpack.c.l.b16 %v1385
  %v1403 = vunpack.c.l.b16 %v1386
  %v1404 = vunpack.c.l.b16 %v1387
  %v1405 = vunpack.c.l.b16 %v1388
  %v1406 = vpack.c.b16 %v1399, %v1398
  %v1407 = vpack.c.b16 %v1401, %v1400
  %v1408 = vpack.c.b16 %v1403, %v1402
  %v1409 = vpack.c.b16 %v1405, %v1404
  %v1415 = vsel %vm35, %v1380, 0
  %1417 = vmatpush.bf16.msra.mxu0 0
  %1418 = vmatpush.bf16.msra.mxu0 0
  %1419 = vmatpush.bf16.msra.mxu0 0
  %1420 = vmatpush.bf16.msra.mxu0 0
  %1421 = vmatpush.bf16.msra.mxu0 %v1409
  %1422 = vmatpush.bf16.msra.mxu0 %v1408
  %1423 = vmatpush.bf16.msra.mxu0 %v1407
  %1424 = vmatpush.bf16.msra.mxu0 %v1406
  %1425 = vmatmul.bf16.gmra.mxu0 %v1415
  %v1426 = vpop.f32.mrf.mxu0
  %v1427 = vadd.f32 %v1389, %v1426
  %v1428 = vpop.f32.mrf.mxu0
  %v1429 = vadd.f32 %v1389, %v1428
  %1430 = vdwg.mxu0
  %v1431 = vmul.f32 %v1427, 0.5
  %v1432 = vmul.f32 %v1429, 0.5
  %v1433 = vmul.f32 %v1427, 0.044715
  %v1434 = vmul.f32 %v1429, 0.044715
  %v1435 = vmul.f32 %v1433, %v1427
  %v1436 = vmul.f32 %v1434, %v1429
  %v1437 = vmul.f32 %v1435, %v1427
  %v1438 = vmul.f32 %v1436, %v1429
  %v1439 = vadd.f32 %v1427, %v1437
  %v1440 = vadd.f32 %v1429, %v1438
  %v1441 = vmul.f32 %v1439, 0.7978846
  %v1442 = vmul.f32 %v1440, 0.7978846
  %v1443 = vtanh.pop %v1441
  %v1444 = vtanh.pop %v1442
  %v1445 = vadd.f32 %v1443, 1.0
  %v1446 = vadd.f32 %v1444, 1.0
  %v1447 = vmul.f32 %v1431, %v1445
  %v1448 = vmul.f32 %v1432, %v1446
  %v1449 = vpack.c.bf16 %v1448, %v1447
  %v1450 = vld [vmem:[%s844 + $0xc0] sm:$0xf]
  %v1451 = vld [vmem:[%s844 + $0xc8] sm:$0xf]
  %v1452 = vld [vmem:[%s844 + $0xd0] sm:$0xf]
  %v1453 = vld [vmem:[%s844 + $0xd8] sm:$0xf]
  %v1454 = vld [vmem:[%s844 + $0xe0] sm:$0xf]
  %v1455 = vld [vmem:[%s844 + $0xe8] sm:$0xf]
  %v1456 = vld [vmem:[%s844 + $0xf0] sm:$0xf]
  %v1457 = vld [vmem:[%s844 + $0xf8] sm:$0xf]
  %v1458 = vld [vmem:[%s844 + $0x100] sm:$0xf]
  %v1459 = vld [vmem:[%s844 + $0x108] sm:$0xf]
  %v1460 = vld [vmem:[%s844 + $0x110] sm:$0xf]
  %v1461 = vld [vmem:[%s844 + $0x118] sm:$0xf]
  %v1462 = vld [vmem:[%s844 + $0x120] sm:$0xf]
  %v1463 = vld [vmem:[%s844 + $0x128] sm:$0xf]
  %v1464 = vld [vmem:[%s844 + $0x130] sm:$0xf]
  %v1465 = vld [vmem:[%s844 + $0x138] sm:$0xf]
  %v1466 = vperm.slane %v30, 0
  %v1483 = vunpack.c.l.b16 %v1450
  %v1484 = vunpack.c.l.b16 %v1451
  %v1485 = vunpack.c.l.b16 %v1452
  %v1486 = vunpack.c.l.b16 %v1453
  %v1487 = vunpack.c.l.b16 %v1454
  %v1488 = vunpack.c.l.b16 %v1455
  %v1489 = vunpack.c.l.b16 %v1456
  %v1490 = vunpack.c.l.b16 %v1457
  %v1491 = vunpack.c.l.b16 %v1458
  %v1492 = vunpack.c.l.b16 %v1459
  %v1493 = vunpack.c.l.b16 %v1460
  %v1494 = vunpack.c.l.b16 %v1461
  %v1495 = vunpack.c.l.b16 %v1462
  %v1496 = vunpack.c.l.b16 %v1463
  %v1497 = vunpack.c.l.b16 %v1464
  %v1498 = vunpack.c.l.b16 %v1465
  %v1499 = vpack.c.b16 %v1484, %v1483
  %v1500 = vpack.c.b16 %v1486, %v1485
  %v1501 = vpack.c.b16 %v1488, %v1487
  %v1502 = vpack.c.b16 %v1490, %v1489
  %v1503 = vpack.c.b16 %v1492, %v1491
  %v1504 = vpack.c.b16 %v1494, %v1493
  %v1505 = vpack.c.b16 %v1496, %v1495
  %v1506 = vpack.c.b16 %v1498, %v1497
  %1515 = vmatpush.bf16.msra.mxu0 %v1506
  %1516 = vmatpush.bf16.msra.mxu0 %v1505
  %1517 = vmatpush.bf16.msra.mxu0 %v1504
  %1518 = vmatpush.bf16.msra.mxu0 %v1503
  %1519 = vmatpush.bf16.msra.mxu0 %v1502
  %1520 = vmatpush.bf16.msra.mxu0 %v1501
  %1521 = vmatpush.bf16.msra.mxu0 %v1500
  %1522 = vmatpush.bf16.msra.mxu0 %v1499
  %1523 = vmatmul.bf16.gmra.mxu0 %v1449
  %v1524 = vpop.f32.mrf.mxu0
  %v1525 = vadd.f32 %v1466, %v1524
  %v1526 = vpop.f32.mrf.mxu0
  %v1527 = vadd.f32 %v1466, %v1526
  %1528 = vdwg.mxu0
  %v1529 = vadd.f32 %v1325, %v1525
  %v1530 = vadd.f32 %v1326, %v1527
  %s1531 = scalar_lea.vmem %s4, 16
  %1532 = vst.msk [vmem:[%s1531] sm:$0xff] %vm35, %v1529
  %1533 = vst.msk [vmem:[%s1531 + $0x8] sm:$0xf] %vm39, %v1530
  %v1534 = vsel %vm35, %v1529, 0.0
  %1535 = vadd.xlane.f32.xlu0 %v1534
  %v1536 = vpop.xlane.xlu0 %1535
  %v1537 = vsel %vm39, %v1530, 0.0
  %1538 = vadd.xlane.f32.xlu0 %v1537
  %v1539 = vpop.xlane.xlu0 %1538
  %v1540 = vmul.f32 %v1536, %v49
  %v1541 = vmul.f32 %v1539, %v49
  %v1542 = vsub.f32 %v1529, %v1540
  %v1543 = vsub.f32 %v1530, %v1541
  %v1544 = vmul.f32 %v1542, %v1542
  %v1545 = vmul.f32 %v1543, %v1543
  %v1546 = vsel %vm35, %v1544, 0.0
  %1547 = vadd.xlane.f32.xlu0 %v1546
  %v1548 = vpop.xlane.xlu0 %1547
  %v1549 = vsel %vm39, %v1545, 0.0
  %1550 = vadd.xlane.f32.xlu0 %v1549
  %v1551 = vpop.xlane.xlu0 %1550
  %v1552 = vmul.f32 %v1548, %v49
  %v1553 = vmul.f32 %v1551, %v49
  %v1554 = vadd.f32 %v1552, 1e-05
  %v1555 = vadd.f32 %v1553, 1e-05
  %v1556 = vrsqrt.pop %v1554
  %v1557 = vmul.f32 %v1556, %v1554
  %v1558 = vmul.f32 %v1557, %v1556
  %v1559 = vmul.f32 0.5, %v1558
  %v1560 = vsub.f32 1.5, %v1559
  %v1561 = vmul.f32 %v1556, %v1560
  %vm1562 = vweird.f32 %v1554
  %vm1563 = vweird.f32 %v1556
  %vm1564 = vmor %vm1562, %vm1563
  %v1565 = vsel %vm1564, %v1556, %v1561
  %v1566 = vrsqrt.pop %v1555
  %v1567 = vmul.f32 %v1566, %v1555
  %v1568 = vmul.f32 %v1567, %v1566
  %v1569 = vmul.f32 0.5, %v1568
  %v1570 = vsub.f32 1.5, %v1569
  %v1571 = vmul.f32 %v1566, %v1570
  %vm1572 = vweird.f32 %v1555
  %vm1573 = vweird.f32 %v1566
  %vm1574 = vmor %vm1572, %vm1573
  %v1575 = vsel %vm1574, %v1566, %v1571
  %v1576 = vmul.f32 %v1542, %v1565
  %v1577 = vmul.f32 %v1543, %v1575
  %v1578 = vperm.slane %v18, 0
  %v1579 = vmul.f32 %v1576, %v1578
  %v1580 = vmul.f32 %v1577, %v1578
  %1582 = vrot.lane.b32.xlu0 %v1578, 64
  %v1583 = vpop.permute.xlu0 %1582
  %v1585 = vadd.f32 %v1579, %v1583
  %v1586 = vadd.f32 %v1580, %v1583
  %s1587 = scalar_lea.vmem %s4, 32
  %1588 = vst.msk [vmem:[%s1587] sm:$0xff] %vm35, %v1585
  %1589 = vst.msk [vmem:[%s1587 + $0x8] sm:$0xf] %vm39, %v1586
  %s1590 = scalar_lea.vmem %s0, 16
  %v1591 = vld [vmem:[%s1590] sm:$0xff]
  %v1592 = vld [vmem:[%s1590 + $0x8] sm:$0xf]
  %s1593 = scalar_lea.vmem %s1, 16
  %v1594 = vld [vmem:[%s1593] sm:$0xff]
  %v1595 = vld [vmem:[%s1593 + $0x8] sm:$0xf]
  %v1596 = vsel %vm35, %v1591, 0.0
  %1597 = vadd.xlane.f32.xlu0 %v1596
  %v1598 = vpop.xlane.xlu0 %1597
  %v1599 = vsel %vm39, %v1592, 0.0
  %1600 = vadd.xlane.f32.xlu0 %v1599
  %v1601 = vpop.xlane.xlu0 %1600
  %v1602 = vmul.f32 %v1598, %v49
  %v1603 = vmul.f32 %v1601, %v49
  %v1604 = vsub.f32 %v1591, %v1602
  %v1605 = vsub.f32 %v1592, %v1603
  %v1606 = vmul.f32 %v1604, %v1604
  %v1607 = vmul.f32 %v1605, %v1605
  %v1608 = vsel %vm35, %v1606, 0.0
  %1609 = vadd.xlane.f32.xlu0 %v1608
  %v1610 = vpop.xlane.xlu0 %1609
  %v1611 = vsel %vm39, %v1607, 0.0
  %1612 = vadd.xlane.f32.xlu0 %v1611
  %v1613 = vpop.xlane.xlu0 %1612
  %v1614 = vmul.f32 %v1610, %v49
  %v1615 = vmul.f32 %v1613, %v49
  %v1616 = vadd.f32 %v1614, 1e-05
  %v1617 = vadd.f32 %v1615, 1e-05
  %v1618 = vrsqrt.pop %v1616
  %v1619 = vmul.f32 %v1618, %v1616
  %v1620 = vmul.f32 %v1619, %v1618
  %v1621 = vmul.f32 0.5, %v1620
  %v1622 = vsub.f32 1.5, %v1621
  %v1623 = vmul.f32 %v1618, %v1622
  %vm1624 = vweird.f32 %v1616
  %vm1625 = vweird.f32 %v1618
  %vm1626 = vmor %vm1624, %vm1625
  %v1627 = vsel %vm1626, %v1618, %v1623
  %v1628 = vrsqrt.pop %v1617
  %v1629 = vmul.f32 %v1628, %v1617
  %v1630 = vmul.f32 %v1629, %v1628
  %v1631 = vmul.f32 0.5, %v1630
  %v1632 = vsub.f32 1.5, %v1631
  %v1633 = vmul.f32 %v1628, %v1632
  %vm1634 = vweird.f32 %v1617
  %vm1635 = vweird.f32 %v1628
  %vm1636 = vmor %vm1634, %vm1635
  %v1637 = vsel %vm1636, %v1628, %v1633
  %v1638 = vmul.f32 %v1604, %v1627
  %v1639 = vmul.f32 %v1605, %v1637
  %v1640 = vmul.f32 %v1638, %v88
  %v1641 = vmul.f32 %v1639, %v88
  %v1642 = vadd.f32 %v1640, %v93
  %v1643 = vadd.f32 %v1641, %v93
  %v1644 = vpack.c.bf16 %v1643, %v1642
  %v1645 = vld [vmem:[%s2] sm:$0xff]
  %v1646 = vld [vmem:[%s2 + $0x8] sm:$0xff]
  %v1647 = vld [vmem:[%s2 + $0x10] sm:$0xff]
  %v1648 = vld [vmem:[%s2 + $0x18] sm:$0xff]
  %v1649 = vld [vmem:[%s2 + $0x20] sm:$0xff]
  %v1650 = vld [vmem:[%s2 + $0x28] sm:$0xff]
  %v1651 = vld [vmem:[%s2 + $0x30] sm:$0xff]
  %v1652 = vld [vmem:[%s2 + $0x38] sm:$0xff]
  %v1661 = vunpack.c.l.b16 %v1645
  %v1662 = vunpack.c.h.b16 %v1645
  %v1663 = vunpack.c.l.b16 %v1646
  %v1664 = vunpack.c.h.b16 %v1646
  %v1665 = vunpack.c.l.b16 %v1647
  %v1666 = vunpack.c.h.b16 %v1647
  %v1667 = vunpack.c.l.b16 %v1648
  %v1668 = vunpack.c.h.b16 %v1648
  %v1669 = vunpack.c.l.b16 %v1649
  %v1670 = vunpack.c.h.b16 %v1649
  %v1671 = vunpack.c.l.b16 %v1650
  %v1672 = vunpack.c.h.b16 %v1650
  %v1673 = vunpack.c.l.b16 %v1651
  %v1674 = vunpack.c.h.b16 %v1651
  %v1675 = vunpack.c.l.b16 %v1652
  %v1676 = vunpack.c.h.b16 %v1652
  %v1677 = vpack.c.b16 %v1663, %v1661
  %v1678 = vpack.c.b16 %v1664, %v1662
  %v1679 = vpack.c.b16 %v1667, %v1665
  %v1680 = vpack.c.b16 %v1668, %v1666
  %v1681 = vpack.c.b16 %v1671, %v1669
  %v1682 = vpack.c.b16 %v1672, %v1670
  %v1683 = vpack.c.b16 %v1675, %v1673
  %v1684 = vpack.c.b16 %v1676, %v1674
  %v1694 = vsel %vm35, %v1644, 0
  %1696 = vmatpush.bf16.msra.mxu0 0
  %1697 = vmatpush.bf16.msra.mxu0 0
  %1698 = vmatpush.bf16.msra.mxu0 0
  %1699 = vmatpush.bf16.msra.mxu0 0
  %1700 = vmatpush.bf16.msra.mxu0 %v1683
  %1701 = vmatpush.bf16.msra.mxu0 %v1681
  %1702 = vmatpush.bf16.msra.mxu0 %v1679
  %1703 = vmatpush.bf16.msra.mxu0 %v1677
  %1704 = vmatmul.bf16.gmra.mxu0 %v1694
  %v1705 = vpop.f32.mrf.mxu0
  %v1706 = vadd.f32 0.0, %v1705
  %v1707 = vpop.f32.mrf.mxu0
  %v1708 = vadd.f32 0.0, %v1707
  %1709 = vdwg.mxu0
  %1710 = vmatpush.bf16.msra.mxu0 0
  %1711 = vmatpush.bf16.msra.mxu0 0
  %1712 = vmatpush.bf16.msra.mxu0 0
  %1713 = vmatpush.bf16.msra.mxu0 0
  %1714 = vmatpush.bf16.msra.mxu0 %v1684
  %1715 = vmatpush.bf16.msra.mxu0 %v1682
  %1716 = vmatpush.bf16.msra.mxu0 %v1680
  %1717 = vmatpush.bf16.msra.mxu0 %v1678
  %1718 = vmatmul.bf16.gmra.mxu0 %v1694
  %v1719 = vpop.f32.mrf.mxu0
  %v1720 = vadd.f32 0.0, %v1719
  %v1721 = vpop.f32.mrf.mxu0
  %v1722 = vadd.f32 0.0, %v1721
  %1723 = vdwg.mxu0
  %v1724 = vadd.f32 %v1706, %v177
  %v1725 = vadd.f32 %v1708, %v177
  %v1726 = vadd.f32 %v1720, %v180
  %v1727 = vadd.f32 %v1722, %v180
  %v1728 = vpack.c.bf16 %v1726, %v1726
  %v1729 = vpack.c.bf16 %v1727, %v1727
  %v1730 = vpack.c.bf16 %v1725, %v1724
  %1732 = vrot.lane.b32.xlu0 %v1730, 64
  %v1733 = vpop.permute.xlu0 %1732
  %v1735 = vsel %vm189, %v1730, 0
  %v1738 = vsel %vm189, %v1733, 0
  %1740 = vmatpush.bf16.xpose.msra.mxu0 0
  %1741 = vmatpush.bf16.xpose.msra.mxu0 0
  %1742 = vmatpush.bf16.xpose.msra.mxu0 0
  %1743 = vmatpush.bf16.xpose.msra.mxu0 0
  %1744 = vmatpush.bf16.xpose.msra.mxu0 0
  %1745 = vmatpush.bf16.xpose.msra.mxu0 0
  %1746 = vmatpush.bf16.xpose.msra.mxu0 0
  %1747 = vmatpush.bf16.xpose.msra.mxu0 %v1738
  %1748 = vmatmul.bf16.gmra.mxu0 %v1735
  %v1749 = vpop.f32.mrf.mxu0
  %v1750 = vadd.f32 %v1594, %v1749
  %v1751 = vpop.f32.mrf.mxu0
  %v1752 = vadd.f32 %v1595, %v1751
  %1753 = vdwg.mxu0
  %v1754 = vsel %vm210, %v1750, -inf
  %1755 = vmax.xlane.f32.xlu0 %v1754
  %v1756 = vpop.xlane.xlu0 %1755
  %v1757 = vsel %vm214, %v1752, -inf
  %1758 = vmax.xlane.f32.xlu0 %v1757
  %v1759 = vpop.xlane.xlu0 %1758
  %v1760 = vsub.f32 %v1750, %v1756
  %v1761 = vsub.f32 %v1752, %v1759
  %v1762 = vmul.f32 %v1760, 1.442695
  %v1763 = vpow.pop %v1762
  %v1764 = vmul.f32 %v1761, 1.442695
  %v1765 = vpow.pop %v1764
  %v1766 = vsel %vm210, %v1763, 0.0
  %1767 = vadd.xlane.f32.xlu0 %v1766
  %v1768 = vpop.xlane.xlu0 %1767
  %v1769 = vsel %vm214, %v1765, 0.0
  %1770 = vadd.xlane.f32.xlu0 %v1769
  %v1771 = vpop.xlane.xlu0 %1770
  %v1772 = vrcp.pop %v1768
  %v1773 = vrcp.pop %v1771
  %v1774 = vmul.f32 %v1763, %v1772
  %v1775 = vmul.f32 %v1765, %v1773
  %v1776 = vpack.c.bf16 %v1775, %v1774
  %v1779 = vunpack.c.l.b16 %v1728
  %v1780 = vunpack.c.l.b16 %v1729
  %v1781 = vpack.c.b16 %v1780, %v1779
  %v1783 = vsel %vm210, %v1776, 0
  %v1786 = vsel %vm243, %v1781, 0
  %1788 = vmatpush.bf16.msra.mxu0 0
  %1789 = vmatpush.bf16.msra.mxu0 0
  %1790 = vmatpush.bf16.msra.mxu0 0
  %1791 = vmatpush.bf16.msra.mxu0 0
  %1792 = vmatpush.bf16.msra.mxu0 0
  %1793 = vmatpush.bf16.msra.mxu0 0
  %1794 = vmatpush.bf16.msra.mxu0 0
  %1795 = vmatpush.bf16.msra.mxu0 %v1786
  %1796 = vmatmul.bf16.gmra.mxu0 %v1783
  %v1797 = vpop.f32.mrf.mxu0
  %v1798 = vadd.f32 0.0, %v1797
  %v1799 = vpop.f32.mrf.mxu0
  %v1800 = vadd.f32 0.0, %v1799
  %1801 = vdwg.mxu0
  %v1802 = vld [vmem:[%s2 + $0x40] sm:$0xf]
  %v1803 = vld [vmem:[%s2 + $0x48] sm:$0xf]
  %v1804 = vpack.c.bf16 %v1800, %v1798
  %1805 = vrot.lane.b32.xlu0 %v1730, 112
  %v1806 = vpop.permute.xlu0 %1805
  %1807 = vrot.lane.b32.xlu0 %v1730, 48
  %v1808 = vpop.permute.xlu0 %1807
  %v1810 = vsel %vm189, %v1806, 0
  %v1813 = vsel %vm189, %v1808, 0
  %1815 = vmatpush.bf16.xpose.msra.mxu0 0
  %1816 = vmatpush.bf16.xpose.msra.mxu0 0
  %1817 = vmatpush.bf16.xpose.msra.mxu0 0
  %1818 = vmatpush.bf16.xpose.msra.mxu0 0
  %1819 = vmatpush.bf16.xpose.msra.mxu0 0
  %1820 = vmatpush.bf16.xpose.msra.mxu0 0
  %1821 = vmatpush.bf16.xpose.msra.mxu0 0
  %1822 = vmatpush.bf16.xpose.msra.mxu0 %v1813
  %1823 = vmatmul.bf16.gmra.mxu0 %v1810
  %v1824 = vpop.f32.mrf.mxu0
  %v1825 = vadd.f32 %v1594, %v1824
  %v1826 = vpop.f32.mrf.mxu0
  %v1827 = vadd.f32 %v1595, %v1826
  %1828 = vdwg.mxu0
  %v1829 = vsel %vm210, %v1825, -inf
  %1830 = vmax.xlane.f32.xlu0 %v1829
  %v1831 = vpop.xlane.xlu0 %1830
  %v1832 = vsel %vm214, %v1827, -inf
  %1833 = vmax.xlane.f32.xlu0 %v1832
  %v1834 = vpop.xlane.xlu0 %1833
  %v1835 = vsub.f32 %v1825, %v1831
  %v1836 = vsub.f32 %v1827, %v1834
  %v1837 = vmul.f32 %v1835, 1.442695
  %v1838 = vpow.pop %v1837
  %v1839 = vmul.f32 %v1836, 1.442695
  %v1840 = vpow.pop %v1839
  %v1841 = vsel %vm210, %v1838, 0.0
  %1842 = vadd.xlane.f32.xlu0 %v1841
  %v1843 = vpop.xlane.xlu0 %1842
  %v1844 = vsel %vm214, %v1840, 0.0
  %1845 = vadd.xlane.f32.xlu0 %v1844
  %v1846 = vpop.xlane.xlu0 %1845
  %v1847 = vrcp.pop %v1843
  %v1848 = vrcp.pop %v1846
  %v1849 = vmul.f32 %v1838, %v1847
  %v1850 = vmul.f32 %v1840, %v1848
  %v1851 = vpack.c.bf16 %v1850, %v1849
  %1852 = vrot.lane.b32.xlu0 %v1781, 112
  %v1853 = vpop.permute.xlu0 %1852
  %v1855 = vsel %vm210, %v1851, 0
  %v1858 = vsel %vm243, %v1853, 0
  %1860 = vmatpush.bf16.msra.mxu0 0
  %1861 = vmatpush.bf16.msra.mxu0 0
  %1862 = vmatpush.bf16.msra.mxu0 0
  %1863 = vmatpush.bf16.msra.mxu0 0
  %1864 = vmatpush.bf16.msra.mxu0 0
  %1865 = vmatpush.bf16.msra.mxu0 0
  %1866 = vmatpush.bf16.msra.mxu0 0
  %1867 = vmatpush.bf16.msra.mxu0 %v1858
  %1868 = vmatmul.bf16.gmra.mxu0 %v1855
  %v1869 = vpop.f32.mrf.mxu0
  %v1870 = vadd.f32 0.0, %v1869
  %v1871 = vpop.f32.mrf.mxu0
  %v1872 = vadd.f32 0.0, %v1871
  %1873 = vdwg.mxu0
  %v1874 = vld [vmem:[%s2 + $0x50] sm:$0xf]
  %v1875 = vld [vmem:[%s2 + $0x58] sm:$0xf]
  %v1876 = vpack.c.bf16 %v1872, %v1870
  %v1879 = vunpack.c.l.b16 %v1874
  %v1880 = vunpack.c.l.b16 %v1875
  %v1881 = vpack.c.b16 %v1880, %v1879
  %v1884 = vsel %vm189, %v1876, 0
  %1886 = vmatpush.bf16.msra.mxu0 0
  %1887 = vmatpush.bf16.msra.mxu0 0
  %1888 = vmatpush.bf16.msra.mxu0 0
  %1889 = vmatpush.bf16.msra.mxu0 0
  %1890 = vmatpush.bf16.msra.mxu0 0
  %1891 = vmatpush.bf16.msra.mxu0 0
  %1892 = vmatpush.bf16.msra.mxu0 0
  %1893 = vmatpush.bf16.msra.mxu0 %v1881
  %1894 = vmatmul.bf16.gmra.mxu0 %v1884
  %v1895 = vpop.f32.mrf.mxu0
  %v1896 = vadd.f32 0.0, %v1895
  %v1897 = vpop.f32.mrf.mxu0
  %v1898 = vadd.f32 0.0, %v1897
  %1899 = vdwg.mxu0
  %v1902 = vunpack.c.l.b16 %v1802
  %v1903 = vunpack.c.l.b16 %v1803
  %v1904 = vpack.c.b16 %v1903, %v1902
  %v1907 = vsel %vm189, %v1804, 0
  %1909 = vmatpush.bf16.msra.mxu0 0
  %1910 = vmatpush.bf16.msra.mxu0 0
  %1911 = vmatpush.bf16.msra.mxu0 0
  %1912 = vmatpush.bf16.msra.mxu0 0
  %1913 = vmatpush.bf16.msra.mxu0 0
  %1914 = vmatpush.bf16.msra.mxu0 0
  %1915 = vmatpush.bf16.msra.mxu0 0
  %1916 = vmatpush.bf16.msra.mxu0 %v1904
  %1917 = vmatmul.bf16.gmra.mxu0 %v1907
  %v1918 = vpop.f32.mrf.mxu0
  %v1919 = vadd.f32 %v1896, %v1918
  %v1920 = vpop.f32.mrf.mxu0
  %v1921 = vadd.f32 %v1898, %v1920
  %1922 = vdwg.mxu0
  %1923 = vrot.lane.b32.xlu0 %v1730, 96
  %v1924 = vpop.permute.xlu0 %1923
  %1925 = vrot.lane.b32.xlu0 %v1730, 32
  %v1926 = vpop.permute.xlu0 %1925
  %v1928 = vsel %vm189, %v1924, 0
  %v1931 = vsel %vm189, %v1926, 0
  %1933 = vmatpush.bf16.xpose.msra.mxu0 0
  %1934 = vmatpush.bf16.xpose.msra.mxu0 0
  %1935 = vmatpush.bf16.xpose.msra.mxu0 0
  %1936 = vmatpush.bf16.xpose.msra.mxu0 0
  %1937 = vmatpush.bf16.xpose.msra.mxu0 0
  %1938 = vmatpush.bf16.xpose.msra.mxu0 0
  %1939 = vmatpush.bf16.xpose.msra.mxu0 0
  %1940 = vmatpush.bf16.xpose.msra.mxu0 %v1931
  %1941 = vmatmul.bf16.gmra.mxu0 %v1928
  %v1942 = vpop.f32.mrf.mxu0
  %v1943 = vadd.f32 %v1594, %v1942
  %v1944 = vpop.f32.mrf.mxu0
  %v1945 = vadd.f32 %v1595, %v1944
  %1946 = vdwg.mxu0
  %v1947 = vsel %vm210, %v1943, -inf
  %1948 = vmax.xlane.f32.xlu0 %v1947
  %v1949 = vpop.xlane.xlu0 %1948
  %v1950 = vsel %vm214, %v1945, -inf
  %1951 = vmax.xlane.f32.xlu0 %v1950
  %v1952 = vpop.xlane.xlu0 %1951
  %v1953 = vsub.f32 %v1943, %v1949
  %v1954 = vsub.f32 %v1945, %v1952
  %v1955 = vmul.f32 %v1953, 1.442695
  %v1956 = vpow.pop %v1955
  %v1957 = vmul.f32 %v1954, 1.442695
  %v1958 = vpow.pop %v1957
  %v1959 = vsel %vm210, %v1956, 0.0
  %1960 = vadd.xlane.f32.xlu0 %v1959
  %v1961 = vpop.xlane.xlu0 %1960
  %v1962 = vsel %vm214, %v1958, 0.0
  %1963 = vadd.xlane.f32.xlu0 %v1962
  %v1964 = vpop.xlane.xlu0 %1963
  %v1965 = vrcp.pop %v1961
  %v1966 = vrcp.pop %v1964
  %v1967 = vmul.f32 %v1956, %v1965
  %v1968 = vmul.f32 %v1958, %v1966
  %v1969 = vpack.c.bf16 %v1968, %v1967
  %1970 = vrot.lane.b32.xlu0 %v1781, 96
  %v1971 = vpop.permute.xlu0 %1970
  %v1973 = vsel %vm210, %v1969, 0
  %v1976 = vsel %vm243, %v1971, 0
  %1978 = vmatpush.bf16.msra.mxu0 0
  %1979 = vmatpush.bf16.msra.mxu0 0
  %1980 = vmatpush.bf16.msra.mxu0 0
  %1981 = vmatpush.bf16.msra.mxu0 0
  %1982 = vmatpush.bf16.msra.mxu0 0
  %1983 = vmatpush.bf16.msra.mxu0 0
  %1984 = vmatpush.bf16.msra.mxu0 0
  %1985 = vmatpush.bf16.msra.mxu0 %v1976
  %1986 = vmatmul.bf16.gmra.mxu0 %v1973
  %v1987 = vpop.f32.mrf.mxu0
  %v1988 = vadd.f32 0.0, %v1987
  %v1989 = vpop.f32.mrf.mxu0
  %v1990 = vadd.f32 0.0, %v1989
  %1991 = vdwg.mxu0
  %v1992 = vld [vmem:[%s2 + $0x60] sm:$0xf]
  %v1993 = vld [vmem:[%s2 + $0x68] sm:$0xf]
  %v1994 = vpack.c.bf16 %v1990, %v1988
  %v1997 = vunpack.c.l.b16 %v1992
  %v1998 = vunpack.c.l.b16 %v1993
  %v1999 = vpack.c.b16 %v1998, %v1997
  %v2002 = vsel %vm189, %v1994, 0
  %2004 = vmatpush.bf16.msra.mxu0 0
  %2005 = vmatpush.bf16.msra.mxu0 0
  %2006 = vmatpush.bf16.msra.mxu0 0
  %2007 = vmatpush.bf16.msra.mxu0 0
  %2008 = vmatpush.bf16.msra.mxu0 0
  %2009 = vmatpush.bf16.msra.mxu0 0
  %2010 = vmatpush.bf16.msra.mxu0 0
  %2011 = vmatpush.bf16.msra.mxu0 %v1999
  %2012 = vmatmul.bf16.gmra.mxu0 %v2002
  %v2013 = vpop.f32.mrf.mxu0
  %v2014 = vadd.f32 0.0, %v2013
  %v2015 = vpop.f32.mrf.mxu0
  %v2016 = vadd.f32 0.0, %v2015
  %2017 = vdwg.mxu0
  %v2018 = vadd.f32 %v1919, %v2014
  %v2019 = vadd.f32 %v1921, %v2016
  %2020 = vrot.lane.b32.xlu0 %v1730, 80
  %v2021 = vpop.permute.xlu0 %2020
  %2022 = vrot.lane.b32.xlu0 %v1730, 16
  %v2023 = vpop.permute.xlu0 %2022
  %v2025 = vsel %vm189, %v2021, 0
  %v2028 = vsel %vm189, %v2023, 0
  %2030 = vmatpush.bf16.xpose.msra.mxu0 0
  %2031 = vmatpush.bf16.xpose.msra.mxu0 0
  %2032 = vmatpush.bf16.xpose.msra.mxu0 0
  %2033 = vmatpush.bf16.xpose.msra.mxu0 0
  %2034 = vmatpush.bf16.xpose.msra.mxu0 0
  %2035 = vmatpush.bf16.xpose.msra.mxu0 0
  %2036 = vmatpush.bf16.xpose.msra.mxu0 0
  %2037 = vmatpush.bf16.xpose.msra.mxu0 %v2028
  %2038 = vmatmul.bf16.gmra.mxu0 %v2025
  %v2039 = vpop.f32.mrf.mxu0
  %v2040 = vadd.f32 %v1594, %v2039
  %v2041 = vpop.f32.mrf.mxu0
  %v2042 = vadd.f32 %v1595, %v2041
  %2043 = vdwg.mxu0
  %v2044 = vsel %vm210, %v2040, -inf
  %2045 = vmax.xlane.f32.xlu0 %v2044
  %v2046 = vpop.xlane.xlu0 %2045
  %v2047 = vsel %vm214, %v2042, -inf
  %2048 = vmax.xlane.f32.xlu0 %v2047
  %v2049 = vpop.xlane.xlu0 %2048
  %v2050 = vsub.f32 %v2040, %v2046
  %v2051 = vsub.f32 %v2042, %v2049
  %v2052 = vmul.f32 %v2050, 1.442695
  %v2053 = vpow.pop %v2052
  %v2054 = vmul.f32 %v2051, 1.442695
  %v2055 = vpow.pop %v2054
  %v2056 = vsel %vm210, %v2053, 0.0
  %2057 = vadd.xlane.f32.xlu0 %v2056
  %v2058 = vpop.xlane.xlu0 %2057
  %v2059 = vsel %vm214, %v2055, 0.0
  %2060 = vadd.xlane.f32.xlu0 %v2059
  %v2061 = vpop.xlane.xlu0 %2060
  %v2062 = vrcp.pop %v2058
  %v2063 = vrcp.pop %v2061
  %v2064 = vmul.f32 %v2053, %v2062
  %v2065 = vmul.f32 %v2055, %v2063
  %v2066 = vpack.c.bf16 %v2065, %v2064
  %2067 = vrot.lane.b32.xlu0 %v1781, 80
  %v2068 = vpop.permute.xlu0 %2067
  %v2070 = vsel %vm210, %v2066, 0
  %v2073 = vsel %vm243, %v2068, 0
  %2075 = vmatpush.bf16.msra.mxu0 0
  %2076 = vmatpush.bf16.msra.mxu0 0
  %2077 = vmatpush.bf16.msra.mxu0 0
  %2078 = vmatpush.bf16.msra.mxu0 0
  %2079 = vmatpush.bf16.msra.mxu0 0
  %2080 = vmatpush.bf16.msra.mxu0 0
  %2081 = vmatpush.bf16.msra.mxu0 0
  %2082 = vmatpush.bf16.msra.mxu0 %v2073
  %2083 = vmatmul.bf16.gmra.mxu0 %v2070
  %v2084 = vpop.f32.mrf.mxu0
  %v2085 = vadd.f32 0.0, %v2084
  %v2086 = vpop.f32.mrf.mxu0
  %v2087 = vadd.f32 0.0, %v2086
  %2088 = vdwg.mxu0
  %v2089 = vld [vmem:[%s2 + $0x70] sm:$0xf]
  %v2090 = vld [vmem:[%s2 + $0x78] sm:$0xf]
  %v2091 = vpack.c.bf16 %v2087, %v2085
  %v2094 = vunpack.c.l.b16 %v2089
  %v2095 = vunpack.c.l.b16 %v2090
  %v2096 = vpack.c.b16 %v2095, %v2094
  %v2099 = vsel %vm189, %v2091, 0
  %2101 = vmatpush.bf16.msra.mxu0 0
  %2102 = vmatpush.bf16.msra.mxu0 0
  %2103 = vmatpush.bf16.msra.mxu0 0
  %2104 = vmatpush.bf16.msra.mxu0 0
  %2105 = vmatpush.bf16.msra.mxu0 0
  %2106 = vmatpush.bf16.msra.mxu0 0
  %2107 = vmatpush.bf16.msra.mxu0 0
  %2108 = vmatpush.bf16.msra.mxu0 %v2096
  %2109 = vmatmul.bf16.gmra.mxu0 %v2099
  %v2110 = vpop.f32.mrf.mxu0
  %v2111 = vadd.f32 0.0, %v2110
  %v2112 = vpop.f32.mrf.mxu0
  %v2113 = vadd.f32 0.0, %v2112
  %2114 = vdwg.mxu0
  %v2115 = vadd.f32 %v2018, %v2111
  %v2116 = vadd.f32 %v2019, %v2113
  %v2117 = vadd.f32 %v1591, %v2115
  %v2118 = vadd.f32 %v1592, %v2116
  %v2119 = vadd.f32 %v2117, %v580
  %v2120 = vadd.f32 %v2118, %v580
  %v2121 = vsel %vm35, %v2119, 0.0
  %2122 = vadd.xlane.f32.xlu0 %v2121
  %v2123 = vpop.xlane.xlu0 %2122
  %v2124 = vsel %vm39, %v2120, 0.0
  %2125 = vadd.xlane.f32.xlu0 %v2124
  %v2126 = vpop.xlane.xlu0 %2125
  %v2127 = vmul.f32 %v2123, %v49
  %v2128 = vmul.f32 %v2126, %v49
  %v2129 = vsub.f32 %v2119, %v2127
  %v2130 = vsub.f32 %v2120, %v2128
  %v2131 = vmul.f32 %v2129, %v2129
  %v2132 = vmul.f32 %v2130, %v2130
  %v2133 = vsel %vm35, %v2131, 0.0
  %2134 = vadd.xlane.f32.xlu0 %v2133
  %v2135 = vpop.xlane.xlu0 %2134
  %v2136 = vsel %vm39, %v2132, 0.0
  %2137 = vadd.xlane.f32.xlu0 %v2136
  %v2138 = vpop.xlane.xlu0 %2137
  %v2139 = vmul.f32 %v2135, %v49
  %v2140 = vmul.f32 %v2138, %v49
  %v2141 = vadd.f32 %v2139, 1e-05
  %v2142 = vadd.f32 %v2140, 1e-05
  %v2143 = vrsqrt.pop %v2141
  %v2144 = vmul.f32 %v2143, %v2141
  %v2145 = vmul.f32 %v2144, %v2143
  %v2146 = vmul.f32 0.5, %v2145
  %v2147 = vsub.f32 1.5, %v2146
  %v2148 = vmul.f32 %v2143, %v2147
  %vm2149 = vweird.f32 %v2141
  %vm2150 = vweird.f32 %v2143
  %vm2151 = vmor %vm2149, %vm2150
  %v2152 = vsel %vm2151, %v2143, %v2148
  %v2153 = vrsqrt.pop %v2142
  %v2154 = vmul.f32 %v2153, %v2142
  %v2155 = vmul.f32 %v2154, %v2153
  %v2156 = vmul.f32 0.5, %v2155
  %v2157 = vsub.f32 1.5, %v2156
  %v2158 = vmul.f32 %v2153, %v2157
  %vm2159 = vweird.f32 %v2142
  %vm2160 = vweird.f32 %v2153
  %vm2161 = vmor %vm2159, %vm2160
  %v2162 = vsel %vm2161, %v2153, %v2158
  %v2163 = vmul.f32 %v2129, %v2152
  %v2164 = vmul.f32 %v2130, %v2162
  %v2165 = vmul.f32 %v2163, %v628
  %v2166 = vmul.f32 %v2164, %v628
  %v2167 = vadd.f32 %v2165, %v633
  %v2168 = vadd.f32 %v2166, %v633
  %v2169 = vpack.c.bf16 %v2168, %v2167
  %v2170 = vld [vmem:[%s2 + $0x80] sm:$0xf]
  %v2171 = vld [vmem:[%s2 + $0x88] sm:$0xf]
  %v2172 = vld [vmem:[%s2 + $0x90] sm:$0xf]
  %v2173 = vld [vmem:[%s2 + $0x98] sm:$0xf]
  %v2174 = vld [vmem:[%s2 + $0xa0] sm:$0xf]
  %v2175 = vld [vmem:[%s2 + $0xa8] sm:$0xf]
  %v2176 = vld [vmem:[%s2 + $0xb0] sm:$0xf]
  %v2177 = vld [vmem:[%s2 + $0xb8] sm:$0xf]
  %v2186 = vunpack.c.l.b16 %v2170
  %v2187 = vunpack.c.l.b16 %v2171
  %v2188 = vunpack.c.l.b16 %v2172
  %v2189 = vunpack.c.l.b16 %v2173
  %v2190 = vunpack.c.l.b16 %v2174
  %v2191 = vunpack.c.l.b16 %v2175
  %v2192 = vunpack.c.l.b16 %v2176
  %v2193 = vunpack.c.l.b16 %v2177
  %v2194 = vpack.c.b16 %v2187, %v2186
  %v2195 = vpack.c.b16 %v2189, %v2188
  %v2196 = vpack.c.b16 %v2191, %v2190
  %v2197 = vpack.c.b16 %v2193, %v2192
  %v2203 = vsel %vm35, %v2169, 0
  %2205 = vmatpush.bf16.msra.mxu0 0
  %2206 = vmatpush.bf16.msra.mxu0 0
  %2207 = vmatpush.bf16.msra.mxu0 0
  %2208 = vmatpush.bf16.msra.mxu0 0
  %2209 = vmatpush.bf16.msra.mxu0 %v2197
  %2210 = vmatpush.bf16.msra.mxu0 %v2196
  %2211 = vmatpush.bf16.msra.mxu0 %v2195
  %2212 = vmatpush.bf16.msra.mxu0 %v2194
  %2213 = vmatmul.bf16.gmra.mxu0 %v2203
  %v2214 = vpop.f32.mrf.mxu0
  %v2215 = vadd.f32 %v646, %v2214
  %v2216 = vpop.f32.mrf.mxu0
  %v2217 = vadd.f32 %v646, %v2216
  %2218 = vdwg.mxu0
  %v2219 = vmul.f32 %v2215, 0.5
  %v2220 = vmul.f32 %v2217, 0.5
  %v2221 = vmul.f32 %v2215, 0.044715
  %v2222 = vmul.f32 %v2217, 0.044715
  %v2223 = vmul.f32 %v2221, %v2215
  %v2224 = vmul.f32 %v2222, %v2217
  %v2225 = vmul.f32 %v2223, %v2215
  %v2226 = vmul.f32 %v2224, %v2217
  %v2227 = vadd.f32 %v2215, %v2225
  %v2228 = vadd.f32 %v2217, %v2226
  %v2229 = vmul.f32 %v2227, 0.7978846
  %v2230 = vmul.f32 %v2228, 0.7978846
  %v2231 = vtanh.pop %v2229
  %v2232 = vtanh.pop %v2230
  %v2233 = vadd.f32 %v2231, 1.0
  %v2234 = vadd.f32 %v2232, 1.0
  %v2235 = vmul.f32 %v2219, %v2233
  %v2236 = vmul.f32 %v2220, %v2234
  %v2237 = vpack.c.bf16 %v2236, %v2235
  %v2238 = vld [vmem:[%s2 + $0xc0] sm:$0xf]
  %v2239 = vld [vmem:[%s2 + $0xc8] sm:$0xf]
  %v2240 = vld [vmem:[%s2 + $0xd0] sm:$0xf]
  %v2241 = vld [vmem:[%s2 + $0xd8] sm:$0xf]
  %v2242 = vld [vmem:[%s2 + $0xe0] sm:$0xf]
  %v2243 = vld [vmem:[%s2 + $0xe8] sm:$0xf]
  %v2244 = vld [vmem:[%s2 + $0xf0] sm:$0xf]
  %v2245 = vld [vmem:[%s2 + $0xf8] sm:$0xf]
  %v2246 = vld [vmem:[%s2 + $0x100] sm:$0xf]
  %v2247 = vld [vmem:[%s2 + $0x108] sm:$0xf]
  %v2248 = vld [vmem:[%s2 + $0x110] sm:$0xf]
  %v2249 = vld [vmem:[%s2 + $0x118] sm:$0xf]
  %v2250 = vld [vmem:[%s2 + $0x120] sm:$0xf]
  %v2251 = vld [vmem:[%s2 + $0x128] sm:$0xf]
  %v2252 = vld [vmem:[%s2 + $0x130] sm:$0xf]
  %v2253 = vld [vmem:[%s2 + $0x138] sm:$0xf]
  %v2270 = vunpack.c.l.b16 %v2238
  %v2271 = vunpack.c.l.b16 %v2239
  %v2272 = vunpack.c.l.b16 %v2240
  %v2273 = vunpack.c.l.b16 %v2241
  %v2274 = vunpack.c.l.b16 %v2242
  %v2275 = vunpack.c.l.b16 %v2243
  %v2276 = vunpack.c.l.b16 %v2244
  %v2277 = vunpack.c.l.b16 %v2245
  %v2278 = vunpack.c.l.b16 %v2246
  %v2279 = vunpack.c.l.b16 %v2247
  %v2280 = vunpack.c.l.b16 %v2248
  %v2281 = vunpack.c.l.b16 %v2249
  %v2282 = vunpack.c.l.b16 %v2250
  %v2283 = vunpack.c.l.b16 %v2251
  %v2284 = vunpack.c.l.b16 %v2252
  %v2285 = vunpack.c.l.b16 %v2253
  %v2286 = vpack.c.b16 %v2271, %v2270
  %v2287 = vpack.c.b16 %v2273, %v2272
  %v2288 = vpack.c.b16 %v2275, %v2274
  %v2289 = vpack.c.b16 %v2277, %v2276
  %v2290 = vpack.c.b16 %v2279, %v2278
  %v2291 = vpack.c.b16 %v2281, %v2280
  %v2292 = vpack.c.b16 %v2283, %v2282
  %v2293 = vpack.c.b16 %v2285, %v2284
  %2302 = vmatpush.bf16.msra.mxu0 %v2293
  %2303 = vmatpush.bf16.msra.mxu0 %v2292
  %2304 = vmatpush.bf16.msra.mxu0 %v2291
  %2305 = vmatpush.bf16.msra.mxu0 %v2290
  %2306 = vmatpush.bf16.msra.mxu0 %v2289
  %2307 = vmatpush.bf16.msra.mxu0 %v2288
  %2308 = vmatpush.bf16.msra.mxu0 %v2287
  %2309 = vmatpush.bf16.msra.mxu0 %v2286
  %2310 = vmatmul.bf16.gmra.mxu0 %v2237
  %v2311 = vpop.f32.mrf.mxu0
  %v2312 = vadd.f32 %v723, %v2311
  %v2313 = vpop.f32.mrf.mxu0
  %v2314 = vadd.f32 %v723, %v2313
  %2315 = vdwg.mxu0
  %v2316 = vadd.f32 %v2119, %v2312
  %v2317 = vadd.f32 %v2120, %v2314
  %s2318 = scalar_lea.vmem %s4, 48
  %2319 = vst.msk [vmem:[%s2318] sm:$0xff] %vm35, %v2316
  %2320 = vst.msk [vmem:[%s2318 + $0x8] sm:$0xf] %vm39, %v2317
  %v2321 = vsel %vm35, %v2316, 0.0
  %2322 = vadd.xlane.f32.xlu0 %v2321
  %v2323 = vpop.xlane.xlu0 %2322
  %v2324 = vsel %vm39, %v2317, 0.0
  %2325 = vadd.xlane.f32.xlu0 %v2324
  %v2326 = vpop.xlane.xlu0 %2325
  %v2327 = vmul.f32 %v2323, %v49
  %v2328 = vmul.f32 %v2326, %v49
  %v2329 = vsub.f32 %v2316, %v2327
  %v2330 = vsub.f32 %v2317, %v2328
  %v2331 = vmul.f32 %v2329, %v2329
  %v2332 = vmul.f32 %v2330, %v2330
  %v2333 = vsel %vm35, %v2331, 0.0
  %2334 = vadd.xlane.f32.xlu0 %v2333
  %v2335 = vpop.xlane.xlu0 %2334
  %v2336 = vsel %vm39, %v2332, 0.0
  %2337 = vadd.xlane.f32.xlu0 %v2336
  %v2338 = vpop.xlane.xlu0 %2337
  %v2339 = vmul.f32 %v2335, %v49
  %v2340 = vmul.f32 %v2338, %v49
  %v2341 = vadd.f32 %v2339, 1e-05
  %v2342 = vadd.f32 %v2340, 1e-05
  %v2343 = vrsqrt.pop %v2341
  %v2344 = vmul.f32 %v2343, %v2341
  %v2345 = vmul.f32 %v2344, %v2343
  %v2346 = vmul.f32 0.5, %v2345
  %v2347 = vsub.f32 1.5, %v2346
  %v2348 = vmul.f32 %v2343, %v2347
  %vm2349 = vweird.f32 %v2341
  %vm2350 = vweird.f32 %v2343
  %vm2351 = vmor %vm2349, %vm2350
  %v2352 = vsel %vm2351, %v2343, %v2348
  %v2353 = vrsqrt.pop %v2342
  %v2354 = vmul.f32 %v2353, %v2342
  %v2355 = vmul.f32 %v2354, %v2353
  %v2356 = vmul.f32 0.5, %v2355
  %v2357 = vsub.f32 1.5, %v2356
  %v2358 = vmul.f32 %v2353, %v2357
  %vm2359 = vweird.f32 %v2342
  %vm2360 = vweird.f32 %v2353
  %vm2361 = vmor %vm2359, %vm2360
  %v2362 = vsel %vm2361, %v2353, %v2358
  %v2363 = vmul.f32 %v2329, %v2352
  %v2364 = vmul.f32 %v2330, %v2362
  %v2365 = vmul.f32 %v2363, %v834
  %v2366 = vmul.f32 %v2364, %v834
  %v2367 = vadd.f32 %v2365, %v839
  %v2368 = vadd.f32 %v2366, %v839
  %v2369 = vpack.c.bf16 %v2368, %v2367
  %v2370 = vld [vmem:[%s844] sm:$0xff]
  %v2371 = vld [vmem:[%s844 + $0x8] sm:$0xff]
  %v2372 = vld [vmem:[%s844 + $0x10] sm:$0xff]
  %v2373 = vld [vmem:[%s844 + $0x18] sm:$0xff]
  %v2374 = vld [vmem:[%s844 + $0x20] sm:$0xff]
  %v2375 = vld [vmem:[%s844 + $0x28] sm:$0xff]
  %v2376 = vld [vmem:[%s844 + $0x30] sm:$0xff]
  %v2377 = vld [vmem:[%s844 + $0x38] sm:$0xff]
  %v2386 = vunpack.c.l.b16 %v2370
  %v2387 = vunpack.c.h.b16 %v2370
  %v2388 = vunpack.c.l.b16 %v2371
  %v2389 = vunpack.c.h.b16 %v2371
  %v2390 = vunpack.c.l.b16 %v2372
  %v2391 = vunpack.c.h.b16 %v2372
  %v2392 = vunpack.c.l.b16 %v2373
  %v2393 = vunpack.c.h.b16 %v2373
  %v2394 = vunpack.c.l.b16 %v2374
  %v2395 = vunpack.c.h.b16 %v2374
  %v2396 = vunpack.c.l.b16 %v2375
  %v2397 = vunpack.c.h.b16 %v2375
  %v2398 = vunpack.c.l.b16 %v2376
  %v2399 = vunpack.c.h.b16 %v2376
  %v2400 = vunpack.c.l.b16 %v2377
  %v2401 = vunpack.c.h.b16 %v2377
  %v2402 = vpack.c.b16 %v2388, %v2386
  %v2403 = vpack.c.b16 %v2389, %v2387
  %v2404 = vpack.c.b16 %v2392, %v2390
  %v2405 = vpack.c.b16 %v2393, %v2391
  %v2406 = vpack.c.b16 %v2396, %v2394
  %v2407 = vpack.c.b16 %v2397, %v2395
  %v2408 = vpack.c.b16 %v2400, %v2398
  %v2409 = vpack.c.b16 %v2401, %v2399
  %v2419 = vsel %vm35, %v2369, 0
  %2421 = vmatpush.bf16.msra.mxu0 0
  %2422 = vmatpush.bf16.msra.mxu0 0
  %2423 = vmatpush.bf16.msra.mxu0 0
  %2424 = vmatpush.bf16.msra.mxu0 0
  %2425 = vmatpush.bf16.msra.mxu0 %v2408
  %2426 = vmatpush.bf16.msra.mxu0 %v2406
  %2427 = vmatpush.bf16.msra.mxu0 %v2404
  %2428 = vmatpush.bf16.msra.mxu0 %v2402
  %2429 = vmatmul.bf16.gmra.mxu0 %v2419
  %v2430 = vpop.f32.mrf.mxu0
  %v2431 = vadd.f32 0.0, %v2430
  %v2432 = vpop.f32.mrf.mxu0
  %v2433 = vadd.f32 0.0, %v2432
  %2434 = vdwg.mxu0
  %2435 = vmatpush.bf16.msra.mxu0 0
  %2436 = vmatpush.bf16.msra.mxu0 0
  %2437 = vmatpush.bf16.msra.mxu0 0
  %2438 = vmatpush.bf16.msra.mxu0 0
  %2439 = vmatpush.bf16.msra.mxu0 %v2409
  %2440 = vmatpush.bf16.msra.mxu0 %v2407
  %2441 = vmatpush.bf16.msra.mxu0 %v2405
  %2442 = vmatpush.bf16.msra.mxu0 %v2403
  %2443 = vmatmul.bf16.gmra.mxu0 %v2419
  %v2444 = vpop.f32.mrf.mxu0
  %v2445 = vadd.f32 0.0, %v2444
  %v2446 = vpop.f32.mrf.mxu0
  %v2447 = vadd.f32 0.0, %v2446
  %2448 = vdwg.mxu0
  %v2449 = vadd.f32 %v2431, %v924
  %v2450 = vadd.f32 %v2433, %v924
  %v2451 = vadd.f32 %v2445, %v927
  %v2452 = vadd.f32 %v2447, %v927
  %v2453 = vpack.c.bf16 %v2451, %v2451
  %v2454 = vpack.c.bf16 %v2452, %v2452
  %v2455 = vpack.c.bf16 %v2450, %v2449
  %2457 = vrot.lane.b32.xlu0 %v2455, 64
  %v2458 = vpop.permute.xlu0 %2457
  %v2460 = vsel %vm189, %v2455, 0
  %v2463 = vsel %vm189, %v2458, 0
  %2465 = vmatpush.bf16.xpose.msra.mxu0 0
  %2466 = vmatpush.bf16.xpose.msra.mxu0 0
  %2467 = vmatpush.bf16.xpose.msra.mxu0 0
  %2468 = vmatpush.bf16.xpose.msra.mxu0 0
  %2469 = vmatpush.bf16.xpose.msra.mxu0 0
  %2470 = vmatpush.bf16.xpose.msra.mxu0 0
  %2471 = vmatpush.bf16.xpose.msra.mxu0 0
  %2472 = vmatpush.bf16.xpose.msra.mxu0 %v2463
  %2473 = vmatmul.bf16.gmra.mxu0 %v2460
  %v2474 = vpop.f32.mrf.mxu0
  %v2475 = vadd.f32 %v1594, %v2474
  %v2476 = vpop.f32.mrf.mxu0
  %v2477 = vadd.f32 %v1595, %v2476
  %2478 = vdwg.mxu0
  %v2479 = vsel %vm210, %v2475, -inf
  %2480 = vmax.xlane.f32.xlu0 %v2479
  %v2481 = vpop.xlane.xlu0 %2480
  %v2482 = vsel %vm214, %v2477, -inf
  %2483 = vmax.xlane.f32.xlu0 %v2482
  %v2484 = vpop.xlane.xlu0 %2483
  %v2485 = vsub.f32 %v2475, %v2481
  %v2486 = vsub.f32 %v2477, %v2484
  %v2487 = vmul.f32 %v2485, 1.442695
  %v2488 = vpow.pop %v2487
  %v2489 = vmul.f32 %v2486, 1.442695
  %v2490 = vpow.pop %v2489
  %v2491 = vsel %vm210, %v2488, 0.0
  %2492 = vadd.xlane.f32.xlu0 %v2491
  %v2493 = vpop.xlane.xlu0 %2492
  %v2494 = vsel %vm214, %v2490, 0.0
  %2495 = vadd.xlane.f32.xlu0 %v2494
  %v2496 = vpop.xlane.xlu0 %2495
  %v2497 = vrcp.pop %v2493
  %v2498 = vrcp.pop %v2496
  %v2499 = vmul.f32 %v2488, %v2497
  %v2500 = vmul.f32 %v2490, %v2498
  %v2501 = vpack.c.bf16 %v2500, %v2499
  %v2504 = vunpack.c.l.b16 %v2453
  %v2505 = vunpack.c.l.b16 %v2454
  %v2506 = vpack.c.b16 %v2505, %v2504
  %v2508 = vsel %vm210, %v2501, 0
  %v2511 = vsel %vm243, %v2506, 0
  %2513 = vmatpush.bf16.msra.mxu0 0
  %2514 = vmatpush.bf16.msra.mxu0 0
  %2515 = vmatpush.bf16.msra.mxu0 0
  %2516 = vmatpush.bf16.msra.mxu0 0
  %2517 = vmatpush.bf16.msra.mxu0 0
  %2518 = vmatpush.bf16.msra.mxu0 0
  %2519 = vmatpush.bf16.msra.mxu0 0
  %2520 = vmatpush.bf16.msra.mxu0 %v2511
  %2521 = vmatmul.bf16.gmra.mxu0 %v2508
  %v2522 = vpop.f32.mrf.mxu0
  %v2523 = vadd.f32 0.0, %v2522
  %v2524 = vpop.f32.mrf.mxu0
  %v2525 = vadd.f32 0.0, %v2524
  %2526 = vdwg.mxu0
  %v2527 = vld [vmem:[%s844 + $0x40] sm:$0xf]
  %v2528 = vld [vmem:[%s844 + $0x48] sm:$0xf]
  %v2529 = vpack.c.bf16 %v2525, %v2523
  %2530 = vrot.lane.b32.xlu0 %v2455, 112
  %v2531 = vpop.permute.xlu0 %2530
  %2532 = vrot.lane.b32.xlu0 %v2455, 48
  %v2533 = vpop.permute.xlu0 %2532
  %v2535 = vsel %vm189, %v2531, 0
  %v2538 = vsel %vm189, %v2533, 0
  %2540 = vmatpush.bf16.xpose.msra.mxu0 0
  %2541 = vmatpush.bf16.xpose.msra.mxu0 0
  %2542 = vmatpush.bf16.xpose.msra.mxu0 0
  %2543 = vmatpush.bf16.xpose.msra.mxu0 0
  %2544 = vmatpush.bf16.xpose.msra.mxu0 0
  %2545 = vmatpush.bf16.xpose.msra.mxu0 0
  %2546 = vmatpush.bf16.xpose.msra.mxu0 0
  %2547 = vmatpush.bf16.xpose.msra.mxu0 %v2538
  %2548 = vmatmul.bf16.gmra.mxu0 %v2535
  %v2549 = vpop.f32.mrf.mxu0
  %v2550 = vadd.f32 %v1594, %v2549
  %v2551 = vpop.f32.mrf.mxu0
  %v2552 = vadd.f32 %v1595, %v2551
  %2553 = vdwg.mxu0
  %v2554 = vsel %vm210, %v2550, -inf
  %2555 = vmax.xlane.f32.xlu0 %v2554
  %v2556 = vpop.xlane.xlu0 %2555
  %v2557 = vsel %vm214, %v2552, -inf
  %2558 = vmax.xlane.f32.xlu0 %v2557
  %v2559 = vpop.xlane.xlu0 %2558
  %v2560 = vsub.f32 %v2550, %v2556
  %v2561 = vsub.f32 %v2552, %v2559
  %v2562 = vmul.f32 %v2560, 1.442695
  %v2563 = vpow.pop %v2562
  %v2564 = vmul.f32 %v2561, 1.442695
  %v2565 = vpow.pop %v2564
  %v2566 = vsel %vm210, %v2563, 0.0
  %2567 = vadd.xlane.f32.xlu0 %v2566
  %v2568 = vpop.xlane.xlu0 %2567
  %v2569 = vsel %vm214, %v2565, 0.0
  %2570 = vadd.xlane.f32.xlu0 %v2569
  %v2571 = vpop.xlane.xlu0 %2570
  %v2572 = vrcp.pop %v2568
  %v2573 = vrcp.pop %v2571
  %v2574 = vmul.f32 %v2563, %v2572
  %v2575 = vmul.f32 %v2565, %v2573
  %v2576 = vpack.c.bf16 %v2575, %v2574
  %2577 = vrot.lane.b32.xlu0 %v2506, 112
  %v2578 = vpop.permute.xlu0 %2577
  %v2580 = vsel %vm210, %v2576, 0
  %v2583 = vsel %vm243, %v2578, 0
  %2585 = vmatpush.bf16.msra.mxu0 0
  %2586 = vmatpush.bf16.msra.mxu0 0
  %2587 = vmatpush.bf16.msra.mxu0 0
  %2588 = vmatpush.bf16.msra.mxu0 0
  %2589 = vmatpush.bf16.msra.mxu0 0
  %2590 = vmatpush.bf16.msra.mxu0 0
  %2591 = vmatpush.bf16.msra.mxu0 0
  %2592 = vmatpush.bf16.msra.mxu0 %v2583
  %2593 = vmatmul.bf16.gmra.mxu0 %v2580
  %v2594 = vpop.f32.mrf.mxu0
  %v2595 = vadd.f32 0.0, %v2594
  %v2596 = vpop.f32.mrf.mxu0
  %v2597 = vadd.f32 0.0, %v2596
  %2598 = vdwg.mxu0
  %v2599 = vld [vmem:[%s844 + $0x50] sm:$0xf]
  %v2600 = vld [vmem:[%s844 + $0x58] sm:$0xf]
  %v2601 = vpack.c.bf16 %v2597, %v2595
  %v2604 = vunpack.c.l.b16 %v2599
  %v2605 = vunpack.c.l.b16 %v2600
  %v2606 = vpack.c.b16 %v2605, %v2604
  %v2609 = vsel %vm189, %v2601, 0
  %2611 = vmatpush.bf16.msra.mxu0 0
  %2612 = vmatpush.bf16.msra.mxu0 0
  %2613 = vmatpush.bf16.msra.mxu0 0
  %2614 = vmatpush.bf16.msra.mxu0 0
  %2615 = vmatpush.bf16.msra.mxu0 0
  %2616 = vmatpush.bf16.msra.mxu0 0
  %2617 = vmatpush.bf16.msra.mxu0 0
  %2618 = vmatpush.bf16.msra.mxu0 %v2606
  %2619 = vmatmul.bf16.gmra.mxu0 %v2609
  %v2620 = vpop.f32.mrf.mxu0
  %v2621 = vadd.f32 0.0, %v2620
  %v2622 = vpop.f32.mrf.mxu0
  %v2623 = vadd.f32 0.0, %v2622
  %2624 = vdwg.mxu0
  %v2627 = vunpack.c.l.b16 %v2527
  %v2628 = vunpack.c.l.b16 %v2528
  %v2629 = vpack.c.b16 %v2628, %v2627
  %v2632 = vsel %vm189, %v2529, 0
  %2634 = vmatpush.bf16.msra.mxu0 0
  %2635 = vmatpush.bf16.msra.mxu0 0
  %2636 = vmatpush.bf16.msra.mxu0 0
  %2637 = vmatpush.bf16.msra.mxu0 0
  %2638 = vmatpush.bf16.msra.mxu0 0
  %2639 = vmatpush.bf16.msra.mxu0 0
  %2640 = vmatpush.bf16.msra.mxu0 0
  %2641 = vmatpush.bf16.msra.mxu0 %v2629
  %2642 = vmatmul.bf16.gmra.mxu0 %v2632
  %v2643 = vpop.f32.mrf.mxu0
  %v2644 = vadd.f32 %v2621, %v2643
  %v2645 = vpop.f32.mrf.mxu0
  %v2646 = vadd.f32 %v2623, %v2645
  %2647 = vdwg.mxu0
  %2648 = vrot.lane.b32.xlu0 %v2455, 96
  %v2649 = vpop.permute.xlu0 %2648
  %2650 = vrot.lane.b32.xlu0 %v2455, 32
  %v2651 = vpop.permute.xlu0 %2650
  %v2653 = vsel %vm189, %v2649, 0
  %v2656 = vsel %vm189, %v2651, 0
  %2658 = vmatpush.bf16.xpose.msra.mxu0 0
  %2659 = vmatpush.bf16.xpose.msra.mxu0 0
  %2660 = vmatpush.bf16.xpose.msra.mxu0 0
  %2661 = vmatpush.bf16.xpose.msra.mxu0 0
  %2662 = vmatpush.bf16.xpose.msra.mxu0 0
  %2663 = vmatpush.bf16.xpose.msra.mxu0 0
  %2664 = vmatpush.bf16.xpose.msra.mxu0 0
  %2665 = vmatpush.bf16.xpose.msra.mxu0 %v2656
  %2666 = vmatmul.bf16.gmra.mxu0 %v2653
  %v2667 = vpop.f32.mrf.mxu0
  %v2668 = vadd.f32 %v1594, %v2667
  %v2669 = vpop.f32.mrf.mxu0
  %v2670 = vadd.f32 %v1595, %v2669
  %2671 = vdwg.mxu0
  %v2672 = vsel %vm210, %v2668, -inf
  %2673 = vmax.xlane.f32.xlu0 %v2672
  %v2674 = vpop.xlane.xlu0 %2673
  %v2675 = vsel %vm214, %v2670, -inf
  %2676 = vmax.xlane.f32.xlu0 %v2675
  %v2677 = vpop.xlane.xlu0 %2676
  %v2678 = vsub.f32 %v2668, %v2674
  %v2679 = vsub.f32 %v2670, %v2677
  %v2680 = vmul.f32 %v2678, 1.442695
  %v2681 = vpow.pop %v2680
  %v2682 = vmul.f32 %v2679, 1.442695
  %v2683 = vpow.pop %v2682
  %v2684 = vsel %vm210, %v2681, 0.0
  %2685 = vadd.xlane.f32.xlu0 %v2684
  %v2686 = vpop.xlane.xlu0 %2685
  %v2687 = vsel %vm214, %v2683, 0.0
  %2688 = vadd.xlane.f32.xlu0 %v2687
  %v2689 = vpop.xlane.xlu0 %2688
  %v2690 = vrcp.pop %v2686
  %v2691 = vrcp.pop %v2689
  %v2692 = vmul.f32 %v2681, %v2690
  %v2693 = vmul.f32 %v2683, %v2691
  %v2694 = vpack.c.bf16 %v2693, %v2692
  %2695 = vrot.lane.b32.xlu0 %v2506, 96
  %v2696 = vpop.permute.xlu0 %2695
  %v2698 = vsel %vm210, %v2694, 0
  %v2701 = vsel %vm243, %v2696, 0
  %2703 = vmatpush.bf16.msra.mxu0 0
  %2704 = vmatpush.bf16.msra.mxu0 0
  %2705 = vmatpush.bf16.msra.mxu0 0
  %2706 = vmatpush.bf16.msra.mxu0 0
  %2707 = vmatpush.bf16.msra.mxu0 0
  %2708 = vmatpush.bf16.msra.mxu0 0
  %2709 = vmatpush.bf16.msra.mxu0 0
  %2710 = vmatpush.bf16.msra.mxu0 %v2701
  %2711 = vmatmul.bf16.gmra.mxu0 %v2698
  %v2712 = vpop.f32.mrf.mxu0
  %v2713 = vadd.f32 0.0, %v2712
  %v2714 = vpop.f32.mrf.mxu0
  %v2715 = vadd.f32 0.0, %v2714
  %2716 = vdwg.mxu0
  %v2717 = vld [vmem:[%s844 + $0x60] sm:$0xf]
  %v2718 = vld [vmem:[%s844 + $0x68] sm:$0xf]
  %v2719 = vpack.c.bf16 %v2715, %v2713
  %v2722 = vunpack.c.l.b16 %v2717
  %v2723 = vunpack.c.l.b16 %v2718
  %v2724 = vpack.c.b16 %v2723, %v2722
  %v2727 = vsel %vm189, %v2719, 0
  %2729 = vmatpush.bf16.msra.mxu0 0
  %2730 = vmatpush.bf16.msra.mxu0 0
  %2731 = vmatpush.bf16.msra.mxu0 0
  %2732 = vmatpush.bf16.msra.mxu0 0
  %2733 = vmatpush.bf16.msra.mxu0 0
  %2734 = vmatpush.bf16.msra.mxu0 0
  %2735 = vmatpush.bf16.msra.mxu0 0
  %2736 = vmatpush.bf16.msra.mxu0 %v2724
  %2737 = vmatmul.bf16.gmra.mxu0 %v2727
  %v2738 = vpop.f32.mrf.mxu0
  %v2739 = vadd.f32 0.0, %v2738
  %v2740 = vpop.f32.mrf.mxu0
  %v2741 = vadd.f32 0.0, %v2740
  %2742 = vdwg.mxu0
  %v2743 = vadd.f32 %v2644, %v2739
  %v2744 = vadd.f32 %v2646, %v2741
  %2745 = vrot.lane.b32.xlu0 %v2455, 80
  %v2746 = vpop.permute.xlu0 %2745
  %2747 = vrot.lane.b32.xlu0 %v2455, 16
  %v2748 = vpop.permute.xlu0 %2747
  %v2750 = vsel %vm189, %v2746, 0
  %v2753 = vsel %vm189, %v2748, 0
  %2755 = vmatpush.bf16.xpose.msra.mxu0 0
  %2756 = vmatpush.bf16.xpose.msra.mxu0 0
  %2757 = vmatpush.bf16.xpose.msra.mxu0 0
  %2758 = vmatpush.bf16.xpose.msra.mxu0 0
  %2759 = vmatpush.bf16.xpose.msra.mxu0 0
  %2760 = vmatpush.bf16.xpose.msra.mxu0 0
  %2761 = vmatpush.bf16.xpose.msra.mxu0 0
  %2762 = vmatpush.bf16.xpose.msra.mxu0 %v2753
  %2763 = vmatmul.bf16.gmra.mxu0 %v2750
  %v2764 = vpop.f32.mrf.mxu0
  %v2765 = vadd.f32 %v1594, %v2764
  %v2766 = vpop.f32.mrf.mxu0
  %v2767 = vadd.f32 %v1595, %v2766
  %2768 = vdwg.mxu0
  %v2769 = vsel %vm210, %v2765, -inf
  %2770 = vmax.xlane.f32.xlu0 %v2769
  %v2771 = vpop.xlane.xlu0 %2770
  %v2772 = vsel %vm214, %v2767, -inf
  %2773 = vmax.xlane.f32.xlu0 %v2772
  %v2774 = vpop.xlane.xlu0 %2773
  %v2775 = vsub.f32 %v2765, %v2771
  %v2776 = vsub.f32 %v2767, %v2774
  %v2777 = vmul.f32 %v2775, 1.442695
  %v2778 = vpow.pop %v2777
  %v2779 = vmul.f32 %v2776, 1.442695
  %v2780 = vpow.pop %v2779
  %v2781 = vsel %vm210, %v2778, 0.0
  %2782 = vadd.xlane.f32.xlu0 %v2781
  %v2783 = vpop.xlane.xlu0 %2782
  %v2784 = vsel %vm214, %v2780, 0.0
  %2785 = vadd.xlane.f32.xlu0 %v2784
  %v2786 = vpop.xlane.xlu0 %2785
  %v2787 = vrcp.pop %v2783
  %v2788 = vrcp.pop %v2786
  %v2789 = vmul.f32 %v2778, %v2787
  %v2790 = vmul.f32 %v2780, %v2788
  %v2791 = vpack.c.bf16 %v2790, %v2789
  %2792 = vrot.lane.b32.xlu0 %v2506, 80
  %v2793 = vpop.permute.xlu0 %2792
  %v2795 = vsel %vm210, %v2791, 0
  %v2798 = vsel %vm243, %v2793, 0
  %2800 = vmatpush.bf16.msra.mxu0 0
  %2801 = vmatpush.bf16.msra.mxu0 0
  %2802 = vmatpush.bf16.msra.mxu0 0
  %2803 = vmatpush.bf16.msra.mxu0 0
  %2804 = vmatpush.bf16.msra.mxu0 0
  %2805 = vmatpush.bf16.msra.mxu0 0
  %2806 = vmatpush.bf16.msra.mxu0 0
  %2807 = vmatpush.bf16.msra.mxu0 %v2798
  %2808 = vmatmul.bf16.gmra.mxu0 %v2795
  %v2809 = vpop.f32.mrf.mxu0
  %v2810 = vadd.f32 0.0, %v2809
  %v2811 = vpop.f32.mrf.mxu0
  %v2812 = vadd.f32 0.0, %v2811
  %2813 = vdwg.mxu0
  %v2814 = vld [vmem:[%s844 + $0x70] sm:$0xf]
  %v2815 = vld [vmem:[%s844 + $0x78] sm:$0xf]
  %v2816 = vpack.c.bf16 %v2812, %v2810
  %v2819 = vunpack.c.l.b16 %v2814
  %v2820 = vunpack.c.l.b16 %v2815
  %v2821 = vpack.c.b16 %v2820, %v2819
  %v2824 = vsel %vm189, %v2816, 0
  %2826 = vmatpush.bf16.msra.mxu0 0
  %2827 = vmatpush.bf16.msra.mxu0 0
  %2828 = vmatpush.bf16.msra.mxu0 0
  %2829 = vmatpush.bf16.msra.mxu0 0
  %2830 = vmatpush.bf16.msra.mxu0 0
  %2831 = vmatpush.bf16.msra.mxu0 0
  %2832 = vmatpush.bf16.msra.mxu0 0
  %2833 = vmatpush.bf16.msra.mxu0 %v2821
  %2834 = vmatmul.bf16.gmra.mxu0 %v2824
  %v2835 = vpop.f32.mrf.mxu0
  %v2836 = vadd.f32 0.0, %v2835
  %v2837 = vpop.f32.mrf.mxu0
  %v2838 = vadd.f32 0.0, %v2837
  %2839 = vdwg.mxu0
  %v2840 = vadd.f32 %v2743, %v2836
  %v2841 = vadd.f32 %v2744, %v2838
  %v2842 = vadd.f32 %v2316, %v2840
  %v2843 = vadd.f32 %v2317, %v2841
  %v2844 = vadd.f32 %v2842, %v1323
  %v2845 = vadd.f32 %v2843, %v1323
  %v2846 = vsel %vm35, %v2844, 0.0
  %2847 = vadd.xlane.f32.xlu0 %v2846
  %v2848 = vpop.xlane.xlu0 %2847
  %v2849 = vsel %vm39, %v2845, 0.0
  %2850 = vadd.xlane.f32.xlu0 %v2849
  %v2851 = vpop.xlane.xlu0 %2850
  %v2852 = vmul.f32 %v2848, %v49
  %v2853 = vmul.f32 %v2851, %v49
  %v2854 = vsub.f32 %v2844, %v2852
  %v2855 = vsub.f32 %v2845, %v2853
  %v2856 = vmul.f32 %v2854, %v2854
  %v2857 = vmul.f32 %v2855, %v2855
  %v2858 = vsel %vm35, %v2856, 0.0
  %2859 = vadd.xlane.f32.xlu0 %v2858
  %v2860 = vpop.xlane.xlu0 %2859
  %v2861 = vsel %vm39, %v2857, 0.0
  %2862 = vadd.xlane.f32.xlu0 %v2861
  %v2863 = vpop.xlane.xlu0 %2862
  %v2864 = vmul.f32 %v2860, %v49
  %v2865 = vmul.f32 %v2863, %v49
  %v2866 = vadd.f32 %v2864, 1e-05
  %v2867 = vadd.f32 %v2865, 1e-05
  %v2868 = vrsqrt.pop %v2866
  %v2869 = vmul.f32 %v2868, %v2866
  %v2870 = vmul.f32 %v2869, %v2868
  %v2871 = vmul.f32 0.5, %v2870
  %v2872 = vsub.f32 1.5, %v2871
  %v2873 = vmul.f32 %v2868, %v2872
  %vm2874 = vweird.f32 %v2866
  %vm2875 = vweird.f32 %v2868
  %vm2876 = vmor %vm2874, %vm2875
  %v2877 = vsel %vm2876, %v2868, %v2873
  %v2878 = vrsqrt.pop %v2867
  %v2879 = vmul.f32 %v2878, %v2867
  %v2880 = vmul.f32 %v2879, %v2878
  %v2881 = vmul.f32 0.5, %v2880
  %v2882 = vsub.f32 1.5, %v2881
  %v2883 = vmul.f32 %v2878, %v2882
  %vm2884 = vweird.f32 %v2867
  %vm2885 = vweird.f32 %v2878
  %vm2886 = vmor %vm2884, %vm2885
  %v2887 = vsel %vm2886, %v2878, %v2883
  %v2888 = vmul.f32 %v2854, %v2877
  %v2889 = vmul.f32 %v2855, %v2887
  %v2890 = vmul.f32 %v2888, %v1371
  %v2891 = vmul.f32 %v2889, %v1371
  %v2892 = vadd.f32 %v2890, %v1376
  %v2893 = vadd.f32 %v2891, %v1376
  %v2894 = vpack.c.bf16 %v2893, %v2892
  %v2895 = vld [vmem:[%s844 + $0x80] sm:$0xf]
  %v2896 = vld [vmem:[%s844 + $0x88] sm:$0xf]
  %v2897 = vld [vmem:[%s844 + $0x90] sm:$0xf]
  %v2898 = vld [vmem:[%s844 + $0x98] sm:$0xf]
  %v2899 = vld [vmem:[%s844 + $0xa0] sm:$0xf]
  %v2900 = vld [vmem:[%s844 + $0xa8] sm:$0xf]
  %v2901 = vld [vmem:[%s844 + $0xb0] sm:$0xf]
  %v2902 = vld [vmem:[%s844 + $0xb8] sm:$0xf]
  %v2911 = vunpack.c.l.b16 %v2895
  %v2912 = vunpack.c.l.b16 %v2896
  %v2913 = vunpack.c.l.b16 %v2897
  %v2914 = vunpack.c.l.b16 %v2898
  %v2915 = vunpack.c.l.b16 %v2899
  %v2916 = vunpack.c.l.b16 %v2900
  %v2917 = vunpack.c.l.b16 %v2901
  %v2918 = vunpack.c.l.b16 %v2902
  %v2919 = vpack.c.b16 %v2912, %v2911
  %v2920 = vpack.c.b16 %v2914, %v2913
  %v2921 = vpack.c.b16 %v2916, %v2915
  %v2922 = vpack.c.b16 %v2918, %v2917
  %v2928 = vsel %vm35, %v2894, 0
  %2930 = vmatpush.bf16.msra.mxu0 0
  %2931 = vmatpush.bf16.msra.mxu0 0
  %2932 = vmatpush.bf16.msra.mxu0 0
  %2933 = vmatpush.bf16.msra.mxu0 0
  %2934 = vmatpush.bf16.msra.mxu0 %v2922
  %2935 = vmatpush.bf16.msra.mxu0 %v2921
  %2936 = vmatpush.bf16.msra.mxu0 %v2920
  %2937 = vmatpush.bf16.msra.mxu0 %v2919
  %2938 = vmatmul.bf16.gmra.mxu0 %v2928
  %v2939 = vpop.f32.mrf.mxu0
  %v2940 = vadd.f32 %v1389, %v2939
  %v2941 = vpop.f32.mrf.mxu0
  %v2942 = vadd.f32 %v1389, %v2941
  %2943 = vdwg.mxu0
  %v2944 = vmul.f32 %v2940, 0.5
  %v2945 = vmul.f32 %v2942, 0.5
  %v2946 = vmul.f32 %v2940, 0.044715
  %v2947 = vmul.f32 %v2942, 0.044715
  %v2948 = vmul.f32 %v2946, %v2940
  %v2949 = vmul.f32 %v2947, %v2942
  %v2950 = vmul.f32 %v2948, %v2940
  %v2951 = vmul.f32 %v2949, %v2942
  %v2952 = vadd.f32 %v2940, %v2950
  %v2953 = vadd.f32 %v2942, %v2951
  %v2954 = vmul.f32 %v2952, 0.7978846
  %v2955 = vmul.f32 %v2953, 0.7978846
  %v2956 = vtanh.pop %v2954
  %v2957 = vtanh.pop %v2955
  %v2958 = vadd.f32 %v2956, 1.0
  %v2959 = vadd.f32 %v2957, 1.0
  %v2960 = vmul.f32 %v2944, %v2958
  %v2961 = vmul.f32 %v2945, %v2959
  %v2962 = vpack.c.bf16 %v2961, %v2960
  %v2963 = vld [vmem:[%s844 + $0xc0] sm:$0xf]
  %v2964 = vld [vmem:[%s844 + $0xc8] sm:$0xf]
  %v2965 = vld [vmem:[%s844 + $0xd0] sm:$0xf]
  %v2966 = vld [vmem:[%s844 + $0xd8] sm:$0xf]
  %v2967 = vld [vmem:[%s844 + $0xe0] sm:$0xf]
  %v2968 = vld [vmem:[%s844 + $0xe8] sm:$0xf]
  %v2969 = vld [vmem:[%s844 + $0xf0] sm:$0xf]
  %v2970 = vld [vmem:[%s844 + $0xf8] sm:$0xf]
  %v2971 = vld [vmem:[%s844 + $0x100] sm:$0xf]
  %v2972 = vld [vmem:[%s844 + $0x108] sm:$0xf]
  %v2973 = vld [vmem:[%s844 + $0x110] sm:$0xf]
  %v2974 = vld [vmem:[%s844 + $0x118] sm:$0xf]
  %v2975 = vld [vmem:[%s844 + $0x120] sm:$0xf]
  %v2976 = vld [vmem:[%s844 + $0x128] sm:$0xf]
  %v2977 = vld [vmem:[%s844 + $0x130] sm:$0xf]
  %v2978 = vld [vmem:[%s844 + $0x138] sm:$0xf]
  %v2995 = vunpack.c.l.b16 %v2963
  %v2996 = vunpack.c.l.b16 %v2964
  %v2997 = vunpack.c.l.b16 %v2965
  %v2998 = vunpack.c.l.b16 %v2966
  %v2999 = vunpack.c.l.b16 %v2967
  %v3000 = vunpack.c.l.b16 %v2968
  %v3001 = vunpack.c.l.b16 %v2969
  %v3002 = vunpack.c.l.b16 %v2970
  %v3003 = vunpack.c.l.b16 %v2971
  %v3004 = vunpack.c.l.b16 %v2972
  %v3005 = vunpack.c.l.b16 %v2973
  %v3006 = vunpack.c.l.b16 %v2974
  %v3007 = vunpack.c.l.b16 %v2975
  %v3008 = vunpack.c.l.b16 %v2976
  %v3009 = vunpack.c.l.b16 %v2977
  %v3010 = vunpack.c.l.b16 %v2978
  %v3011 = vpack.c.b16 %v2996, %v2995
  %v3012 = vpack.c.b16 %v2998, %v2997
  %v3013 = vpack.c.b16 %v3000, %v2999
  %v3014 = vpack.c.b16 %v3002, %v3001
  %v3015 = vpack.c.b16 %v3004, %v3003
  %v3016 = vpack.c.b16 %v3006, %v3005
  %v3017 = vpack.c.b16 %v3008, %v3007
  %v3018 = vpack.c.b16 %v3010, %v3009
  %3027 = vmatpush.bf16.msra.mxu0 %v3018
  %3028 = vmatpush.bf16.msra.mxu0 %v3017
  %3029 = vmatpush.bf16.msra.mxu0 %v3016
  %3030 = vmatpush.bf16.msra.mxu0 %v3015
  %3031 = vmatpush.bf16.msra.mxu0 %v3014
  %3032 = vmatpush.bf16.msra.mxu0 %v3013
  %3033 = vmatpush.bf16.msra.mxu0 %v3012
  %3034 = vmatpush.bf16.msra.mxu0 %v3011
  %3035 = vmatmul.bf16.gmra.mxu0 %v2962
  %v3036 = vpop.f32.mrf.mxu0
  %v3037 = vadd.f32 %v1466, %v3036
  %v3038 = vpop.f32.mrf.mxu0
  %v3039 = vadd.f32 %v1466, %v3038
  %3040 = vdwg.mxu0
  %v3041 = vadd.f32 %v2844, %v3037
  %v3042 = vadd.f32 %v2845, %v3039
  %s3043 = scalar_lea.vmem %s4, 64
  %3044 = vst.msk [vmem:[%s3043] sm:$0xff] %vm35, %v3041
  %3045 = vst.msk [vmem:[%s3043 + $0x8] sm:$0xf] %vm39, %v3042
  %v3046 = vsel %vm35, %v3041, 0.0
  %3047 = vadd.xlane.f32.xlu0 %v3046
  %v3048 = vpop.xlane.xlu0 %3047
  %v3049 = vsel %vm39, %v3042, 0.0
  %3050 = vadd.xlane.f32.xlu0 %v3049
  %v3051 = vpop.xlane.xlu0 %3050
  %v3052 = vmul.f32 %v3048, %v49
  %v3053 = vmul.f32 %v3051, %v49
  %v3054 = vsub.f32 %v3041, %v3052
  %v3055 = vsub.f32 %v3042, %v3053
  %v3056 = vmul.f32 %v3054, %v3054
  %v3057 = vmul.f32 %v3055, %v3055
  %v3058 = vsel %vm35, %v3056, 0.0
  %3059 = vadd.xlane.f32.xlu0 %v3058
  %v3060 = vpop.xlane.xlu0 %3059
  %v3061 = vsel %vm39, %v3057, 0.0
  %3062 = vadd.xlane.f32.xlu0 %v3061
  %v3063 = vpop.xlane.xlu0 %3062
  %v3064 = vmul.f32 %v3060, %v49
  %v3065 = vmul.f32 %v3063, %v49
  %v3066 = vadd.f32 %v3064, 1e-05
  %v3067 = vadd.f32 %v3065, 1e-05
  %v3068 = vrsqrt.pop %v3066
  %v3069 = vmul.f32 %v3068, %v3066
  %v3070 = vmul.f32 %v3069, %v3068
  %v3071 = vmul.f32 0.5, %v3070
  %v3072 = vsub.f32 1.5, %v3071
  %v3073 = vmul.f32 %v3068, %v3072
  %vm3074 = vweird.f32 %v3066
  %vm3075 = vweird.f32 %v3068
  %vm3076 = vmor %vm3074, %vm3075
  %v3077 = vsel %vm3076, %v3068, %v3073
  %v3078 = vrsqrt.pop %v3067
  %v3079 = vmul.f32 %v3078, %v3067
  %v3080 = vmul.f32 %v3079, %v3078
  %v3081 = vmul.f32 0.5, %v3080
  %v3082 = vsub.f32 1.5, %v3081
  %v3083 = vmul.f32 %v3078, %v3082
  %vm3084 = vweird.f32 %v3067
  %vm3085 = vweird.f32 %v3078
  %vm3086 = vmor %vm3084, %vm3085
  %v3087 = vsel %vm3086, %v3078, %v3083
  %v3088 = vmul.f32 %v3054, %v3077
  %v3089 = vmul.f32 %v3055, %v3087
  %v3090 = vmul.f32 %v3088, %v1578
  %v3091 = vmul.f32 %v3089, %v1578
  %v3092 = vadd.f32 %v3090, %v1583
  %v3093 = vadd.f32 %v3091, %v1583
  %s3094 = scalar_lea.vmem %s4, 80
  %3095 = vst.msk [vmem:[%s3094] sm:$0xff] %vm35, %v3092
  %3096 = vst.msk [vmem:[%s3094 + $0x8] sm:$0xf] %vm39, %v3093
  // Predicated region
  $region18: #{xlmr_forward.1} parent=0 // pred_check
    _
  $region19: #{xlmr_forward.1} parent=0 // pred_check_branch
    %3098 = sbr.rel (0) target = $region21
  $region20: #{xlmr_forward.1} parent=0 // pred_region
    _
  $region21: #{xlmr_forward.1} parent=0 // pred_fallthru
    _
  // Predicated region
  $region22: #{xlmr_forward.1} parent=0 // pred_check
    _
  $region23: #{xlmr_forward.1} parent=0 // pred_check_branch
    %3100 = sbr.rel (0) target = $region25
  $region24: #{xlmr_forward.1} parent=0 // pred_region
    _
  $region25: #{xlmr_forward.1} parent=0 // pred_fallthru
    _

</llo_original>
